<compile_context>
chip_gen: v7x
topology: tpu7x:2x2x1
jax: 0.10.0
libtpu: 0.0.40
codegen_flags: <defaults>
</compile_context>

<pallas_src>
import jax
import jax.numpy as jnp
from jax import lax
from jax.experimental import pallas as pl
from jax.experimental.pallas import tpu as pltpu

EPS = 1e-5
LANE = 128


def _round_up(x, m):
    return (x + m - 1) // m * m


def _compiler_params():
    # Per-block VMEM use at these shapes is ~1-2 MiB (double-buffered); 32 MiB is a
    # safe explicit budget on v5e/v6e (128 MiB physical) and v7x (64 MiB) alike.
    return pltpu.CompilerParams(
        dimension_semantics=("parallel",),
        vmem_limit_bytes=32 * 1024 * 1024,
    )


# ---------------- Pallas kernels ----------------

def _make_pass1_kernel(Ho, Wo, Cpi, Cpo):
    # conv1, stride 1, pad 1: x_ref is the spatially padded image (Hp, Wp, Cpi) bf16.
    HW = Ho * Wo

    def kernel(x_ref, w1_ref, y1_ref, s1_ref):
        xv = x_ref[...]                                        # (Hp, Wp, Cpi) bf16
        acc = None
        for kh in range(3):
            row = xv[kh:kh + Ho]                               # (Ho, Wp, Cpi)
            lhs = jnp.concatenate(
                [row[:, kw:kw + Wo, :].reshape(HW, Cpi) for kw in range(3)],
                axis=-1)                                       # (HW, 3*Cpi)
            p = jnp.dot(lhs, w1_ref[kh], preferred_element_type=jnp.float32)
            acc = p if acc is None else acc + p
        y1_ref[...] = acc.reshape(Ho, Wo, Cpo).astype(jnp.bfloat16)
        s = jnp.sum(acc, axis=0, keepdims=True)
        csq = jnp.sum((acc - s * (1.0 / HW)) ** 2, axis=0, keepdims=True)
        s1_ref[...] = jnp.concatenate([s, csq], axis=0)        # (2, Cpo)
    return kernel


def _make_pass1_down_kernel(Ho, Wo, Cpi, Cpo):
    # conv1 stride 2 via phase decomposition + 1x1 stride-2 downsample conv.
    # xph_ref: (4, Hh, Wh, Cpi) bf16 where phase (a,b) row = xpad[2u+a, 2v+b].
    HW = Ho * Wo

    def kernel(xph_ref, w1_ref, wd_ref, y1_ref, z_ref, s_ref):
        xv = xph_ref[...]                                      # (4, Hh, Wh, Cpi) bf16
        acc = None
        accd = None
        for kh in range(3):
            dh = kh // 2
            parts = []
            for kw in range(3):
                ph = (kh % 2) * 2 + (kw % 2)
                dw = kw // 2
                parts.append(xv[ph, dh:dh + Ho, dw:dw + Wo, :].reshape(HW, Cpi))
            lhs = jnp.concatenate(parts, axis=-1)              # (HW, 3*Cpi)
            p = jnp.dot(lhs, w1_ref[kh], preferred_element_type=jnp.float32)
            acc = p if acc is None else acc + p
            if kh == 1:
                # the 1x1 stride-2 downsample conv shares the (kh=1, kw=1) phase
                # window (phase (1,1)) as its LHS -- reuse it, no extra copy.
                accd = jnp.dot(parts[1], wd_ref[...],
                               preferred_element_type=jnp.float32)
        y1_ref[...] = acc.reshape(Ho, Wo, Cpo).astype(jnp.bfloat16)
        z_ref[...] = accd.reshape(Ho, Wo, Cpo).astype(jnp.bfloat16)
        s1 = jnp.sum(acc, axis=0, keepdims=True)
        c1 = jnp.sum((acc - s1 * (1.0 / HW)) ** 2, axis=0, keepdims=True)
        sd = jnp.sum(accd, axis=0, keepdims=True)
        cd = jnp.sum((accd - sd * (1.0 / HW)) ** 2, axis=0, keepdims=True)
        s_ref[...] = jnp.concatenate([s1, c1, sd, cd], axis=0)  # (4, Cpo)
    return kernel


def _make_pass2_kernel(Ho, Wo, Cp):
    # bn1 affine + relu + conv2 (stride 1, pad 1 in VMEM) + bn2 partial stats.
    HW = Ho * Wo

    def kernel(y1_ref, c1_ref, w2_ref, y2_ref, s2_ref, apad_ref):
        c = c1_ref[...]                                        # (2, Cp): [scale; shift]
        scale = c[0:1, :].reshape(1, 1, Cp)
        shift = c[1:2, :].reshape(1, 1, Cp)
        a = jnp.maximum(y1_ref[...].astype(jnp.float32) * scale + shift, 0.0)

        # Zero only the 1-wide halo border of the bf16 scratch each step; the interior
        # is fully overwritten. Much cheaper than a full re-zero and stays correct even
        # when the batch grid axis is sharded across TensorCores (per-core scratch).
        zrow = jnp.zeros((1, Wo + 2, Cp), jnp.bfloat16)
        zcol = jnp.zeros((Ho, 1, Cp), jnp.bfloat16)
        apad_ref[pl.ds(0, 1), :, :] = zrow
        apad_ref[pl.ds(Ho + 1, 1), :, :] = zrow
        apad_ref[pl.ds(1, Ho), pl.ds(0, 1), :] = zcol
        apad_ref[pl.ds(1, Ho), pl.ds(Wo + 1, 1), :] = zcol
        apad_ref[pl.ds(1, Ho), pl.ds(1, Wo), :] = a.astype(jnp.bfloat16)
        av = apad_ref[...]                                     # (Ho+2, Wo+2, Cp) bf16

        acc = None
        for kh in range(3):
            row = av[kh:kh + Ho]
            lhs = jnp.concatenate(
                [row[:, kw:kw + Wo, :].reshape(HW, Cp) for kw in range(3)],
                axis=-1)
            p = jnp.dot(lhs, w2_ref[kh], preferred_element_type=jnp.float32)
            acc = p if acc is None else acc + p
        y2_ref[...] = acc.reshape(Ho, Wo, Cp).astype(jnp.bfloat16)
        s = jnp.sum(acc, axis=0, keepdims=True)
        csq = jnp.sum((acc - s * (1.0 / HW)) ** 2, axis=0, keepdims=True)
        s2_ref[...] = jnp.concatenate([s, csq], axis=0)
    return kernel


def _make_pass3_kernel(Cp):
    # bn2 affine + residual (pre-scaled) + relu; purely HBM-bound, bf16 inputs.
    def kernel(y2_ref, res_ref, c_ref, o_ref):
        c = c_ref[...]                                         # (4, Cp)
        s2 = c[0:1, :].reshape(1, 1, Cp)
        b2 = c[1:2, :].reshape(1, 1, Cp)
        sr = c[2:3, :].reshape(1, 1, Cp)
        br = c[3:4, :].reshape(1, 1, Cp)
        y2 = y2_ref[...].astype(jnp.float32)
        res = res_ref[...].astype(jnp.float32)
        o_ref[...] = jnp.maximum(y2 * s2 + b2 + res * sr + br, 0.0)
    return kernel


# ---------------- wrapper ----------------

def _bn_affine(stats, gamma_p, beta_p, hw):
    # stats: (N, 2, Cp) per-image [sum_i, centered_sumsq_i] over hw rows (f32).
    # Chan's parallel merge across images -> numerically robust batch variance.
    sums = stats[:, 0, :]                                      # (N, Cp)
    csqs = stats[:, 1, :]                                      # (N, Cp)
    n = stats.shape[0]
    count = float(n * hw)
    total_mean = jnp.sum(sums, axis=0) / count
    mean_i = sums / float(hw)
    m2 = jnp.sum(csqs, axis=0) + float(hw) * jnp.sum(
        (mean_i - total_mean[None, :]) ** 2, axis=0)
    var = jnp.maximum(m2 / count, 0.0)                         # biased batch var
    scale = gamma_p * lax.rsqrt(var + EPS)
    shift = beta_p - total_mean * scale
    return jnp.stack([scale, shift], axis=0).astype(jnp.float32)   # (2, Cp)


def block_forward(x_nchw, params, is_down):
    x = jnp.transpose(x_nchw, (0, 2, 3, 1)).astype(jnp.float32)    # NCHW -> NHWC
    N, H, W, Cin = x.shape
    Cout = params["w1"].shape[0]
    if not is_down:
        assert Cin == Cout, "identity residual requires Cin == Cout"
    Cpi = _round_up(Cin, LANE)
    Cpo = _round_up(Cout, LANE)

    stride = 2 if is_down else 1
    Ho = (H + 2 - 3) // stride + 1
    Wo = (W + 2 - 3) // stride + 1
    Hp, Wp = H + 2, W + 2

    # channel-pad to 128 lanes, spatial pad for the 3x3 convs
    x_cp = jnp.pad(x, ((0, 0), (0, 0), (0, 0), (0, Cpi - Cin)))
    xpad = jnp.pad(x_cp, ((0, 0), (1, 1), (1, 1), (0, 0)))

    def prep_w3x3(w, cpi, cpo):
        # OIHW -> 3 weight slabs (3, 3*cpi, cpo) bf16: slab[kh][kw*cpi+ci, co].
        wk = jnp.transpose(w, (2, 3, 1, 0))                    # (3,3,ci,co)
        wk = jnp.pad(wk, ((0, 0), (0, 0),
                          (0, cpi - w.shape[1]), (0, cpo - w.shape[0])))
        return wk.reshape(3, 3 * cpi, cpo).astype(jnp.bfloat16)

    def pad_vec(v, cp):
        return jnp.pad(v.astype(jnp.float32), (0, cp - v.shape[0]))

    w1m = prep_w3x3(params["w1"], Cpi, Cpo)
    w2m = prep_w3x3(params["w2"], Cpo, Cpo)
    g1, b1 = pad_vec(params["g1"], Cpo), pad_vec(params["b1"], Cpo)
    g2, b2 = pad_vec(params["g2"], Cpo), pad_vec(params["b2"], Cpo)

    hw = Ho * Wo
    cparams = _compiler_params()

    img_out = pl.BlockSpec((None, Ho, Wo, Cpo), lambda i: (i, 0, 0, 0))
    stat2_out = pl.BlockSpec((None, 2, Cpo), lambda i: (i, 0, 0))
    stat4_out = pl.BlockSpec((None, 4, Cpo), lambda i: (i, 0, 0))

    # ---- pass 1: conv1 (+ downsample conv) + per-image BN partial stats ----
    if is_down:
        assert H % 2 == 0 and W % 2 == 0, "is_down path assumes even H, W"
        Hh, Wh = Hp // 2, Wp // 2
        # space-to-depth phases (pure permutation, no expansion):
        # xph[4n + 2a + b, u, v, c] = xpad[n, 2u + a, 2v + b, c]
        xph = xpad.reshape(N, Hh, 2, Wh, 2, Cpi)
        xph = jnp.transpose(xph, (0, 2, 4, 1, 3, 5)).reshape(N * 4, Hh, Wh, Cpi)
        xph = xph.astype(jnp.bfloat16)
        wdm = jnp.pad(params["wd"].reshape(Cout, Cin).T,
                      ((0, Cpi - Cin), (0, Cpo - Cout))).astype(jnp.bfloat16)

        y1, z, st1d = pl.pallas_call(
            _make_pass1_down_kernel(Ho, Wo, Cpi, Cpo),
            grid=(N,),
            in_specs=[
                pl.BlockSpec((4, Hh, Wh, Cpi), lambda i: (i, 0, 0, 0)),
                pl.BlockSpec((3, 3 * Cpi, Cpo), lambda i: (0, 0, 0)),
                pl.BlockSpec((Cpi, Cpo), lambda i: (0, 0)),
            ],
            out_specs=[img_out, img_out, stat4_out],
            out_shape=[
                jax.ShapeDtypeStruct((N, Ho, Wo, Cpo), jnp.bfloat16),
                jax.ShapeDtypeStruct((N, Ho, Wo, Cpo), jnp.bfloat16),
                jax.ShapeDtypeStruct((N, 4, Cpo), jnp.float32),
            ],
            compiler_params=cparams,
        )(xph, w1m, wdm)
        st1 = st1d[:, 0:2, :]
        std = st1d[:, 2:4, :]
    else:
        y1, st1 = pl.pallas_call(
            _make_pass1_kernel(Ho, Wo, Cpi, Cpo),
            grid=(N,),
            in_specs=[
                pl.BlockSpec((None, Hp, Wp, Cpi), lambda i: (i, 0, 0, 0)),
                pl.BlockSpec((3, 3 * Cpi, Cpo), lambda i: (0, 0, 0)),
            ],
            out_specs=[img_out, stat2_out],
            out_shape=[
                jax.ShapeDtypeStruct((N, Ho, Wo, Cpo), jnp.bfloat16),
                jax.ShapeDtypeStruct((N, 2, Cpo), jnp.float32),
            ],
            compiler_params=cparams,
        )(xpad.astype(jnp.bfloat16), w1m)

    c1 = _bn_affine(st1, g1, b1, hw)                          # (2, Cpo)

    # ---- pass 2: bn1 affine + relu + conv2 + bn2 partial stats ----
    y2, st2 = pl.pallas_call(
        _make_pass2_kernel(Ho, Wo, Cpo),
        grid=(N,),
        in_specs=[
            img_out,
            pl.BlockSpec((2, Cpo), lambda i: (0, 0)),
            pl.BlockSpec((3, 3 * Cpo, Cpo), lambda i: (0, 0, 0)),
        ],
        out_specs=[img_out, stat2_out],
        out_shape=[
            jax.ShapeDtypeStruct((N, Ho, Wo, Cpo), jnp.bfloat16),
            jax.ShapeDtypeStruct((N, 2, Cpo), jnp.float32),
        ],
        scratch_shapes=[pltpu.VMEM((Ho + 2, Wo + 2, Cpo), jnp.bfloat16)],
        compiler_params=cparams,
    )(y1, c1, w2m)

    c2 = _bn_affine(st2, g2, b2, hw)                          # (2, Cpo)

    # ---- pass 3: bn2 affine + residual + relu ----
    if is_down:
        gd, bd = pad_vec(params["gd"], Cpo), pad_vec(params["bd"], Cpo)
        cd = _bn_affine(std, gd, bd, hw)
        res = z                                               # bf16
        c3 = jnp.concatenate([c2, cd], axis=0)                # (4, Cpo)
    else:
        res = x_cp.astype(jnp.bfloat16)                       # identity residual (bf16)
        c3 = jnp.concatenate(
            [c2, jnp.ones((1, Cpo), jnp.float32), jnp.zeros((1, Cpo), jnp.float32)],
            axis=0)

    out = pl.pallas_call(
        _make_pass3_kernel(Cpo),
        grid=(N,),
        in_specs=[img_out, img_out, pl.BlockSpec((4, Cpo), lambda i: (0, 0))],
        out_specs=img_out,
        out_shape=jax.ShapeDtypeStruct((N, Ho, Wo, Cpo), jnp.float32),
        compiler_params=cparams,
    )(y2, res, c3)

    out = out[:, :, :, :Cout]
    return jnp.transpose(out, (0, 3, 1, 2))                   # back to NCHW


block_forward_jit = jax.jit(block_forward, static_argnums=(2,))


# ---------------- pure-JAX reference (lax.conv, f32) ----------------

def ref_block(x_nchw, params, is_down):
    def conv(x, w, stride, pad):
        return lax.conv_general_dilated(
            x, w, (stride, stride), [(pad, pad), (pad, pad)],
            dimension_numbers=("NCHW", "OIHW", "NCHW"))

    def bn(x, g, b):
        m = jnp.mean(x, axis=(0, 2, 3), keepdims=True)
        v = jnp.mean((x - m) ** 2, axis=(0, 2, 3), keepdims=True)
        return (x - m) / jnp.sqrt(v + EPS) * g.reshape(1, -1, 1, 1) + b.reshape(1, -1, 1, 1)

    s = 2 if is_down else 1
    x0 = x_nchw
    y = jax.nn.relu(bn(conv(x_nchw, params["w1"], s, 1), params["g1"], params["b1"]))
    y = bn(conv(y, params["w2"], 1, 1), params["g2"], params["b2"])
    if is_down:
        x0 = bn(conv(x0, params["wd"], 2, 0), params["gd"], params["bd"])
    return jax.nn.relu(y + x0)


# ---------------- main ----------------

if __name__ == "__main__":
    key = jax.random.PRNGKey(0)
    N, Cin, Cout, H, W = 2, 8, 8, 16, 16

    ks = jax.random.split(key, 9)
    params = {
        "w1": 0.1 * jax.random.normal(ks[0], (Cout, Cin, 3, 3), jnp.float32),
        "g1": 1.0 + 0.1 * jax.random.normal(ks[1], (Cout,), jnp.float32),
        "b1": 0.1 * jax.random.normal(ks[2], (Cout,), jnp.float32),
        "w2": 0.1 * jax.random.normal(ks[3], (Cout, Cout, 3, 3), jnp.float32),
        "g2": 1.0 + 0.1 * jax.random.normal(ks[4], (Cout,), jnp.float32),
        "b2": 0.1 * jax.random.normal(ks[5], (Cout,), jnp.float32),
        "wd": 0.1 * jax.random.normal(ks[6], (Cout, Cin, 1, 1), jnp.float32),
        "gd": 1.0 + 0.1 * jax.random.normal(ks[7], (Cout,), jnp.float32),
        "bd": 0.1 * jax.random.normal(ks[8], (Cout,), jnp.float32),
    }
    x = jax.random.normal(jax.random.PRNGKey(1), (N, Cin, H, W), jnp.float32)

    for is_down in (True, False):
        out = jax.block_until_ready(block_forward_jit(x, params, is_down))
        ref = jax.block_until_ready(ref_block(x, params, is_down))
        exp_hw = H // 2 if is_down else H
        assert out.shape == (N, Cout, exp_hw, exp_hw), out.shape
        # bf16 matmul operands / bf16 inter-pass intermediates (f32 accumulation and
        # f32 BN statistics) vs. an all-f32 reference.
        assert jnp.allclose(out, ref, rtol=5e-2, atol=5e-2), (
            f"mismatch (is_down={is_down}): max abs err "
            f"{float(jnp.max(jnp.abs(out - ref)))}")

    print("KERNEL_OK")
</pallas_src>

<mosaic_0001>
module attributes {stable_mosaic.version = 11 : i64} {
  func.func @kernel(%arg0: i32, %arg1: memref<4x9x9x128xbf16, #tpu.memory_space<vmem>>, %arg2: memref<3x384x128xbf16, #tpu.memory_space<vmem>>, %arg3: memref<128x128xbf16, #tpu.memory_space<vmem>>, %arg4: memref<1x8x8x128xbf16, #tpu.memory_space<vmem>>, %arg5: memref<1x8x8x128xbf16, #tpu.memory_space<vmem>>, %arg6: memref<1x4x128xf32, #tpu.memory_space<vmem>>) attributes {dimension_semantics = [#tpu.dimension_semantics<parallel>], iteration_bounds = array<i64: 2>, scalar_prefetch = 0 : i64, scratch_operands = 0 : i64, tpu.core_type = #tpu.core_type<tc>, window_params = [{transform_indices = @transform_0, window_bounds = array<i64: 4, 9, 9, 128>}, {pipeline_mode = #tpu.pipeline_mode<synchronous>, transform_indices = @transform_1, window_bounds = array<i64: 3, 384, 128>}, {pipeline_mode = #tpu.pipeline_mode<synchronous>, transform_indices = @transform_2, window_bounds = array<i64: 128, 128>}, {transform_indices = @transform_3, window_bounds = array<i64: 1, 8, 8, 128>}, {transform_indices = @transform_4, window_bounds = array<i64: 1, 8, 8, 128>}, {transform_indices = @transform_5, window_bounds = array<i64: 1, 4, 128>}]} {
    %c0 = arith.constant 0 : index
    %c0_0 = arith.constant 0 : index
    %c0_1 = arith.constant 0 : index
    %c0_2 = arith.constant 0 : index
    %0 = vector.load %arg1[%c0, %c0_0, %c0_1, %c0_2] : memref<4x9x9x128xbf16, #tpu.memory_space<vmem>>, vector<4x9x9x128xbf16>
    %1 = vector.extract_strided_slice %0 {offsets = [0, 0, 0, 0], sizes = [1, 8, 8, 128], strides = [1, 1, 1, 1]} : vector<4x9x9x128xbf16> to vector<1x8x8x128xbf16>
    %2 = vector.shape_cast %1 : vector<1x8x8x128xbf16> to vector<8x8x128xbf16>
    %3 = vector.shape_cast %2 : vector<8x8x128xbf16> to vector<64x128xbf16>
    %4 = vector.extract_strided_slice %0 {offsets = [1, 0, 0, 0], sizes = [1, 8, 8, 128], strides = [1, 1, 1, 1]} : vector<4x9x9x128xbf16> to vector<1x8x8x128xbf16>
    %5 = vector.shape_cast %4 : vector<1x8x8x128xbf16> to vector<8x8x128xbf16>
    %6 = vector.shape_cast %5 : vector<8x8x128xbf16> to vector<64x128xbf16>
    %7 = vector.extract_strided_slice %0 {offsets = [0, 0, 1, 0], sizes = [1, 8, 8, 128], strides = [1, 1, 1, 1]} : vector<4x9x9x128xbf16> to vector<1x8x8x128xbf16>
    %8 = vector.shape_cast %7 : vector<1x8x8x128xbf16> to vector<8x8x128xbf16>
    %9 = vector.shape_cast %8 : vector<8x8x128xbf16> to vector<64x128xbf16>
    %10 = tpu.concatenate %3, %6, %9 in 1 : vector<64x128xbf16>, vector<64x128xbf16>, vector<64x128xbf16> -> vector<64x384xbf16>
    %c0_3 = arith.constant 0 : index
    %c0_4 = arith.constant 0 : index
    %c0_5 = arith.constant 0 : index
    %11 = vector.load %arg2[%c0_3, %c0_4, %c0_5] : memref<3x384x128xbf16, #tpu.memory_space<vmem>>, vector<1x384x128xbf16>
    %12 = vector.shape_cast %11 : vector<1x384x128xbf16> to vector<384x128xbf16>
    %cst = arith.constant dense<0.000000e+00> : vector<64x128xf32>
    %13 = tpu.matmul %10, %12, %cst {dimension_numbers = #tpu.dot_dimension_numbers<[1], [0], [0], [1], [0, 0, 1, 1], [], []>} : vector<64x384xbf16>, vector<384x128xbf16>, vector<64x128xf32> -> vector<64x128xf32>
    %14 = vector.extract_strided_slice %0 {offsets = [2, 0, 0, 0], sizes = [1, 8, 8, 128], strides = [1, 1, 1, 1]} : vector<4x9x9x128xbf16> to vector<1x8x8x128xbf16>
    %15 = vector.shape_cast %14 : vector<1x8x8x128xbf16> to vector<8x8x128xbf16>
    %16 = vector.shape_cast %15 : vector<8x8x128xbf16> to vector<64x128xbf16>
    %17 = vector.extract_strided_slice %0 {offsets = [3, 0, 0, 0], sizes = [1, 8, 8, 128], strides = [1, 1, 1, 1]} : vector<4x9x9x128xbf16> to vector<1x8x8x128xbf16>
    %18 = vector.shape_cast %17 : vector<1x8x8x128xbf16> to vector<8x8x128xbf16>
    %19 = vector.shape_cast %18 : vector<8x8x128xbf16> to vector<64x128xbf16>
    %20 = vector.extract_strided_slice %0 {offsets = [2, 0, 1, 0], sizes = [1, 8, 8, 128], strides = [1, 1, 1, 1]} : vector<4x9x9x128xbf16> to vector<1x8x8x128xbf16>
    %21 = vector.shape_cast %20 : vector<1x8x8x128xbf16> to vector<8x8x128xbf16>
    %22 = vector.shape_cast %21 : vector<8x8x128xbf16> to vector<64x128xbf16>
    %23 = tpu.concatenate %16, %19, %22 in 1 : vector<64x128xbf16>, vector<64x128xbf16>, vector<64x128xbf16> -> vector<64x384xbf16>
    %c1 = arith.constant 1 : index
    %c0_6 = arith.constant 0 : index
    %c0_7 = arith.constant 0 : index
    %24 = vector.load %arg2[%c1, %c0_6, %c0_7] : memref<3x384x128xbf16, #tpu.memory_space<vmem>>, vector<1x384x128xbf16>
    %25 = vector.shape_cast %24 : vector<1x384x128xbf16> to vector<384x128xbf16>
    %cst_8 = arith.constant dense<0.000000e+00> : vector<64x128xf32>
    %26 = tpu.matmul %23, %25, %cst_8 {dimension_numbers = #tpu.dot_dimension_numbers<[1], [0], [0], [1], [0, 0, 1, 1], [], []>} : vector<64x384xbf16>, vector<384x128xbf16>, vector<64x128xf32> -> vector<64x128xf32>
    %27 = arith.addf %13, %26 : vector<64x128xf32>
    %c0_9 = arith.constant 0 : index
    %c0_10 = arith.constant 0 : index
    %28 = vector.load %arg3[%c0_9, %c0_10] : memref<128x128xbf16, #tpu.memory_space<vmem>>, vector<128x128xbf16>
    %cst_11 = arith.constant dense<0.000000e+00> : vector<64x128xf32>
    %29 = tpu.matmul %19, %28, %cst_11 {dimension_numbers = #tpu.dot_dimension_numbers<[1], [0], [0], [1], [0, 0, 1, 1], [], []>} : vector<64x128xbf16>, vector<128x128xbf16>, vector<64x128xf32> -> vector<64x128xf32>
    %30 = vector.extract_strided_slice %0 {offsets = [0, 1, 0, 0], sizes = [1, 8, 8, 128], strides = [1, 1, 1, 1]} : vector<4x9x9x128xbf16> to vector<1x8x8x128xbf16>
    %31 = vector.shape_cast %30 : vector<1x8x8x128xbf16> to vector<8x8x128xbf16>
    %32 = vector.shape_cast %31 : vector<8x8x128xbf16> to vector<64x128xbf16>
    %33 = vector.extract_strided_slice %0 {offsets = [1, 1, 0, 0], sizes = [1, 8, 8, 128], strides = [1, 1, 1, 1]} : vector<4x9x9x128xbf16> to vector<1x8x8x128xbf16>
    %34 = vector.shape_cast %33 : vector<1x8x8x128xbf16> to vector<8x8x128xbf16>
    %35 = vector.shape_cast %34 : vector<8x8x128xbf16> to vector<64x128xbf16>
    %36 = vector.extract_strided_slice %0 {offsets = [0, 1, 1, 0], sizes = [1, 8, 8, 128], strides = [1, 1, 1, 1]} : vector<4x9x9x128xbf16> to vector<1x8x8x128xbf16>
    %37 = vector.shape_cast %36 : vector<1x8x8x128xbf16> to vector<8x8x128xbf16>
    %38 = vector.shape_cast %37 : vector<8x8x128xbf16> to vector<64x128xbf16>
    %39 = tpu.concatenate %32, %35, %38 in 1 : vector<64x128xbf16>, vector<64x128xbf16>, vector<64x128xbf16> -> vector<64x384xbf16>
    %c2 = arith.constant 2 : index
    %c0_12 = arith.constant 0 : index
    %c0_13 = arith.constant 0 : index
    %40 = vector.load %arg2[%c2, %c0_12, %c0_13] : memref<3x384x128xbf16, #tpu.memory_space<vmem>>, vector<1x384x128xbf16>
    %41 = vector.shape_cast %40 : vector<1x384x128xbf16> to vector<384x128xbf16>
    %cst_14 = arith.constant dense<0.000000e+00> : vector<64x128xf32>
    %42 = tpu.matmul %39, %41, %cst_14 {dimension_numbers = #tpu.dot_dimension_numbers<[1], [0], [0], [1], [0, 0, 1, 1], [], []>} : vector<64x384xbf16>, vector<384x128xbf16>, vector<64x128xf32> -> vector<64x128xf32>
    %43 = arith.addf %27, %42 : vector<64x128xf32>
    %44 = vector.shape_cast %43 : vector<64x128xf32> to vector<8x8x128xf32>
    %45 = arith.truncf %44 : vector<8x8x128xf32> to vector<8x8x128xbf16>
    %c0_15 = arith.constant 0 : index
    %c0_16 = arith.constant 0 : index
    %c0_17 = arith.constant 0 : index
    %c0_18 = arith.constant 0 : index
    %46 = vector.load %arg4[%c0_15, %c0_16, %c0_17, %c0_18] : memref<1x8x8x128xbf16, #tpu.memory_space<vmem>>, vector<1x8x8x128xbf16>
    %47 = vector.shape_cast %46 : vector<1x8x8x128xbf16> to vector<8x8x128xbf16>
    %48 = vector.shape_cast %45 : vector<8x8x128xbf16> to vector<1x8x8x128xbf16>
    tpu.vector_store %arg4[%c0_15, %c0_16, %c0_17, %c0_18], %48 {strides = array<i32>} : memref<1x8x8x128xbf16, #tpu.memory_space<vmem>>, vector<1x8x8x128xbf16>,
    %49 = vector.shape_cast %29 : vector<64x128xf32> to vector<8x8x128xf32>
    %50 = arith.truncf %49 : vector<8x8x128xf32> to vector<8x8x128xbf16>
    %c0_19 = arith.constant 0 : index
    %c0_20 = arith.constant 0 : index
    %c0_21 = arith.constant 0 : index
    %c0_22 = arith.constant 0 : index
    %51 = vector.load %arg5[%c0_19, %c0_20, %c0_21, %c0_22] : memref<1x8x8x128xbf16, #tpu.memory_space<vmem>>, vector<1x8x8x128xbf16>
    %52 = vector.shape_cast %51 : vector<1x8x8x128xbf16> to vector<8x8x128xbf16>
    %53 = vector.shape_cast %50 : vector<8x8x128xbf16> to vector<1x8x8x128xbf16>
    tpu.vector_store %arg5[%c0_19, %c0_20, %c0_21, %c0_22], %53 {strides = array<i32>} : memref<1x8x8x128xbf16, #tpu.memory_space<vmem>>, vector<1x8x8x128xbf16>,
    %cst_23 = arith.constant dense<0.000000e+00> : vector<128xf32>
    %54 = vector.multi_reduction <add>, %43, %cst_23 [0] : vector<64x128xf32> to vector<128xf32>
    %55 = vector.shape_cast %54 : vector<128xf32> to vector<1x128xf32>
    %cst_24 = arith.constant 1.562500e-02 : f32
    %56 = vector.broadcast %cst_24 : f32 to vector<1x128xf32>
    %57 = arith.mulf %55, %56 : vector<1x128xf32>
    %58 = vector.broadcast %57 : vector<1x128xf32> to vector<64x128xf32>
    %59 = arith.subf %43, %58 : vector<64x128xf32>
    %60 = arith.mulf %59, %59 : vector<64x128xf32>
    %cst_25 = arith.constant dense<0.000000e+00> : vector<128xf32>
    %61 = vector.multi_reduction <add>, %60, %cst_25 [0] : vector<64x128xf32> to vector<128xf32>
    %62 = vector.shape_cast %61 : vector<128xf32> to vector<1x128xf32>
    %cst_26 = arith.constant dense<0.000000e+00> : vector<128xf32>
    %63 = vector.multi_reduction <add>, %29, %cst_26 [0] : vector<64x128xf32> to vector<128xf32>
    %64 = vector.shape_cast %63 : vector<128xf32> to vector<1x128xf32>
    %cst_27 = arith.constant 1.562500e-02 : f32
    %65 = vector.broadcast %cst_27 : f32 to vector<1x128xf32>
    %66 = arith.mulf %64, %65 : vector<1x128xf32>
    %67 = vector.broadcast %66 : vector<1x128xf32> to vector<64x128xf32>
    %68 = arith.subf %29, %67 : vector<64x128xf32>
    %69 = arith.mulf %68, %68 : vector<64x128xf32>
    %cst_28 = arith.constant dense<0.000000e+00> : vector<128xf32>
    %70 = vector.multi_reduction <add>, %69, %cst_28 [0] : vector<64x128xf32> to vector<128xf32>
    %71 = vector.shape_cast %70 : vector<128xf32> to vector<1x128xf32>
    %72 = tpu.concatenate %55, %62, %64, %71 in 0 : vector<1x128xf32>, vector<1x128xf32>, vector<1x128xf32>, vector<1x128xf32> -> vector<4x128xf32>
    %c0_29 = arith.constant 0 : index
    %c0_30 = arith.constant 0 : index
    %c0_31 = arith.constant 0 : index
    %73 = vector.load %arg6[%c0_29, %c0_30, %c0_31] : memref<1x4x128xf32, #tpu.memory_space<vmem>>, vector<1x4x128xf32>
    %74 = vector.shape_cast %73 : vector<1x4x128xf32> to vector<4x128xf32>
    %75 = vector.shape_cast %72 : vector<4x128xf32> to vector<1x4x128xf32>
    tpu.vector_store %arg6[%c0_29, %c0_30, %c0_31], %75 {strides = array<i32>} : memref<1x4x128xf32, #tpu.memory_space<vmem>>, vector<1x4x128xf32>,
    return
  }
  func.func @transform_0(%arg0: i32) -> (i32, i32, i32, i32) {
    %c0_i32 = arith.constant 0 : i32
    %c0_i32_0 = arith.constant 0 : i32
    %c0_i32_1 = arith.constant 0 : i32
    %c0_i32_2 = arith.constant 0 : i32
    return %arg0, %c0_i32, %c0_i32_0, %c0_i32_1 : i32, i32, i32, i32
  }
  func.func @transform_1(%arg0: i32) -> (i32, i32, i32) {
    %c0_i32 = arith.constant 0 : i32
    %c0_i32_0 = arith.constant 0 : i32
    %c0_i32_1 = arith.constant 0 : i32
    %c0_i32_2 = arith.constant 0 : i32
    return %c0_i32, %c0_i32_0, %c0_i32_1 : i32, i32, i32
  }
  func.func @transform_2(%arg0: i32) -> (i32, i32) {
    %c0_i32 = arith.constant 0 : i32
    %c0_i32_0 = arith.constant 0 : i32
    %c0_i32_1 = arith.constant 0 : i32
    return %c0_i32, %c0_i32_0 : i32, i32
  }
  func.func @transform_3(%arg0: i32) -> (i32, i32, i32, i32) {
    %c0_i32 = arith.constant 0 : i32
    %c0_i32_0 = arith.constant 0 : i32
    %c0_i32_1 = arith.constant 0 : i32
    %c0_i32_2 = arith.constant 0 : i32
    return %arg0, %c0_i32, %c0_i32_0, %c0_i32_1 : i32, i32, i32, i32
  }
  func.func @transform_4(%arg0: i32) -> (i32, i32, i32, i32) {
    %c0_i32 = arith.constant 0 : i32
    %c0_i32_0 = arith.constant 0 : i32
    %c0_i32_1 = arith.constant 0 : i32
    %c0_i32_2 = arith.constant 0 : i32
    return %arg0, %c0_i32, %c0_i32_0, %c0_i32_1 : i32, i32, i32, i32
  }
  func.func @transform_5(%arg0: i32) -> (i32, i32, i32) {
    %c0_i32 = arith.constant 0 : i32
    %c0_i32_0 = arith.constant 0 : i32
    %c0_i32_1 = arith.constant 0 : i32
    return %arg0, %c0_i32, %c0_i32_0 : i32, i32, i32
  }
}

module attributes {stable_mosaic.version = 11 : i64} {
  func.func @kernel(%arg0: i32, %arg1: memref<1x8x8x128xbf16, #tpu.memory_space<vmem>>, %arg2: memref<2x128xf32, #tpu.memory_space<vmem>>, %arg3: memref<3x384x128xbf16, #tpu.memory_space<vmem>>, %arg4: memref<1x8x8x128xbf16, #tpu.memory_space<vmem>>, %arg5: memref<1x2x128xf32, #tpu.memory_space<vmem>>, %arg6: memref<10x10x128xbf16, #tpu.memory_space<vmem>>) attributes {dimension_semantics = [#tpu.dimension_semantics<parallel>], iteration_bounds = array<i64: 2>, scalar_prefetch = 0 : i64, scratch_operands = 1 : i64, tpu.core_type = #tpu.core_type<tc>, window_params = [{transform_indices = @transform_0, window_bounds = array<i64: 1, 8, 8, 128>}, {pipeline_mode = #tpu.pipeline_mode<synchronous>, transform_indices = @transform_1, window_bounds = array<i64: 2, 128>}, {pipeline_mode = #tpu.pipeline_mode<synchronous>, transform_indices = @transform_2, window_bounds = array<i64: 3, 384, 128>}, {transform_indices = @transform_3, window_bounds = array<i64: 1, 8, 8, 128>}, {transform_indices = @transform_4, window_bounds = array<i64: 1, 2, 128>}]} {
    %c0 = arith.constant 0 : index
    %c0_0 = arith.constant 0 : index
    %0 = vector.load %arg2[%c0, %c0_0] : memref<2x128xf32, #tpu.memory_space<vmem>>, vector<2x128xf32>
    %1 = vector.extract_strided_slice %0 {offsets = [0, 0], sizes = [1, 128], strides = [1, 1]} : vector<2x128xf32> to vector<1x128xf32>
    %2 = vector.shape_cast %1 : vector<1x128xf32> to vector<1x1x128xf32>
    %3 = vector.extract_strided_slice %0 {offsets = [1, 0], sizes = [1, 128], strides = [1, 1]} : vector<2x128xf32> to vector<1x128xf32>
    %4 = vector.shape_cast %3 : vector<1x128xf32> to vector<1x1x128xf32>
    %c0_1 = arith.constant 0 : index
    %c0_2 = arith.constant 0 : index
    %c0_3 = arith.constant 0 : index
    %c0_4 = arith.constant 0 : index
    %5 = vector.load %arg1[%c0_1, %c0_2, %c0_3, %c0_4] : memref<1x8x8x128xbf16, #tpu.memory_space<vmem>>, vector<1x8x8x128xbf16>
    %6 = vector.shape_cast %5 : vector<1x8x8x128xbf16> to vector<8x8x128xbf16>
    %7 = arith.extf %6 : vector<8x8x128xbf16> to vector<8x8x128xf32>
    %8 = vector.broadcast %2 : vector<1x1x128xf32> to vector<8x8x128xf32>
    %9 = arith.mulf %7, %8 : vector<8x8x128xf32>
    %10 = vector.broadcast %4 : vector<1x1x128xf32> to vector<8x8x128xf32>
    %11 = arith.addf %9, %10 : vector<8x8x128xf32>
    %cst = arith.constant 0.000000e+00 : f32
    %12 = vector.broadcast %cst : f32 to vector<8x8x128xf32>
    %13 = arith.maximumf %11, %12 : vector<8x8x128xf32>
    %cst_5 = arith.constant 0.000000e+00 : bf16
    %14 = vector.broadcast %cst_5 : bf16 to vector<1x10x128xbf16>
    %cst_6 = arith.constant 0.000000e+00 : bf16
    %15 = vector.broadcast %cst_6 : bf16 to vector<8x1x128xbf16>
    %c0_7 = arith.constant 0 : index
    %c0_8 = arith.constant 0 : index
    %c0_9 = arith.constant 0 : index
    %16 = vector.load %arg6[%c0_7, %c0_8, %c0_9] : memref<10x10x128xbf16, #tpu.memory_space<vmem>>, vector<1x10x128xbf16>
    tpu.vector_store %arg6[%c0_7, %c0_8, %c0_9], %14 {strides = array<i32>} : memref<10x10x128xbf16, #tpu.memory_space<vmem>>, vector<1x10x128xbf16>,
    %c9 = arith.constant 9 : index
    %c0_10 = arith.constant 0 : index
    %c0_11 = arith.constant 0 : index
    %17 = vector.load %arg6[%c9, %c0_10, %c0_11] : memref<10x10x128xbf16, #tpu.memory_space<vmem>>, vector<1x10x128xbf16>
    tpu.vector_store %arg6[%c9, %c0_10, %c0_11], %14 {strides = array<i32>} : memref<10x10x128xbf16, #tpu.memory_space<vmem>>, vector<1x10x128xbf16>,
    %c1 = arith.constant 1 : index
    %c0_12 = arith.constant 0 : index
    %c0_13 = arith.constant 0 : index
    %18 = vector.load %arg6[%c1, %c0_12, %c0_13] : memref<10x10x128xbf16, #tpu.memory_space<vmem>>, vector<8x1x128xbf16>
    tpu.vector_store %arg6[%c1, %c0_12, %c0_13], %15 {strides = array<i32>} : memref<10x10x128xbf16, #tpu.memory_space<vmem>>, vector<8x1x128xbf16>,
    %c1_14 = arith.constant 1 : index
    %c9_15 = arith.constant 9 : index
    %c0_16 = arith.constant 0 : index
    %19 = vector.load %arg6[%c1_14, %c9_15, %c0_16] : memref<10x10x128xbf16, #tpu.memory_space<vmem>>, vector<8x1x128xbf16>
    tpu.vector_store %arg6[%c1_14, %c9_15, %c0_16], %15 {strides = array<i32>} : memref<10x10x128xbf16, #tpu.memory_space<vmem>>, vector<8x1x128xbf16>,
    %20 = arith.truncf %13 : vector<8x8x128xf32> to vector<8x8x128xbf16>
    %c1_17 = arith.constant 1 : index
    %c1_18 = arith.constant 1 : index
    %c0_19 = arith.constant 0 : index
    %21 = vector.load %arg6[%c1_17, %c1_18, %c0_19] : memref<10x10x128xbf16, #tpu.memory_space<vmem>>, vector<8x8x128xbf16>
    tpu.vector_store %arg6[%c1_17, %c1_18, %c0_19], %20 {strides = array<i32>} : memref<10x10x128xbf16, #tpu.memory_space<vmem>>, vector<8x8x128xbf16>,
    %c0_20 = arith.constant 0 : index
    %c0_21 = arith.constant 0 : index
    %c0_22 = arith.constant 0 : index
    %22 = vector.load %arg6[%c0_20, %c0_21, %c0_22] : memref<10x10x128xbf16, #tpu.memory_space<vmem>>, vector<10x10x128xbf16>
    %23 = vector.extract_strided_slice %22 {offsets = [0, 0, 0], sizes = [8, 10, 128], strides = [1, 1, 1]} : vector<10x10x128xbf16> to vector<8x10x128xbf16>
    %24 = vector.extract_strided_slice %23 {offsets = [0, 0, 0], sizes = [8, 8, 128], strides = [1, 1, 1]} : vector<8x10x128xbf16> to vector<8x8x128xbf16>
    %25 = vector.shape_cast %24 : vector<8x8x128xbf16> to vector<64x128xbf16>
    %26 = vector.extract_strided_slice %23 {offsets = [0, 1, 0], sizes = [8, 8, 128], strides = [1, 1, 1]} : vector<8x10x128xbf16> to vector<8x8x128xbf16>
    %27 = vector.shape_cast %26 : vector<8x8x128xbf16> to vector<64x128xbf16>
    %28 = vector.extract_strided_slice %23 {offsets = [0, 2, 0], sizes = [8, 8, 128], strides = [1, 1, 1]} : vector<8x10x128xbf16> to vector<8x8x128xbf16>
    %29 = vector.shape_cast %28 : vector<8x8x128xbf16> to vector<64x128xbf16>
    %30 = tpu.concatenate %25, %27, %29 in 1 : vector<64x128xbf16>, vector<64x128xbf16>, vector<64x128xbf16> -> vector<64x384xbf16>
    %c0_23 = arith.constant 0 : index
    %c0_24 = arith.constant 0 : index
    %c0_25 = arith.constant 0 : index
    %31 = vector.load %arg3[%c0_23, %c0_24, %c0_25] : memref<3x384x128xbf16, #tpu.memory_space<vmem>>, vector<1x384x128xbf16>
    %32 = vector.shape_cast %31 : vector<1x384x128xbf16> to vector<384x128xbf16>
    %cst_26 = arith.constant dense<0.000000e+00> : vector<64x128xf32>
    %33 = tpu.matmul %30, %32, %cst_26 {dimension_numbers = #tpu.dot_dimension_numbers<[1], [0], [0], [1], [0, 0, 1, 1], [], []>} : vector<64x384xbf16>, vector<384x128xbf16>, vector<64x128xf32> -> vector<64x128xf32>
    %34 = vector.extract_strided_slice %22 {offsets = [1, 0, 0], sizes = [8, 10, 128], strides = [1, 1, 1]} : vector<10x10x128xbf16> to vector<8x10x128xbf16>
    %35 = vector.extract_strided_slice %34 {offsets = [0, 0, 0], sizes = [8, 8, 128], strides = [1, 1, 1]} : vector<8x10x128xbf16> to vector<8x8x128xbf16>
    %36 = vector.shape_cast %35 : vector<8x8x128xbf16> to vector<64x128xbf16>
    %37 = vector.extract_strided_slice %34 {offsets = [0, 1, 0], sizes = [8, 8, 128], strides = [1, 1, 1]} : vector<8x10x128xbf16> to vector<8x8x128xbf16>
    %38 = vector.shape_cast %37 : vector<8x8x128xbf16> to vector<64x128xbf16>
    %39 = vector.extract_strided_slice %34 {offsets = [0, 2, 0], sizes = [8, 8, 128], strides = [1, 1, 1]} : vector<8x10x128xbf16> to vector<8x8x128xbf16>
    %40 = vector.shape_cast %39 : vector<8x8x128xbf16> to vector<64x128xbf16>
    %41 = tpu.concatenate %36, %38, %40 in 1 : vector<64x128xbf16>, vector<64x128xbf16>, vector<64x128xbf16> -> vector<64x384xbf16>
    %c1_27 = arith.constant 1 : index
    %c0_28 = arith.constant 0 : index
    %c0_29 = arith.constant 0 : index
    %42 = vector.load %arg3[%c1_27, %c0_28, %c0_29] : memref<3x384x128xbf16, #tpu.memory_space<vmem>>, vector<1x384x128xbf16>
    %43 = vector.shape_cast %42 : vector<1x384x128xbf16> to vector<384x128xbf16>
    %cst_30 = arith.constant dense<0.000000e+00> : vector<64x128xf32>
    %44 = tpu.matmul %41, %43, %cst_30 {dimension_numbers = #tpu.dot_dimension_numbers<[1], [0], [0], [1], [0, 0, 1, 1], [], []>} : vector<64x384xbf16>, vector<384x128xbf16>, vector<64x128xf32> -> vector<64x128xf32>
    %45 = arith.addf %33, %44 : vector<64x128xf32>
    %46 = vector.extract_strided_slice %22 {offsets = [2, 0, 0], sizes = [8, 10, 128], strides = [1, 1, 1]} : vector<10x10x128xbf16> to vector<8x10x128xbf16>
    %47 = vector.extract_strided_slice %46 {offsets = [0, 0, 0], sizes = [8, 8, 128], strides = [1, 1, 1]} : vector<8x10x128xbf16> to vector<8x8x128xbf16>
    %48 = vector.shape_cast %47 : vector<8x8x128xbf16> to vector<64x128xbf16>
    %49 = vector.extract_strided_slice %46 {offsets = [0, 1, 0], sizes = [8, 8, 128], strides = [1, 1, 1]} : vector<8x10x128xbf16> to vector<8x8x128xbf16>
    %50 = vector.shape_cast %49 : vector<8x8x128xbf16> to vector<64x128xbf16>
    %51 = vector.extract_strided_slice %46 {offsets = [0, 2, 0], sizes = [8, 8, 128], strides = [1, 1, 1]} : vector<8x10x128xbf16> to vector<8x8x128xbf16>
    %52 = vector.shape_cast %51 : vector<8x8x128xbf16> to vector<64x128xbf16>
    %53 = tpu.concatenate %48, %50, %52 in 1 : vector<64x128xbf16>, vector<64x128xbf16>, vector<64x128xbf16> -> vector<64x384xbf16>
    %c2 = arith.constant 2 : index
    %c0_31 = arith.constant 0 : index
    %c0_32 = arith.constant 0 : index
    %54 = vector.load %arg3[%c2, %c0_31, %c0_32] : memref<3x384x128xbf16, #tpu.memory_space<vmem>>, vector<1x384x128xbf16>
    %55 = vector.shape_cast %54 : vector<1x384x128xbf16> to vector<384x128xbf16>
    %cst_33 = arith.constant dense<0.000000e+00> : vector<64x128xf32>
    %56 = tpu.matmul %53, %55, %cst_33 {dimension_numbers = #tpu.dot_dimension_numbers<[1], [0], [0], [1], [0, 0, 1, 1], [], []>} : vector<64x384xbf16>, vector<384x128xbf16>, vector<64x128xf32> -> vector<64x128xf32>
    %57 = arith.addf %45, %56 : vector<64x128xf32>
    %58 = vector.shape_cast %57 : vector<64x128xf32> to vector<8x8x128xf32>
    %59 = arith.truncf %58 : vector<8x8x128xf32> to vector<8x8x128xbf16>
    %c0_34 = arith.constant 0 : index
    %c0_35 = arith.constant 0 : index
    %c0_36 = arith.constant 0 : index
    %c0_37 = arith.constant 0 : index
    %60 = vector.load %arg4[%c0_34, %c0_35, %c0_36, %c0_37] : memref<1x8x8x128xbf16, #tpu.memory_space<vmem>>, vector<1x8x8x128xbf16>
    %61 = vector.shape_cast %60 : vector<1x8x8x128xbf16> to vector<8x8x128xbf16>
    %62 = vector.shape_cast %59 : vector<8x8x128xbf16> to vector<1x8x8x128xbf16>
    tpu.vector_store %arg4[%c0_34, %c0_35, %c0_36, %c0_37], %62 {strides = array<i32>} : memref<1x8x8x128xbf16, #tpu.memory_space<vmem>>, vector<1x8x8x128xbf16>,
    %cst_38 = arith.constant dense<0.000000e+00> : vector<128xf32>
    %63 = vector.multi_reduction <add>, %57, %cst_38 [0] : vector<64x128xf32> to vector<128xf32>
    %64 = vector.shape_cast %63 : vector<128xf32> to vector<1x128xf32>
    %cst_39 = arith.constant 1.562500e-02 : f32
    %65 = vector.broadcast %cst_39 : f32 to vector<1x128xf32>
    %66 = arith.mulf %64, %65 : vector<1x128xf32>
    %67 = vector.broadcast %66 : vector<1x128xf32> to vector<64x128xf32>
    %68 = arith.subf %57, %67 : vector<64x128xf32>
    %69 = arith.mulf %68, %68 : vector<64x128xf32>
    %cst_40 = arith.constant dense<0.000000e+00> : vector<128xf32>
    %70 = vector.multi_reduction <add>, %69, %cst_40 [0] : vector<64x128xf32> to vector<128xf32>
    %71 = vector.shape_cast %70 : vector<128xf32> to vector<1x128xf32>
    %72 = tpu.concatenate %64, %71 in 0 : vector<1x128xf32>, vector<1x128xf32> -> vector<2x128xf32>
    %c0_41 = arith.constant 0 : index
    %c0_42 = arith.constant 0 : index
    %c0_43 = arith.constant 0 : index
    %73 = vector.load %arg5[%c0_41, %c0_42, %c0_43] : memref<1x2x128xf32, #tpu.memory_space<vmem>>, vector<1x2x128xf32>
    %74 = vector.shape_cast %73 : vector<1x2x128xf32> to vector<2x128xf32>
    %75 = vector.shape_cast %72 : vector<2x128xf32> to vector<1x2x128xf32>
    tpu.vector_store %arg5[%c0_41, %c0_42, %c0_43], %75 {strides = array<i32>} : memref<1x2x128xf32, #tpu.memory_space<vmem>>, vector<1x2x128xf32>,
    return
  }
  func.func @transform_0(%arg0: i32) -> (i32, i32, i32, i32) {
    %c0_i32 = arith.constant 0 : i32
    %c0_i32_0 = arith.constant 0 : i32
    %c0_i32_1 = arith.constant 0 : i32
    %c0_i32_2 = arith.constant 0 : i32
    return %arg0, %c0_i32, %c0_i32_0, %c0_i32_1 : i32, i32, i32, i32
  }
  func.func @transform_1(%arg0: i32) -> (i32, i32) {
    %c0_i32 = arith.constant 0 : i32
    %c0_i32_0 = arith.constant 0 : i32
    %c0_i32_1 = arith.constant 0 : i32
    return %c0_i32, %c0_i32_0 : i32, i32
  }
  func.func @transform_2(%arg0: i32) -> (i32, i32, i32) {
    %c0_i32 = arith.constant 0 : i32
    %c0_i32_0 = arith.constant 0 : i32
    %c0_i32_1 = arith.constant 0 : i32
    %c0_i32_2 = arith.constant 0 : i32
    return %c0_i32, %c0_i32_0, %c0_i32_1 : i32, i32, i32
  }
  func.func @transform_3(%arg0: i32) -> (i32, i32, i32, i32) {
    %c0_i32 = arith.constant 0 : i32
    %c0_i32_0 = arith.constant 0 : i32
    %c0_i32_1 = arith.constant 0 : i32
    %c0_i32_2 = arith.constant 0 : i32
    return %arg0, %c0_i32, %c0_i32_0, %c0_i32_1 : i32, i32, i32, i32
  }
  func.func @transform_4(%arg0: i32) -> (i32, i32, i32) {
    %c0_i32 = arith.constant 0 : i32
    %c0_i32_0 = arith.constant 0 : i32
    %c0_i32_1 = arith.constant 0 : i32
    return %arg0, %c0_i32, %c0_i32_0 : i32, i32, i32
  }
}

module attributes {stable_mosaic.version = 11 : i64} {
  func.func @kernel(%arg0: i32, %arg1: memref<1x8x8x128xbf16, #tpu.memory_space<vmem>>, %arg2: memref<1x8x8x128xbf16, #tpu.memory_space<vmem>>, %arg3: memref<4x128xf32, #tpu.memory_space<vmem>>, %arg4: memref<1x8x8x128xf32, #tpu.memory_space<vmem>>) attributes {dimension_semantics = [#tpu.dimension_semantics<parallel>], iteration_bounds = array<i64: 2>, scalar_prefetch = 0 : i64, scratch_operands = 0 : i64, tpu.core_type = #tpu.core_type<tc>, window_params = [{transform_indices = @transform_0, window_bounds = array<i64: 1, 8, 8, 128>}, {transform_indices = @transform_1, window_bounds = array<i64: 1, 8, 8, 128>}, {pipeline_mode = #tpu.pipeline_mode<synchronous>, transform_indices = @transform_2, window_bounds = array<i64: 4, 128>}, {transform_indices = @transform_3, window_bounds = array<i64: 1, 8, 8, 128>}]} {
    %c0 = arith.constant 0 : index
    %c0_0 = arith.constant 0 : index
    %0 = vector.load %arg3[%c0, %c0_0] : memref<4x128xf32, #tpu.memory_space<vmem>>, vector<4x128xf32>
    %1 = vector.extract_strided_slice %0 {offsets = [0, 0], sizes = [1, 128], strides = [1, 1]} : vector<4x128xf32> to vector<1x128xf32>
    %2 = vector.shape_cast %1 : vector<1x128xf32> to vector<1x1x128xf32>
    %3 = vector.extract_strided_slice %0 {offsets = [1, 0], sizes = [1, 128], strides = [1, 1]} : vector<4x128xf32> to vector<1x128xf32>
    %4 = vector.shape_cast %3 : vector<1x128xf32> to vector<1x1x128xf32>
    %5 = vector.extract_strided_slice %0 {offsets = [2, 0], sizes = [1, 128], strides = [1, 1]} : vector<4x128xf32> to vector<1x128xf32>
    %6 = vector.shape_cast %5 : vector<1x128xf32> to vector<1x1x128xf32>
    %7 = vector.extract_strided_slice %0 {offsets = [3, 0], sizes = [1, 128], strides = [1, 1]} : vector<4x128xf32> to vector<1x128xf32>
    %8 = vector.shape_cast %7 : vector<1x128xf32> to vector<1x1x128xf32>
    %c0_1 = arith.constant 0 : index
    %c0_2 = arith.constant 0 : index
    %c0_3 = arith.constant 0 : index
    %c0_4 = arith.constant 0 : index
    %9 = vector.load %arg1[%c0_1, %c0_2, %c0_3, %c0_4] : memref<1x8x8x128xbf16, #tpu.memory_space<vmem>>, vector<1x8x8x128xbf16>
    %10 = vector.shape_cast %9 : vector<1x8x8x128xbf16> to vector<8x8x128xbf16>
    %11 = arith.extf %10 : vector<8x8x128xbf16> to vector<8x8x128xf32>
    %c0_5 = arith.constant 0 : index
    %c0_6 = arith.constant 0 : index
    %c0_7 = arith.constant 0 : index
    %c0_8 = arith.constant 0 : index
    %12 = vector.load %arg2[%c0_5, %c0_6, %c0_7, %c0_8] : memref<1x8x8x128xbf16, #tpu.memory_space<vmem>>, vector<1x8x8x128xbf16>
    %13 = vector.shape_cast %12 : vector<1x8x8x128xbf16> to vector<8x8x128xbf16>
    %14 = arith.extf %13 : vector<8x8x128xbf16> to vector<8x8x128xf32>
    %15 = vector.broadcast %2 : vector<1x1x128xf32> to vector<8x8x128xf32>
    %16 = arith.mulf %11, %15 : vector<8x8x128xf32>
    %17 = vector.broadcast %4 : vector<1x1x128xf32> to vector<8x8x128xf32>
    %18 = arith.addf %16, %17 : vector<8x8x128xf32>
    %19 = vector.broadcast %6 : vector<1x1x128xf32> to vector<8x8x128xf32>
    %20 = arith.mulf %14, %19 : vector<8x8x128xf32>
    %21 = arith.addf %18, %20 : vector<8x8x128xf32>
    %22 = vector.broadcast %8 : vector<1x1x128xf32> to vector<8x8x128xf32>
    %23 = arith.addf %21, %22 : vector<8x8x128xf32>
    %cst = arith.constant 0.000000e+00 : f32
    %24 = vector.broadcast %cst : f32 to vector<8x8x128xf32>
    %25 = arith.maximumf %23, %24 : vector<8x8x128xf32>
    %c0_9 = arith.constant 0 : index
    %c0_10 = arith.constant 0 : index
    %c0_11 = arith.constant 0 : index
    %c0_12 = arith.constant 0 : index
    %26 = vector.load %arg4[%c0_9, %c0_10, %c0_11, %c0_12] : memref<1x8x8x128xf32, #tpu.memory_space<vmem>>, vector<1x8x8x128xf32>
    %27 = vector.shape_cast %26 : vector<1x8x8x128xf32> to vector<8x8x128xf32>
    %28 = vector.shape_cast %25 : vector<8x8x128xf32> to vector<1x8x8x128xf32>
    tpu.vector_store %arg4[%c0_9, %c0_10, %c0_11, %c0_12], %28 {strides = array<i32>} : memref<1x8x8x128xf32, #tpu.memory_space<vmem>>, vector<1x8x8x128xf32>,
    return
  }
  func.func @transform_0(%arg0: i32) -> (i32, i32, i32, i32) {
    %c0_i32 = arith.constant 0 : i32
    %c0_i32_0 = arith.constant 0 : i32
    %c0_i32_1 = arith.constant 0 : i32
    %c0_i32_2 = arith.constant 0 : i32
    return %arg0, %c0_i32, %c0_i32_0, %c0_i32_1 : i32, i32, i32, i32
  }
  func.func @transform_1(%arg0: i32) -> (i32, i32, i32, i32) {
    %c0_i32 = arith.constant 0 : i32
    %c0_i32_0 = arith.constant 0 : i32
    %c0_i32_1 = arith.constant 0 : i32
    %c0_i32_2 = arith.constant 0 : i32
    return %arg0, %c0_i32, %c0_i32_0, %c0_i32_1 : i32, i32, i32, i32
  }
  func.func @transform_2(%arg0: i32) -> (i32, i32) {
    %c0_i32 = arith.constant 0 : i32
    %c0_i32_0 = arith.constant 0 : i32
    %c0_i32_1 = arith.constant 0 : i32
    return %c0_i32, %c0_i32_0 : i32, i32
  }
  func.func @transform_3(%arg0: i32) -> (i32, i32, i32, i32) {
    %c0_i32 = arith.constant 0 : i32
    %c0_i32_0 = arith.constant 0 : i32
    %c0_i32_1 = arith.constant 0 : i32
    %c0_i32_2 = arith.constant 0 : i32
    return %arg0, %c0_i32, %c0_i32_0, %c0_i32_1 : i32, i32, i32, i32
  }
}

</mosaic_0001>

<llo_original>
// kernel: block_forward.5
$region0: #{block_forward.5}
  #allocation0 [shape = 'u32[]', space=smem, size = 0x4, offset = 0x4, fixed_abs, tag = 'smem constant byte address 0x4 - core index']
  #allocation1 [shape = 'u32[144,128]{1,0:T(1,128)}', space=vmem, size = 0x12000, scoped, tag = 'internal scratch']
  %s0 = inlined_call_operand.vmem [shape: bf16[2,8,8,128], index: 0, kind: input, shape index: {}]
  %s1 = inlined_call_operand.vmem [shape: bf16[2,8,8,128], index: 1, kind: input, shape index: {}]
  %s2 = inlined_call_operand.vmem [shape: f32[4,128], index: 2, kind: input, shape index: {}]
  %s3 = inlined_call_operand.vmem [shape: f32[2,8,8,128], index: 3, kind: output, shape index: {}]
  %s4 = sld [smem:[#allocation0]]
  $region45: #{block_forward.5} parent=0
    _
  %s6 = ssub.s32 1, %s4
  %s7 = scalar_select 0, %s6, %s4
  loop: start=0, step=1, limit=4
  $region2: #{block_forward.5} parent=0 // loop_pre_header
    _
  $region3: #{block_forward.5} parent=0 // loop_header
    %s9 = sphi 0, %s13
    %p10 = scmp.ge.s32.totalorder %s9, 4
    %s19 = sphi 0, %s21
    %s22 = sphi 0, %s19
    %s23 = sphi 0, %s22
    %s39 = sphi 0, %s23
    %s45 = sphi 0, %s47
    %s48 = sphi 0, %s45
    %s49 = sphi 0, %s48
    %s65 = sphi 0, %s49
    %s69 = sphi 0, %s69
    %s71 = sphi 0, %s69
    %s72 = sphi 0, %s71
    %s86 = sphi 0, %s72
    %s92 = sphi 0, %s94
    %s95 = sphi 0, %s92
    %s96 = sphi 0, %s95
    %s112 = sphi 0, %s96
  $region4: #{block_forward.5} parent=0 // loop_header_branch
    %12 = sbr.rel (%p10) target = $region8
  $region5: #{block_forward.5} parent=0 // loop_body
    %s14 = ssub.s32 %s9, 1
    %s15 = ssub.s32 %s9, 2
    %s16 = sadd.s32 %s9, 1
    %s17 = ssub.s32 %s9, %s16
    %p18 = scmp.eq.s32.totalorder %s17, 0
    %s20 = sadd.s32 %s19, 1
    %s21 = scalar_select %p18, %s19, %s20
    %p24 = pneg %p18
    %p25 = scmp.eq.s32.totalorder %s9, 1
    %p26 = por %p24, %p25
    %p27 = scmp.ne.s32.totalorder %s19, %s22
    %p28 = scmp.eq.s32.totalorder %s9, 0
    %p29 = por %p27, %p28
    %p30 = scmp.ne.s32.totalorder %s19, %s22
    %p31 = scmp.eq.s32.totalorder %s14, 1
    %p32 = por %p30, %p31
    %p33 = scmp.ne.s32.totalorder %s22, %s23
    %p34 = scmp.eq.s32.totalorder %s14, 0
    %p35 = por %p33, %p34
    %p36 = scmp.ne.s32.totalorder %s22, %s23
    %p37 = scmp.eq.s32.totalorder %s15, 1
    %p38 = por %p36, %p37
    %p40 = scmp.ne.s32.totalorder %s23, %s39
    %p41 = scmp.eq.s32.totalorder %s15, 0
    %p42 = por %p40, %p41
    %s43 = ssub.s32 %s9, %s16
    %p44 = scmp.eq.s32.totalorder %s43, 0
    %s46 = sadd.s32 %s45, 1
    %s47 = scalar_select %p44, %s45, %s46
    %p50 = pneg %p44
    %p51 = scmp.eq.s32.totalorder %s9, 1
    %p52 = por %p50, %p51
    %p53 = scmp.ne.s32.totalorder %s45, %s48
    %p54 = scmp.eq.s32.totalorder %s9, 0
    %p55 = por %p53, %p54
    %p56 = scmp.ne.s32.totalorder %s45, %s48
    %p57 = scmp.eq.s32.totalorder %s14, 1
    %p58 = por %p56, %p57
    %p59 = scmp.ne.s32.totalorder %s48, %s49
    %p60 = scmp.eq.s32.totalorder %s14, 0
    %p61 = por %p59, %p60
    %p62 = scmp.ne.s32.totalorder %s48, %s49
    %p63 = scmp.eq.s32.totalorder %s15, 1
    %p64 = por %p62, %p63
    %p66 = scmp.ne.s32.totalorder %s49, %s65
    %p67 = scmp.eq.s32.totalorder %s15, 0
    %p68 = por %p66, %p67
    %s70 = sadd.s32 %s69, 1
    %p73 = scmp.eq.s32.totalorder %s9, 1
    %p74 = scmp.ne.s32.totalorder %s69, %s71
    %p75 = scmp.eq.s32.totalorder %s9, 0
    %p76 = por %p74, %p75
    %p77 = scmp.ne.s32.totalorder %s69, %s71
    %p78 = scmp.eq.s32.totalorder %s14, 1
    %p79 = por %p77, %p78
    %p80 = scmp.ne.s32.totalorder %s71, %s72
    %p81 = scmp.eq.s32.totalorder %s14, 0
    %p82 = por %p80, %p81
    %p83 = scmp.ne.s32.totalorder %s71, %s72
    %p84 = scmp.eq.s32.totalorder %s15, 1
    %p85 = por %p83, %p84
    %p87 = scmp.ne.s32.totalorder %s72, %s86
    %p88 = scmp.eq.s32.totalorder %s15, 0
    %p89 = por %p87, %p88
    %s90 = ssub.s32 %s9, %s16
    %p91 = scmp.eq.s32.totalorder %s90, 0
    %s93 = sadd.s32 %s92, 1
    %s94 = scalar_select %p91, %s92, %s93
    %p97 = pneg %p91
    %p98 = scmp.eq.s32.totalorder %s9, 1
    %p99 = por %p97, %p98
    %p100 = scmp.ne.s32.totalorder %s92, %s95
    %p101 = scmp.eq.s32.totalorder %s9, 0
    %p102 = por %p100, %p101
    %p103 = scmp.ne.s32.totalorder %s92, %s95
    %p104 = scmp.eq.s32.totalorder %s14, 1
    %p105 = por %p103, %p104
    %p106 = scmp.ne.s32.totalorder %s95, %s96
    %p107 = scmp.eq.s32.totalorder %s14, 0
    %p108 = por %p106, %p107
    %p109 = scmp.ne.s32.totalorder %s95, %s96
    %p110 = scmp.eq.s32.totalorder %s15, 1
    %p111 = por %p109, %p110
    %p113 = scmp.ne.s32.totalorder %s96, %s112
    %p114 = scmp.eq.s32.totalorder %s15, 0
    %p115 = por %p113, %p114
    %p116 = scmp.le.s32.totalorder 1, %s9
    %p117 = scmp.lt.s32.totalorder %s9, 3
    %p118 = pnand %p116, %p117
    %p119 = pneg %p118
    // Predicated region
    $region9: #{block_forward.5} parent=5 // pred_check
      _
    $region10: #{block_forward.5} parent=5 // pred_check_branch
      %121 = sbr.rel (%p118) target = $region12
    $region11: #{block_forward.5} parent=5 // pred_region
      %s122 = ssub.s32 %s9, 1
      // Predicated region
      $region13: #{block_forward.5} parent=11 // pred_check
        %p123 = pneg %p82
      $region14: #{block_forward.5} parent=11 // pred_check_branch
        %125 = sbr.rel (%p123) target = $region16
      $region15: #{block_forward.5} parent=11 // pred_region
        _
      $region16: #{block_forward.5} parent=11 // pred_fallthru
        _
    $region12: #{block_forward.5} parent=5 // pred_fallthru
      _
    %p126 = scmp.lt.s32.totalorder %s9, 2
    // Predicated region
    $region17: #{block_forward.5} parent=5 // pred_check
      %p127 = pneg %p126
    $region18: #{block_forward.5} parent=5 // pred_check_branch
      %129 = sbr.rel (%p127) target = $region20
    $region19: #{block_forward.5} parent=5 // pred_region
      // Predicated region
      $region21: #{block_forward.5} parent=19 // pred_check
        %p130 = pneg %p29
      $region22: #{block_forward.5} parent=19 // pred_check_branch
        %132 = sbr.rel (%p130) target = $region24
      $region23: #{block_forward.5} parent=19 // pred_region
        %p133 = scmp.lt.s32.totalorder %s9, 1
        %s134 = scalar_select %p133, %s9, 1
        %s135 = smul.addr %s134, 8
        %s136 = smul.addr %s135, 4
        %s137 = scalar_lea.vmem %s0, %s136
      $region24: #{block_forward.5} parent=19 // pred_fallthru
        _
      // Predicated region
      $region25: #{block_forward.5} parent=19 // pred_check
        %p138 = pneg %p55
      $region26: #{block_forward.5} parent=19 // pred_check_branch
        %140 = sbr.rel (%p138) target = $region28
      $region27: #{block_forward.5} parent=19 // pred_region
        %p141 = scmp.lt.s32.totalorder %s9, 1
        %s142 = scalar_select %p141, %s9, 1
        %s143 = smul.addr %s142, 8
        %s144 = smul.addr %s143, 4
        %s145 = scalar_lea.vmem %s1, %s144
      $region28: #{block_forward.5} parent=19 // pred_fallthru
        _
    $region20: #{block_forward.5} parent=5 // pred_fallthru
      _
    %p146 = scmp.le.s32.totalorder 1, %s9
    %p147 = scmp.lt.s32.totalorder %s9, 3
    %p148 = pnand %p146, %p147
    %p149 = pneg %p148
    // Predicated region
    $region29: #{block_forward.5} parent=5 // pred_check
      _
    $region30: #{block_forward.5} parent=5 // pred_check_branch
      %151 = sbr.rel (%p148) target = $region32
    $region31: #{block_forward.5} parent=5 // pred_region
      %s152 = ssub.s32 %s9, 1
      %p153 = scmp.lt.s32.totalorder %s14, 1
      %s154 = scalar_select %p153, %s14, 1
      %s155 = smul.addr %s154, 8
      %s156 = smul.addr %s155, 4
      %s157 = scalar_lea.vmem %s0, %s156
      %p158 = pneg %p35
      %p159 = pneg %p32
      %p160 = scmp.lt.s32.totalorder %s14, 1
      %s161 = scalar_select %p160, %s14, 1
      %s162 = smul.addr %s161, 8
      %s163 = smul.addr %s162, 4
      %s164 = scalar_lea.vmem %s1, %s163
      %p165 = pneg %p61
      %p166 = pneg %p58
      %p167 = pneg %p82
      %p168 = pneg %p79
      %p169 = pneg %p108
      %p170 = pneg %p105
      %p171 = scmp.lt.s32.totalorder %s14, 1
      %s172 = scalar_select %p171, %s14, 1
      %s173 = smul.addr %s172, 8
      %s174 = smul.addr %s173, 8
      %s175 = scalar_lea.vmem %s3, %s174
      %p176 = scmp.lt.s32.totalorder %s14, 1
      %s177 = scalar_select %p176, %s14, 1
      %s178 = smul.addr %s177, 8
      %s179 = smul.addr %s178, 4
      %s180 = scalar_lea.vmem %s0, %s179
      %p181 = scmp.lt.s32.totalorder %s14, 1
      %s182 = scalar_select %p181, %s14, 1
      %s183 = smul.addr %s182, 8
      %s184 = smul.addr %s183, 4
      %s185 = scalar_lea.vmem %s1, %s184
      %p186 = scmp.lt.s32.totalorder %s14, 1
      %s187 = scalar_select %p186, %s14, 1
      %s188 = smul.addr %s187, 8
      %s189 = smul.addr %s188, 8
      %s190 = scalar_lea.vmem %s3, %s189
      %v191 = vld [vmem:[%s2] sm:$0xf]
      %v192 = vld [vmem:[%s180] sm:$0xf]
      %v193 = vld [vmem:[%s180 + $0x4] sm:$0xf]
      %v194 = vld [vmem:[%s180 + $0x8] sm:$0xf]
      %v195 = vld [vmem:[%s180 + $0xc] sm:$0xf]
      %v196 = vld [vmem:[%s180 + $0x10] sm:$0xf]
      %v197 = vld [vmem:[%s180 + $0x14] sm:$0xf]
      %v198 = vld [vmem:[%s180 + $0x18] sm:$0xf]
      %v199 = vld [vmem:[%s180 + $0x1c] sm:$0xf]
      %v200 = vunpack.c.l.bf16 %v192
      %v201 = vunpack.c.l.bf16 %v193
      %v202 = vunpack.c.l.bf16 %v194
      %v203 = vunpack.c.l.bf16 %v195
      %v204 = vunpack.c.l.bf16 %v196
      %v205 = vunpack.c.l.bf16 %v197
      %v206 = vunpack.c.l.bf16 %v198
      %v207 = vunpack.c.l.bf16 %v199
      %v208 = vld [vmem:[%s185] sm:$0xf]
      %v209 = vld [vmem:[%s185 + $0x4] sm:$0xf]
      %v210 = vld [vmem:[%s185 + $0x8] sm:$0xf]
      %v211 = vld [vmem:[%s185 + $0xc] sm:$0xf]
      %v212 = vld [vmem:[%s185 + $0x10] sm:$0xf]
      %v213 = vld [vmem:[%s185 + $0x14] sm:$0xf]
      %v214 = vld [vmem:[%s185 + $0x18] sm:$0xf]
      %v215 = vld [vmem:[%s185 + $0x1c] sm:$0xf]
      %v216 = vunpack.c.l.bf16 %v208
      %v217 = vunpack.c.l.bf16 %v209
      %v218 = vunpack.c.l.bf16 %v210
      %v219 = vunpack.c.l.bf16 %v211
      %v220 = vunpack.c.l.bf16 %v212
      %v221 = vunpack.c.l.bf16 %v213
      %v222 = vunpack.c.l.bf16 %v214
      %v223 = vunpack.c.l.bf16 %v215
      %v224 = vlaneseq
      %v225 = vshrl.u32 %v224, 7
      %v226 = vsub.s32 0, %v225
      %v227 = vrot.slane %v191, %v226
      %v228 = vmul.f32 %v200, %v227
      %v229 = vmul.f32 %v201, %v227
      %v230 = vmul.f32 %v202, %v227
      %v231 = vmul.f32 %v203, %v227
      %v232 = vmul.f32 %v204, %v227
      %v233 = vmul.f32 %v205, %v227
      %v234 = vmul.f32 %v206, %v227
      %v235 = vmul.f32 %v207, %v227
      %v236 = vlaneseq
      %v237 = vshrl.u32 %v236, 7
      %v238 = vsub.s32 1, %v237
      %v239 = vrot.slane %v191, %v238
      %v240 = vadd.f32 %v228, %v239
      %v241 = vadd.f32 %v229, %v239
      %v242 = vadd.f32 %v230, %v239
      %v243 = vadd.f32 %v231, %v239
      %v244 = vadd.f32 %v232, %v239
      %v245 = vadd.f32 %v233, %v239
      %v246 = vadd.f32 %v234, %v239
      %v247 = vadd.f32 %v235, %v239
      %v248 = vlaneseq
      %v249 = vshrl.u32 %v248, 7
      %v250 = vsub.s32 2, %v249
      %v251 = vrot.slane %v191, %v250
      %v252 = vmul.f32 %v216, %v251
      %v253 = vmul.f32 %v217, %v251
      %v254 = vmul.f32 %v218, %v251
      %v255 = vmul.f32 %v219, %v251
      %v256 = vmul.f32 %v220, %v251
      %v257 = vmul.f32 %v221, %v251
      %v258 = vmul.f32 %v222, %v251
      %v259 = vmul.f32 %v223, %v251
      %v260 = vadd.f32 %v240, %v252
      %v261 = vadd.f32 %v241, %v253
      %v262 = vadd.f32 %v242, %v254
      %v263 = vadd.f32 %v243, %v255
      %v264 = vadd.f32 %v244, %v256
      %v265 = vadd.f32 %v245, %v257
      %v266 = vadd.f32 %v246, %v258
      %v267 = vadd.f32 %v247, %v259
      %v268 = vlaneseq
      %v269 = vshrl.u32 %v268, 7
      %v270 = vsub.s32 3, %v269
      %v271 = vrot.slane %v191, %v270
      %v272 = vadd.f32 %v260, %v271
      %v273 = vadd.f32 %v261, %v271
      %v274 = vadd.f32 %v262, %v271
      %v275 = vadd.f32 %v263, %v271
      %v276 = vadd.f32 %v264, %v271
      %v277 = vadd.f32 %v265, %v271
      %v278 = vadd.f32 %v266, %v271
      %v279 = vadd.f32 %v267, %v271
      %v280 = vmax.f32 %v272, 0.0
      %v281 = vmax.f32 %v273, 0.0
      %v282 = vmax.f32 %v274, 0.0
      %v283 = vmax.f32 %v275, 0.0
      %v284 = vmax.f32 %v276, 0.0
      %v285 = vmax.f32 %v277, 0.0
      %v286 = vmax.f32 %v278, 0.0
      %v287 = vmax.f32 %v279, 0.0
      %288 = vst [vmem:[%s190] sm:$0xff] %v280
      %289 = vst [vmem:[%s190 + $0x8] sm:$0xff] %v281
      %290 = vst [vmem:[%s190 + $0x10] sm:$0xff] %v282
      %291 = vst [vmem:[%s190 + $0x18] sm:$0xff] %v283
      %292 = vst [vmem:[%s190 + $0x20] sm:$0xff] %v284
      %293 = vst [vmem:[%s190 + $0x28] sm:$0xff] %v285
      %294 = vst [vmem:[%s190 + $0x30] sm:$0xff] %v286
      %295 = vst [vmem:[%s190 + $0x38] sm:$0xff] %v287
      %p296 = scmp.lt.s32.totalorder %s14, 1
      %s297 = scalar_select %p296, %s14, 1
      %s298 = smul.addr %s297, 8
      %s299 = smul.addr %s298, 8
      %s300 = scalar_lea.vmem %s3, %s299
      // Predicated region
      $region33: #{block_forward.5} parent=31 // pred_check
        %p301 = pneg %p105
      $region34: #{block_forward.5} parent=31 // pred_check_branch
        %303 = sbr.rel (%p301) target = $region36
      $region35: #{block_forward.5} parent=31 // pred_region
        _
      $region36: #{block_forward.5} parent=31 // pred_fallthru
        _
    $region32: #{block_forward.5} parent=5 // pred_fallthru
      _
    %p304 = scmp.le.s32.totalorder 2, %s9
    // Predicated region
    $region37: #{block_forward.5} parent=5 // pred_check
      %p305 = pneg %p304
    $region38: #{block_forward.5} parent=5 // pred_check_branch
      %307 = sbr.rel (%p305) target = $region40
    $region39: #{block_forward.5} parent=5 // pred_region
      %s308 = ssub.s32 %s9, 2
      // Predicated region
      $region41: #{block_forward.5} parent=39 // pred_check
        %p309 = pneg %p111
      $region42: #{block_forward.5} parent=39 // pred_check_branch
        %311 = sbr.rel (%p309) target = $region44
      $region43: #{block_forward.5} parent=39 // pred_region
        %p312 = scmp.lt.s32.totalorder %s15, 1
        %s313 = scalar_select %p312, %s15, 1
        %s314 = smul.addr %s313, 8
        %s315 = smul.addr %s314, 8
        %s316 = scalar_lea.vmem %s3, %s315
      $region44: #{block_forward.5} parent=39 // pred_fallthru
        _
    $region40: #{block_forward.5} parent=5 // pred_fallthru
      _
  $region6: #{block_forward.5} parent=0 // loop_footer
    %s13 = sadd.s32 1, %s9
  $region7: #{block_forward.5} parent=0 // loop_footer_branch
    %8 = sbr.rel target = $region3
  $region8: #{block_forward.5} parent=0 // loop_exit
    _

// kernel: block_forward.4
$region0: #{block_forward.4}
  #allocation0 [shape = 'u32[]', space=smem, size = 0x4, offset = 0x4, fixed_abs, tag = 'smem constant byte address 0x4 - core index']
  #allocation1 [shape = 'u32[144,128]{1,0:T(1,128)}', space=vmem, size = 0x12000, scoped, tag = 'internal scratch']
  #allocation2 [shape = 'bf16[10,10,128]{2,1,0:T(8,128)(2,1)}', space=vmem, size = 0xa000, scoped, tag = 'scratch operand']
  %s0 = inlined_call_operand.vmem [shape: bf16[2,8,8,128], index: 0, kind: input, shape index: {}]
  %s1 = inlined_call_operand.vmem [shape: f32[2,128], index: 1, kind: input, shape index: {}]
  %s2 = inlined_call_operand.vmem [shape: bf16[3,384,128], index: 2, kind: input, shape index: {}]
  %s3 = inlined_call_operand.vmem [shape: bf16[2,8,8,128], index: 3, kind: output, shape index: {0}]
  %s4 = inlined_call_operand.vmem [shape: f32[2,2,128], index: 4, kind: output, shape index: {1}]
  %5 = xla_tuple %s3, %s4
  %s6 = sld [smem:[#allocation0]]
  $region53: #{block_forward.4} parent=0
    _
  %s8 = ssub.s32 1, %s6
  %s9 = scalar_select 0, %s8, %s6
  loop: start=0, step=1, limit=4
  $region2: #{block_forward.4} parent=0 // loop_pre_header
    _
  $region3: #{block_forward.4} parent=0 // loop_header
    %s11 = sphi 0, %s15
    %p12 = scmp.ge.s32.totalorder %s11, 4
    %s21 = sphi 0, %s23
    %s24 = sphi 0, %s21
    %s25 = sphi 0, %s24
    %s41 = sphi 0, %s25
    %s45 = sphi 0, %s45
    %s47 = sphi 0, %s45
    %s48 = sphi 0, %s47
    %s62 = sphi 0, %s48
    %s66 = sphi 0, %s66
    %s68 = sphi 0, %s66
    %s69 = sphi 0, %s68
    %s83 = sphi 0, %s69
    %s89 = sphi 0, %s91
    %s92 = sphi 0, %s89
    %s93 = sphi 0, %s92
    %s109 = sphi 0, %s93
    %s115 = sphi 0, %s117
    %s118 = sphi 0, %s115
    %s119 = sphi 0, %s118
    %s135 = sphi 0, %s119
  $region4: #{block_forward.4} parent=0 // loop_header_branch
    %14 = sbr.rel (%p12) target = $region8
  $region5: #{block_forward.4} parent=0 // loop_body
    %s16 = ssub.s32 %s11, 1
    %s17 = ssub.s32 %s11, 2
    %s18 = sadd.s32 %s11, 1
    %s19 = ssub.s32 %s11, %s18
    %p20 = scmp.eq.s32.totalorder %s19, 0
    %s22 = sadd.s32 %s21, 1
    %s23 = scalar_select %p20, %s21, %s22
    %p26 = pneg %p20
    %p27 = scmp.eq.s32.totalorder %s11, 1
    %p28 = por %p26, %p27
    %p29 = scmp.ne.s32.totalorder %s21, %s24
    %p30 = scmp.eq.s32.totalorder %s11, 0
    %p31 = por %p29, %p30
    %p32 = scmp.ne.s32.totalorder %s21, %s24
    %p33 = scmp.eq.s32.totalorder %s16, 1
    %p34 = por %p32, %p33
    %p35 = scmp.ne.s32.totalorder %s24, %s25
    %p36 = scmp.eq.s32.totalorder %s16, 0
    %p37 = por %p35, %p36
    %p38 = scmp.ne.s32.totalorder %s24, %s25
    %p39 = scmp.eq.s32.totalorder %s17, 1
    %p40 = por %p38, %p39
    %p42 = scmp.ne.s32.totalorder %s25, %s41
    %p43 = scmp.eq.s32.totalorder %s17, 0
    %p44 = por %p42, %p43
    %s46 = sadd.s32 %s45, 1
    %p49 = scmp.eq.s32.totalorder %s11, 1
    %p50 = scmp.ne.s32.totalorder %s45, %s47
    %p51 = scmp.eq.s32.totalorder %s11, 0
    %p52 = por %p50, %p51
    %p53 = scmp.ne.s32.totalorder %s45, %s47
    %p54 = scmp.eq.s32.totalorder %s16, 1
    %p55 = por %p53, %p54
    %p56 = scmp.ne.s32.totalorder %s47, %s48
    %p57 = scmp.eq.s32.totalorder %s16, 0
    %p58 = por %p56, %p57
    %p59 = scmp.ne.s32.totalorder %s47, %s48
    %p60 = scmp.eq.s32.totalorder %s17, 1
    %p61 = por %p59, %p60
    %p63 = scmp.ne.s32.totalorder %s48, %s62
    %p64 = scmp.eq.s32.totalorder %s17, 0
    %p65 = por %p63, %p64
    %s67 = sadd.s32 %s66, 1
    %p70 = scmp.eq.s32.totalorder %s11, 1
    %p71 = scmp.ne.s32.totalorder %s66, %s68
    %p72 = scmp.eq.s32.totalorder %s11, 0
    %p73 = por %p71, %p72
    %p74 = scmp.ne.s32.totalorder %s66, %s68
    %p75 = scmp.eq.s32.totalorder %s16, 1
    %p76 = por %p74, %p75
    %p77 = scmp.ne.s32.totalorder %s68, %s69
    %p78 = scmp.eq.s32.totalorder %s16, 0
    %p79 = por %p77, %p78
    %p80 = scmp.ne.s32.totalorder %s68, %s69
    %p81 = scmp.eq.s32.totalorder %s17, 1
    %p82 = por %p80, %p81
    %p84 = scmp.ne.s32.totalorder %s69, %s83
    %p85 = scmp.eq.s32.totalorder %s17, 0
    %p86 = por %p84, %p85
    %s87 = ssub.s32 %s11, %s18
    %p88 = scmp.eq.s32.totalorder %s87, 0
    %s90 = sadd.s32 %s89, 1
    %s91 = scalar_select %p88, %s89, %s90
    %p94 = pneg %p88
    %p95 = scmp.eq.s32.totalorder %s11, 1
    %p96 = por %p94, %p95
    %p97 = scmp.ne.s32.totalorder %s89, %s92
    %p98 = scmp.eq.s32.totalorder %s11, 0
    %p99 = por %p97, %p98
    %p100 = scmp.ne.s32.totalorder %s89, %s92
    %p101 = scmp.eq.s32.totalorder %s16, 1
    %p102 = por %p100, %p101
    %p103 = scmp.ne.s32.totalorder %s92, %s93
    %p104 = scmp.eq.s32.totalorder %s16, 0
    %p105 = por %p103, %p104
    %p106 = scmp.ne.s32.totalorder %s92, %s93
    %p107 = scmp.eq.s32.totalorder %s17, 1
    %p108 = por %p106, %p107
    %p110 = scmp.ne.s32.totalorder %s93, %s109
    %p111 = scmp.eq.s32.totalorder %s17, 0
    %p112 = por %p110, %p111
    %s113 = ssub.s32 %s11, %s18
    %p114 = scmp.eq.s32.totalorder %s113, 0
    %s116 = sadd.s32 %s115, 1
    %s117 = scalar_select %p114, %s115, %s116
    %p120 = pneg %p114
    %p121 = scmp.eq.s32.totalorder %s11, 1
    %p122 = por %p120, %p121
    %p123 = scmp.ne.s32.totalorder %s115, %s118
    %p124 = scmp.eq.s32.totalorder %s11, 0
    %p125 = por %p123, %p124
    %p126 = scmp.ne.s32.totalorder %s115, %s118
    %p127 = scmp.eq.s32.totalorder %s16, 1
    %p128 = por %p126, %p127
    %p129 = scmp.ne.s32.totalorder %s118, %s119
    %p130 = scmp.eq.s32.totalorder %s16, 0
    %p131 = por %p129, %p130
    %p132 = scmp.ne.s32.totalorder %s118, %s119
    %p133 = scmp.eq.s32.totalorder %s17, 1
    %p134 = por %p132, %p133
    %p136 = scmp.ne.s32.totalorder %s119, %s135
    %p137 = scmp.eq.s32.totalorder %s17, 0
    %p138 = por %p136, %p137
    %p139 = scmp.le.s32.totalorder 1, %s11
    %p140 = scmp.lt.s32.totalorder %s11, 3
    %p141 = pnand %p139, %p140
    %p142 = pneg %p141
    // Predicated region
    $region9: #{block_forward.4} parent=5 // pred_check
      _
    $region10: #{block_forward.4} parent=5 // pred_check_branch
      %144 = sbr.rel (%p141) target = $region12
    $region11: #{block_forward.4} parent=5 // pred_region
      %s145 = ssub.s32 %s11, 1
      // Predicated region
      $region13: #{block_forward.4} parent=11 // pred_check
        %p146 = pneg %p58
      $region14: #{block_forward.4} parent=11 // pred_check_branch
        %148 = sbr.rel (%p146) target = $region16
      $region15: #{block_forward.4} parent=11 // pred_region
        _
      $region16: #{block_forward.4} parent=11 // pred_fallthru
        _
      // Predicated region
      $region17: #{block_forward.4} parent=11 // pred_check
        %p149 = pneg %p79
      $region18: #{block_forward.4} parent=11 // pred_check_branch
        %151 = sbr.rel (%p149) target = $region20
      $region19: #{block_forward.4} parent=11 // pred_region
        _
      $region20: #{block_forward.4} parent=11 // pred_fallthru
        _
    $region12: #{block_forward.4} parent=5 // pred_fallthru
      _
    %p152 = scmp.lt.s32.totalorder %s11, 2
    // Predicated region
    $region21: #{block_forward.4} parent=5 // pred_check
      %p153 = pneg %p152
    $region22: #{block_forward.4} parent=5 // pred_check_branch
      %155 = sbr.rel (%p153) target = $region24
    $region23: #{block_forward.4} parent=5 // pred_region
      // Predicated region
      $region25: #{block_forward.4} parent=23 // pred_check
        %p156 = pneg %p31
      $region26: #{block_forward.4} parent=23 // pred_check_branch
        %158 = sbr.rel (%p156) target = $region28
      $region27: #{block_forward.4} parent=23 // pred_region
        %p159 = scmp.lt.s32.totalorder %s11, 1
        %s160 = scalar_select %p159, %s11, 1
        %s161 = smul.addr %s160, 8
        %s162 = smul.addr %s161, 4
        %s163 = scalar_lea.vmem %s0, %s162
      $region28: #{block_forward.4} parent=23 // pred_fallthru
        _
    $region24: #{block_forward.4} parent=5 // pred_fallthru
      _
    %p164 = scmp.le.s32.totalorder 1, %s11
    %p165 = scmp.lt.s32.totalorder %s11, 3
    %p166 = pnand %p164, %p165
    %p167 = pneg %p166
    // Predicated region
    $region29: #{block_forward.4} parent=5 // pred_check
      _
    $region30: #{block_forward.4} parent=5 // pred_check_branch
      %169 = sbr.rel (%p166) target = $region32
    $region31: #{block_forward.4} parent=5 // pred_region
      %s170 = ssub.s32 %s11, 1
      %p171 = scmp.lt.s32.totalorder %s16, 1
      %s172 = scalar_select %p171, %s16, 1
      %s173 = smul.addr %s172, 8
      %s174 = smul.addr %s173, 4
      %s175 = scalar_lea.vmem %s0, %s174
      %p176 = pneg %p37
      %p177 = pneg %p34
      %p178 = pneg %p58
      %p179 = pneg %p55
      %p180 = pneg %p79
      %p181 = pneg %p76
      %p182 = pneg %p105
      %p183 = pneg %p102
      %p184 = scmp.lt.s32.totalorder %s16, 1
      %s185 = scalar_select %p184, %s16, 1
      %s186 = smul.addr %s185, 8
      %s187 = smul.addr %s186, 4
      %s188 = scalar_lea.vmem %s3, %s187
      %p189 = pneg %p131
      %p190 = pneg %p128
      %p191 = scmp.lt.s32.totalorder %s16, 1
      %s192 = scalar_select %p191, %s16, 1
      %s193 = smul.addr %s192, 2
      %s194 = scalar_lea.vmem %s4, %s193
      %p195 = scmp.lt.s32.totalorder %s16, 1
      %s196 = scalar_select %p195, %s16, 1
      %s197 = smul.addr %s196, 8
      %s198 = smul.addr %s197, 4
      %s199 = scalar_lea.vmem %s0, %s198
      %p200 = scmp.lt.s32.totalorder %s16, 1
      %s201 = scalar_select %p200, %s16, 1
      %s202 = smul.addr %s201, 8
      %s203 = smul.addr %s202, 4
      %s204 = scalar_lea.vmem %s3, %s203
      %p205 = scmp.lt.s32.totalorder %s16, 1
      %s206 = scalar_select %p205, %s16, 1
      %s207 = smul.addr %s206, 2
      %s208 = scalar_lea.vmem %s4, %s207
      %v210 = vld [vmem:[%s1] sm:$0x3]
      %v211 = vld [vmem:[%s199] sm:$0xf]
      %v212 = vld [vmem:[%s199 + $0x4] sm:$0xf]
      %v213 = vld [vmem:[%s199 + $0x8] sm:$0xf]
      %v214 = vld [vmem:[%s199 + $0xc] sm:$0xf]
      %v215 = vld [vmem:[%s199 + $0x10] sm:$0xf]
      %v216 = vld [vmem:[%s199 + $0x14] sm:$0xf]
      %v217 = vld [vmem:[%s199 + $0x18] sm:$0xf]
      %v218 = vld [vmem:[%s199 + $0x1c] sm:$0xf]
      %v219 = vunpack.c.l.bf16 %v211
      %v220 = vunpack.c.l.bf16 %v212
      %v221 = vunpack.c.l.bf16 %v213
      %v222 = vunpack.c.l.bf16 %v214
      %v223 = vunpack.c.l.bf16 %v215
      %v224 = vunpack.c.l.bf16 %v216
      %v225 = vunpack.c.l.bf16 %v217
      %v226 = vunpack.c.l.bf16 %v218
      %v227 = vlaneseq
      %v228 = vshrl.u32 %v227, 7
      %v229 = vsub.s32 0, %v228
      %v230 = vrot.slane %v210, %v229
      %v231 = vmul.f32 %v219, %v230
      %v232 = vmul.f32 %v220, %v230
      %v233 = vmul.f32 %v221, %v230
      %v234 = vmul.f32 %v222, %v230
      %v235 = vmul.f32 %v223, %v230
      %v236 = vmul.f32 %v224, %v230
      %v237 = vmul.f32 %v225, %v230
      %v238 = vmul.f32 %v226, %v230
      %v239 = vlaneseq
      %v240 = vshrl.u32 %v239, 7
      %v241 = vsub.s32 1, %v240
      %v242 = vrot.slane %v210, %v241
      %v243 = vadd.f32 %v231, %v242
      %v244 = vadd.f32 %v232, %v242
      %v245 = vadd.f32 %v233, %v242
      %v246 = vadd.f32 %v234, %v242
      %v247 = vadd.f32 %v235, %v242
      %v248 = vadd.f32 %v236, %v242
      %v249 = vadd.f32 %v237, %v242
      %v250 = vadd.f32 %v238, %v242
      %v251 = vmax.f32 %v243, 0.0
      %v252 = vmax.f32 %v244, 0.0
      %v253 = vmax.f32 %v245, 0.0
      %v254 = vmax.f32 %v246, 0.0
      %v255 = vmax.f32 %v247, 0.0
      %v256 = vmax.f32 %v248, 0.0
      %v257 = vmax.f32 %v249, 0.0
      %v258 = vmax.f32 %v250, 0.0
      %259 = vst [vmem:[#allocation2] sm:$0xf] 0
      %260 = vst [vmem:[#allocation2 + $0x4] sm:$0x1] 0
      %s261 = scalar_lea.vmem [#allocation2], 72
      %262 = vst [vmem:[%s261] sm:$0xf] 0
      %263 = vst [vmem:[%s261 + $0x4] sm:$0x1] 0
      %s264 = scalar_lea.vmem [#allocation2], 8
      %vm265 = vcmask 1040384
      %vm266 = vsmask.f32 256
      %vm267 = vmand %vm265, %vm266
      %v268 = vld [vmem:[%s264] sm:$0x1]
      %v269 = vsel %vm267, 0, %v268
      %270 = vst [vmem:[%s264] sm:$0x1] %v269
      %v271 = vld [vmem:[%s264 + $0x8] sm:$0x1]
      %v272 = vsel %vm267, 0, %v271
      %273 = vst [vmem:[%s264 + $0x8] sm:$0x1] %v272
      %v274 = vld [vmem:[%s264 + $0x10] sm:$0x1]
      %v275 = vsel %vm267, 0, %v274
      %276 = vst [vmem:[%s264 + $0x10] sm:$0x1] %v275
      %v277 = vld [vmem:[%s264 + $0x18] sm:$0x1]
      %v278 = vsel %vm267, 0, %v277
      %279 = vst [vmem:[%s264 + $0x18] sm:$0x1] %v278
      %v280 = vld [vmem:[%s264 + $0x20] sm:$0x1]
      %v281 = vsel %vm267, 0, %v280
      %282 = vst [vmem:[%s264 + $0x20] sm:$0x1] %v281
      %v283 = vld [vmem:[%s264 + $0x28] sm:$0x1]
      %v284 = vsel %vm267, 0, %v283
      %285 = vst [vmem:[%s264 + $0x28] sm:$0x1] %v284
      %v286 = vld [vmem:[%s264 + $0x30] sm:$0x1]
      %v287 = vsel %vm267, 0, %v286
      %288 = vst [vmem:[%s264 + $0x30] sm:$0x1] %v287
      %v289 = vld [vmem:[%s264 + $0x38] sm:$0x1]
      %v290 = vsel %vm267, 0, %v289
      %291 = vst [vmem:[%s264 + $0x38] sm:$0x1] %v290
      %vm292 = vsmask.f32 7938
      %vm293 = vmand %vm265, %vm292
      %v294 = vld [vmem:[%s264 + $0x4] sm:$0x1]
      %v295 = vsel %vm293, 0, %v294
      %296 = vst [vmem:[%s264 + $0x4] sm:$0x1] %v295
      %v297 = vld [vmem:[%s264 + $0xc] sm:$0x1]
      %v298 = vsel %vm293, 0, %v297
      %299 = vst [vmem:[%s264 + $0xc] sm:$0x1] %v298
      %v300 = vld [vmem:[%s264 + $0x14] sm:$0x1]
      %v301 = vsel %vm293, 0, %v300
      %302 = vst [vmem:[%s264 + $0x14] sm:$0x1] %v301
      %v303 = vld [vmem:[%s264 + $0x1c] sm:$0x1]
      %v304 = vsel %vm293, 0, %v303
      %305 = vst [vmem:[%s264 + $0x1c] sm:$0x1] %v304
      %v306 = vld [vmem:[%s264 + $0x24] sm:$0x1]
      %v307 = vsel %vm293, 0, %v306
      %308 = vst [vmem:[%s264 + $0x24] sm:$0x1] %v307
      %v309 = vld [vmem:[%s264 + $0x2c] sm:$0x1]
      %v310 = vsel %vm293, 0, %v309
      %311 = vst [vmem:[%s264 + $0x2c] sm:$0x1] %v310
      %v312 = vld [vmem:[%s264 + $0x34] sm:$0x1]
      %v313 = vsel %vm293, 0, %v312
      %314 = vst [vmem:[%s264 + $0x34] sm:$0x1] %v313
      %v315 = vld [vmem:[%s264 + $0x3c] sm:$0x1]
      %v316 = vsel %vm293, 0, %v315
      %317 = vst [vmem:[%s264 + $0x3c] sm:$0x1] %v316
      %v318 = vpack.c.bf16 %v251, %v251
      %v319 = vpack.c.bf16 %v252, %v252
      %v320 = vpack.c.bf16 %v253, %v253
      %v321 = vpack.c.bf16 %v254, %v254
      %v322 = vpack.c.bf16 %v255, %v255
      %v323 = vpack.c.bf16 %v256, %v256
      %v324 = vpack.c.bf16 %v257, %v257
      %v325 = vpack.c.bf16 %v258, %v258
      %v334 = vunpack.c.l.b16 %v318
      %v335 = vunpack.c.l.b16 %v319
      %v336 = vunpack.c.l.b16 %v320
      %v337 = vunpack.c.l.b16 %v321
      %v338 = vunpack.c.l.b16 %v322
      %v339 = vunpack.c.l.b16 %v323
      %v340 = vunpack.c.l.b16 %v324
      %v341 = vunpack.c.l.b16 %v325
      %v342 = vpack.c.b16 %v334, %v334
      %v343 = vpack.c.b16 %v335, %v335
      %v344 = vpack.c.b16 %v336, %v336
      %v345 = vpack.c.b16 %v337, %v337
      %v346 = vpack.c.b16 %v338, %v338
      %v347 = vpack.c.b16 %v339, %v339
      %v348 = vpack.c.b16 %v340, %v340
      %v349 = vpack.c.b16 %v341, %v341
      %v351 = vshrl.u32 %v342, 16
      %v353 = vrot.slane %v351, 7
      %v354 = vshll.u32 %v342, 16
      %v356 = vor.u32 %v353, %v354
      %v357 = vrot.slane %v353, 4
      %v359 = vshrl.u32 %v343, 16
      %v361 = vrot.slane %v359, 7
      %v362 = vshll.u32 %v343, 16
      %v364 = vor.u32 %v361, %v362
      %v365 = vrot.slane %v361, 4
      %v367 = vshrl.u32 %v344, 16
      %v369 = vrot.slane %v367, 7
      %v370 = vshll.u32 %v344, 16
      %v372 = vor.u32 %v369, %v370
      %v373 = vrot.slane %v369, 4
      %v375 = vshrl.u32 %v345, 16
      %v377 = vrot.slane %v375, 7
      %v378 = vshll.u32 %v345, 16
      %v380 = vor.u32 %v377, %v378
      %v381 = vrot.slane %v377, 4
      %v383 = vshrl.u32 %v346, 16
      %v385 = vrot.slane %v383, 7
      %v386 = vshll.u32 %v346, 16
      %v388 = vor.u32 %v385, %v386
      %v389 = vrot.slane %v385, 4
      %v391 = vshrl.u32 %v347, 16
      %v393 = vrot.slane %v391, 7
      %v394 = vshll.u32 %v347, 16
      %v396 = vor.u32 %v393, %v394
      %v397 = vrot.slane %v393, 4
      %v399 = vshrl.u32 %v348, 16
      %v401 = vrot.slane %v399, 7
      %v402 = vshll.u32 %v348, 16
      %v404 = vor.u32 %v401, %v402
      %v405 = vrot.slane %v401, 4
      %v407 = vshrl.u32 %v349, 16
      %v409 = vrot.slane %v407, 7
      %v410 = vshll.u32 %v349, 16
      %v412 = vor.u32 %v409, %v410
      %v413 = vrot.slane %v409, 4
      %vm430 = vcmask 1043456
      %vm431 = vmand %vm430, %vm292
      %v432 = vld [vmem:[%s264] sm:$0xf]
      %v433 = vsel %vm431, %v356, %v432
      %434 = vst [vmem:[%s264] sm:$0xf] %v433
      %v435 = vld [vmem:[%s264 + $0x4] sm:$0x1]
      %v436 = vsel %vm267, %v357, %v435
      %437 = vst [vmem:[%s264 + $0x4] sm:$0x1] %v436
      %v438 = vld [vmem:[%s264 + $0x8] sm:$0xf]
      %v439 = vsel %vm431, %v364, %v438
      %440 = vst [vmem:[%s264 + $0x8] sm:$0xf] %v439
      %v441 = vld [vmem:[%s264 + $0xc] sm:$0x1]
      %v442 = vsel %vm267, %v365, %v441
      %443 = vst [vmem:[%s264 + $0xc] sm:$0x1] %v442
      %v444 = vld [vmem:[%s264 + $0x10] sm:$0xf]
      %v445 = vsel %vm431, %v372, %v444
      %446 = vst [vmem:[%s264 + $0x10] sm:$0xf] %v445
      %v447 = vld [vmem:[%s264 + $0x14] sm:$0x1]
      %v448 = vsel %vm267, %v373, %v447
      %449 = vst [vmem:[%s264 + $0x14] sm:$0x1] %v448
      %v450 = vld [vmem:[%s264 + $0x18] sm:$0xf]
      %v451 = vsel %vm431, %v380, %v450
      %452 = vst [vmem:[%s264 + $0x18] sm:$0xf] %v451
      %v453 = vld [vmem:[%s264 + $0x1c] sm:$0x1]
      %v454 = vsel %vm267, %v381, %v453
      %455 = vst [vmem:[%s264 + $0x1c] sm:$0x1] %v454
      %v456 = vld [vmem:[%s264 + $0x20] sm:$0xf]
      %v457 = vsel %vm431, %v388, %v456
      %458 = vst [vmem:[%s264 + $0x20] sm:$0xf] %v457
      %v459 = vld [vmem:[%s264 + $0x24] sm:$0x1]
      %v460 = vsel %vm267, %v389, %v459
      %461 = vst [vmem:[%s264 + $0x24] sm:$0x1] %v460
      %v462 = vld [vmem:[%s264 + $0x28] sm:$0xf]
      %v463 = vsel %vm431, %v396, %v462
      %464 = vst [vmem:[%s264 + $0x28] sm:$0xf] %v463
      %v465 = vld [vmem:[%s264 + $0x2c] sm:$0x1]
      %v466 = vsel %vm267, %v397, %v465
      %467 = vst [vmem:[%s264 + $0x2c] sm:$0x1] %v466
      %v468 = vld [vmem:[%s264 + $0x30] sm:$0xf]
      %v469 = vsel %vm431, %v404, %v468
      %470 = vst [vmem:[%s264 + $0x30] sm:$0xf] %v469
      %v471 = vld [vmem:[%s264 + $0x34] sm:$0x1]
      %v472 = vsel %vm267, %v405, %v471
      %473 = vst [vmem:[%s264 + $0x34] sm:$0x1] %v472
      %v474 = vld [vmem:[%s264 + $0x38] sm:$0xf]
      %v475 = vsel %vm431, %v412, %v474
      %476 = vst [vmem:[%s264 + $0x38] sm:$0xf] %v475
      %v477 = vld [vmem:[%s264 + $0x3c] sm:$0x1]
      %v478 = vsel %vm267, %v413, %v477
      %479 = vst [vmem:[%s264 + $0x3c] sm:$0x1] %v478
      %v480 = vld [vmem:[#allocation2] sm:$0xf]
      %v481 = vld [vmem:[#allocation2 + $0x4] sm:$0x1]
      %v482 = vld [vmem:[#allocation2 + $0x8] sm:$0xf]
      %v483 = vld [vmem:[#allocation2 + $0xc] sm:$0x1]
      %v484 = vld [vmem:[#allocation2 + $0x10] sm:$0xf]
      %v485 = vld [vmem:[#allocation2 + $0x14] sm:$0x1]
      %v486 = vld [vmem:[#allocation2 + $0x18] sm:$0xf]
      %v487 = vld [vmem:[#allocation2 + $0x1c] sm:$0x1]
      %v488 = vld [vmem:[#allocation2 + $0x20] sm:$0xf]
      %v489 = vld [vmem:[#allocation2 + $0x24] sm:$0x1]
      %v490 = vld [vmem:[#allocation2 + $0x28] sm:$0xf]
      %v491 = vld [vmem:[#allocation2 + $0x2c] sm:$0x1]
      %v492 = vld [vmem:[#allocation2 + $0x30] sm:$0xf]
      %v493 = vld [vmem:[#allocation2 + $0x34] sm:$0x1]
      %v494 = vld [vmem:[#allocation2 + $0x38] sm:$0xf]
      %v495 = vld [vmem:[#allocation2 + $0x3c] sm:$0x1]
      %v496 = vld [vmem:[#allocation2 + $0x40] sm:$0xf]
      %v497 = vld [vmem:[#allocation2 + $0x44] sm:$0x1]
      %v498 = vld [vmem:[#allocation2 + $0x48] sm:$0xf]
      %v499 = vld [vmem:[#allocation2 + $0x4c] sm:$0x1]
      %vm500 = vsmask.f32 3328
      %vm501 = vsmask.f32 7440
      %vm502 = vmor %vm500, %vm501
      %v504 = vshrl.u32 %v480, 16
      %v506 = vrot.slane %v504, 4
      %v507 = vshll.u32 %v480, 16
      %v509 = vrot.slane %v507, 5
      %v510 = vor.u32 %v506, %v509
      %v511 = vrot.slane %v510, 4
      %v513 = vshll.u32 %v481, 16
      %v515 = vrot.slane %v513, 5
      %v516 = vsel %vm502, %v511, %v515
      %v518 = vshrl.u32 %v482, 16
      %v520 = vrot.slane %v518, 4
      %v521 = vshll.u32 %v482, 16
      %v523 = vrot.slane %v521, 5
      %v524 = vor.u32 %v520, %v523
      %v525 = vrot.slane %v524, 4
      %v527 = vshll.u32 %v483, 16
      %v529 = vrot.slane %v527, 5
      %v530 = vsel %vm502, %v525, %v529
      %v532 = vshrl.u32 %v484, 16
      %v534 = vrot.slane %v532, 4
      %v535 = vshll.u32 %v484, 16
      %v537 = vrot.slane %v535, 5
      %v538 = vor.u32 %v534, %v537
      %v539 = vrot.slane %v538, 4
      %v541 = vshll.u32 %v485, 16
      %v543 = vrot.slane %v541, 5
      %v544 = vsel %vm502, %v539, %v543
      %v546 = vshrl.u32 %v486, 16
      %v548 = vrot.slane %v546, 4
      %v549 = vshll.u32 %v486, 16
      %v551 = vrot.slane %v549, 5
      %v552 = vor.u32 %v548, %v551
      %v553 = vrot.slane %v552, 4
      %v555 = vshll.u32 %v487, 16
      %v557 = vrot.slane %v555, 5
      %v558 = vsel %vm502, %v553, %v557
      %v560 = vshrl.u32 %v488, 16
      %v562 = vrot.slane %v560, 4
      %v563 = vshll.u32 %v488, 16
      %v565 = vrot.slane %v563, 5
      %v566 = vor.u32 %v562, %v565
      %v567 = vrot.slane %v566, 4
      %v569 = vshll.u32 %v489, 16
      %v571 = vrot.slane %v569, 5
      %v572 = vsel %vm502, %v567, %v571
      %v574 = vshrl.u32 %v490, 16
      %v576 = vrot.slane %v574, 4
      %v577 = vshll.u32 %v490, 16
      %v579 = vrot.slane %v577, 5
      %v580 = vor.u32 %v576, %v579
      %v581 = vrot.slane %v580, 4
      %v583 = vshll.u32 %v491, 16
      %v585 = vrot.slane %v583, 5
      %v586 = vsel %vm502, %v581, %v585
      %v588 = vshrl.u32 %v492, 16
      %v590 = vrot.slane %v588, 4
      %v591 = vshll.u32 %v492, 16
      %v593 = vrot.slane %v591, 5
      %v594 = vor.u32 %v590, %v593
      %v595 = vrot.slane %v594, 4
      %v597 = vshll.u32 %v493, 16
      %v599 = vrot.slane %v597, 5
      %v600 = vsel %vm502, %v595, %v599
      %v602 = vshrl.u32 %v494, 16
      %v604 = vrot.slane %v602, 4
      %v605 = vshll.u32 %v494, 16
      %v607 = vrot.slane %v605, 5
      %v608 = vor.u32 %v604, %v607
      %v609 = vrot.slane %v608, 4
      %v611 = vshll.u32 %v495, 16
      %v613 = vrot.slane %v611, 5
      %v614 = vsel %vm502, %v609, %v613
      %vm631 = vcmask 1042432
      %vm632 = vcmask 1046532
      %vm633 = vmor %vm631, %vm632
      %v634 = vrot.slane %v480, 5
      %v635 = vrot.slane %v634, 4
      %v636 = vrot.slane %v481, 5
      %v637 = vsel %vm633, %v635, %v636
      %v638 = vrot.slane %v482, 5
      %v639 = vrot.slane %v638, 4
      %v640 = vrot.slane %v483, 5
      %v641 = vsel %vm633, %v639, %v640
      %v642 = vrot.slane %v484, 5
      %v643 = vrot.slane %v642, 4
      %v644 = vrot.slane %v485, 5
      %v645 = vsel %vm633, %v643, %v644
      %v646 = vrot.slane %v486, 5
      %v647 = vrot.slane %v646, 4
      %v648 = vrot.slane %v487, 5
      %v649 = vsel %vm633, %v647, %v648
      %v650 = vrot.slane %v488, 5
      %v651 = vrot.slane %v650, 4
      %v652 = vrot.slane %v489, 5
      %v653 = vsel %vm633, %v651, %v652
      %v654 = vrot.slane %v490, 5
      %v655 = vrot.slane %v654, 4
      %v656 = vrot.slane %v491, 5
      %v657 = vsel %vm633, %v655, %v656
      %v658 = vrot.slane %v492, 5
      %v659 = vrot.slane %v658, 4
      %v660 = vrot.slane %v493, 5
      %v661 = vsel %vm633, %v659, %v660
      %v662 = vrot.slane %v494, 5
      %v663 = vrot.slane %v662, 4
      %v664 = vrot.slane %v495, 5
      %v665 = vsel %vm633, %v663, %v664
      %v666 = vunpack.c.l.b16 %v480
      %v667 = vunpack.c.l.b16 %v482
      %v668 = vunpack.c.l.b16 %v484
      %v669 = vunpack.c.l.b16 %v486
      %v670 = vunpack.c.l.b16 %v488
      %v671 = vunpack.c.l.b16 %v490
      %v672 = vunpack.c.l.b16 %v492
      %v673 = vunpack.c.l.b16 %v494
      %v674 = vpack.c.b16 %v667, %v666
      %v675 = vpack.c.b16 %v669, %v668
      %v676 = vpack.c.b16 %v671, %v670
      %v677 = vpack.c.b16 %v673, %v672
      %v682 = vunpack.c.l.b16 %v516
      %v683 = vunpack.c.l.b16 %v530
      %v684 = vunpack.c.l.b16 %v544
      %v685 = vunpack.c.l.b16 %v558
      %v686 = vunpack.c.l.b16 %v572
      %v687 = vunpack.c.l.b16 %v586
      %v688 = vunpack.c.l.b16 %v600
      %v689 = vunpack.c.l.b16 %v614
      %v690 = vpack.c.b16 %v683, %v682
      %v691 = vpack.c.b16 %v685, %v684
      %v692 = vpack.c.b16 %v687, %v686
      %v693 = vpack.c.b16 %v689, %v688
      %v698 = vunpack.c.l.b16 %v637
      %v699 = vunpack.c.l.b16 %v641
      %v700 = vunpack.c.l.b16 %v645
      %v701 = vunpack.c.l.b16 %v649
      %v702 = vunpack.c.l.b16 %v653
      %v703 = vunpack.c.l.b16 %v657
      %v704 = vunpack.c.l.b16 %v661
      %v705 = vunpack.c.l.b16 %v665
      %v706 = vpack.c.b16 %v699, %v698
      %v707 = vpack.c.b16 %v701, %v700
      %v708 = vpack.c.b16 %v703, %v702
      %v709 = vpack.c.b16 %v705, %v704
      %v714 = vld [vmem:[%s2] sm:$0xf]
      %v715 = vld [vmem:[%s2 + $0x4] sm:$0xf]
      %v716 = vld [vmem:[%s2 + $0x8] sm:$0xf]
      %v717 = vld [vmem:[%s2 + $0xc] sm:$0xf]
      %v718 = vld [vmem:[%s2 + $0x10] sm:$0xf]
      %v719 = vld [vmem:[%s2 + $0x14] sm:$0xf]
      %v720 = vld [vmem:[%s2 + $0x18] sm:$0xf]
      %v721 = vld [vmem:[%s2 + $0x1c] sm:$0xf]
      %v722 = vld [vmem:[%s2 + $0x20] sm:$0xf]
      %v723 = vld [vmem:[%s2 + $0x24] sm:$0xf]
      %v724 = vld [vmem:[%s2 + $0x28] sm:$0xf]
      %v725 = vld [vmem:[%s2 + $0x2c] sm:$0xf]
      %v726 = vld [vmem:[%s2 + $0x30] sm:$0xf]
      %v727 = vld [vmem:[%s2 + $0x34] sm:$0xf]
      %v728 = vld [vmem:[%s2 + $0x38] sm:$0xf]
      %v729 = vld [vmem:[%s2 + $0x3c] sm:$0xf]
      %v730 = vld [vmem:[%s2 + $0x40] sm:$0xf]
      %v731 = vld [vmem:[%s2 + $0x44] sm:$0xf]
      %v732 = vld [vmem:[%s2 + $0x48] sm:$0xf]
      %v733 = vld [vmem:[%s2 + $0x4c] sm:$0xf]
      %v734 = vld [vmem:[%s2 + $0x50] sm:$0xf]
      %v735 = vld [vmem:[%s2 + $0x54] sm:$0xf]
      %v736 = vld [vmem:[%s2 + $0x58] sm:$0xf]
      %v737 = vld [vmem:[%s2 + $0x5c] sm:$0xf]
      %v738 = vld [vmem:[%s2 + $0x60] sm:$0xf]
      %v739 = vld [vmem:[%s2 + $0x64] sm:$0xf]
      %v740 = vld [vmem:[%s2 + $0x68] sm:$0xf]
      %v741 = vld [vmem:[%s2 + $0x6c] sm:$0xf]
      %v742 = vld [vmem:[%s2 + $0x70] sm:$0xf]
      %v743 = vld [vmem:[%s2 + $0x74] sm:$0xf]
      %v744 = vld [vmem:[%s2 + $0x78] sm:$0xf]
      %v745 = vld [vmem:[%s2 + $0x7c] sm:$0xf]
      %v746 = vld [vmem:[%s2 + $0x80] sm:$0xf]
      %v747 = vld [vmem:[%s2 + $0x84] sm:$0xf]
      %v748 = vld [vmem:[%s2 + $0x88] sm:$0xf]
      %v749 = vld [vmem:[%s2 + $0x8c] sm:$0xf]
      %v750 = vld [vmem:[%s2 + $0x90] sm:$0xf]
      %v751 = vld [vmem:[%s2 + $0x94] sm:$0xf]
      %v752 = vld [vmem:[%s2 + $0x98] sm:$0xf]
      %v753 = vld [vmem:[%s2 + $0x9c] sm:$0xf]
      %v754 = vld [vmem:[%s2 + $0xa0] sm:$0xf]
      %v755 = vld [vmem:[%s2 + $0xa4] sm:$0xf]
      %v756 = vld [vmem:[%s2 + $0xa8] sm:$0xf]
      %v757 = vld [vmem:[%s2 + $0xac] sm:$0xf]
      %v758 = vld [vmem:[%s2 + $0xb0] sm:$0xf]
      %v759 = vld [vmem:[%s2 + $0xb4] sm:$0xf]
      %v760 = vld [vmem:[%s2 + $0xb8] sm:$0xf]
      %v761 = vld [vmem:[%s2 + $0xbc] sm:$0xf]
      %v763 = vshrl.u32 %v496, 16
      %v765 = vrot.slane %v763, 4
      %v766 = vshll.u32 %v496, 16
      %v768 = vrot.slane %v766, 5
      %v769 = vor.u32 %v765, %v768
      %v770 = vrot.slane %v769, 4
      %v772 = vshll.u32 %v497, 16
      %v774 = vrot.slane %v772, 5
      %v775 = vsel %vm502, %v770, %v774
      %v778 = vrot.slane %v496, 5
      %v779 = vrot.slane %v778, 4
      %v780 = vrot.slane %v497, 5
      %v781 = vsel %vm633, %v779, %v780
      %v782 = vunpack.c.l.b16 %v496
      %v783 = vpack.c.b16 %v668, %v667
      %v784 = vpack.c.b16 %v670, %v669
      %v785 = vpack.c.b16 %v672, %v671
      %v786 = vpack.c.b16 %v782, %v673
      %v791 = vunpack.c.l.b16 %v775
      %v792 = vpack.c.b16 %v684, %v683
      %v793 = vpack.c.b16 %v686, %v685
      %v794 = vpack.c.b16 %v688, %v687
      %v795 = vpack.c.b16 %v791, %v689
      %v800 = vunpack.c.l.b16 %v781
      %v801 = vpack.c.b16 %v700, %v699
      %v802 = vpack.c.b16 %v702, %v701
      %v803 = vpack.c.b16 %v704, %v703
      %v804 = vpack.c.b16 %v800, %v705
      %s809 = scalar_lea.vmem %s2, 192
      %v810 = vld [vmem:[%s809] sm:$0xf]
      %v811 = vld [vmem:[%s809 + $0x4] sm:$0xf]
      %v812 = vld [vmem:[%s809 + $0x8] sm:$0xf]
      %v813 = vld [vmem:[%s809 + $0xc] sm:$0xf]
      %v814 = vld [vmem:[%s809 + $0x10] sm:$0xf]
      %v815 = vld [vmem:[%s809 + $0x14] sm:$0xf]
      %v816 = vld [vmem:[%s809 + $0x18] sm:$0xf]
      %v817 = vld [vmem:[%s809 + $0x1c] sm:$0xf]
      %v818 = vld [vmem:[%s809 + $0x20] sm:$0xf]
      %v819 = vld [vmem:[%s809 + $0x24] sm:$0xf]
      %v820 = vld [vmem:[%s809 + $0x28] sm:$0xf]
      %v821 = vld [vmem:[%s809 + $0x2c] sm:$0xf]
      %v822 = vld [vmem:[%s809 + $0x30] sm:$0xf]
      %v823 = vld [vmem:[%s809 + $0x34] sm:$0xf]
      %v824 = vld [vmem:[%s809 + $0x38] sm:$0xf]
      %v825 = vld [vmem:[%s809 + $0x3c] sm:$0xf]
      %v826 = vld [vmem:[%s809 + $0x40] sm:$0xf]
      %v827 = vld [vmem:[%s809 + $0x44] sm:$0xf]
      %v828 = vld [vmem:[%s809 + $0x48] sm:$0xf]
      %v829 = vld [vmem:[%s809 + $0x4c] sm:$0xf]
      %v830 = vld [vmem:[%s809 + $0x50] sm:$0xf]
      %v831 = vld [vmem:[%s809 + $0x54] sm:$0xf]
      %v832 = vld [vmem:[%s809 + $0x58] sm:$0xf]
      %v833 = vld [vmem:[%s809 + $0x5c] sm:$0xf]
      %v834 = vld [vmem:[%s809 + $0x60] sm:$0xf]
      %v835 = vld [vmem:[%s809 + $0x64] sm:$0xf]
      %v836 = vld [vmem:[%s809 + $0x68] sm:$0xf]
      %v837 = vld [vmem:[%s809 + $0x6c] sm:$0xf]
      %v838 = vld [vmem:[%s809 + $0x70] sm:$0xf]
      %v839 = vld [vmem:[%s809 + $0x74] sm:$0xf]
      %v840 = vld [vmem:[%s809 + $0x78] sm:$0xf]
      %v841 = vld [vmem:[%s809 + $0x7c] sm:$0xf]
      %v842 = vld [vmem:[%s809 + $0x80] sm:$0xf]
      %v843 = vld [vmem:[%s809 + $0x84] sm:$0xf]
      %v844 = vld [vmem:[%s809 + $0x88] sm:$0xf]
      %v845 = vld [vmem:[%s809 + $0x8c] sm:$0xf]
      %v846 = vld [vmem:[%s809 + $0x90] sm:$0xf]
      %v847 = vld [vmem:[%s809 + $0x94] sm:$0xf]
      %v848 = vld [vmem:[%s809 + $0x98] sm:$0xf]
      %v849 = vld [vmem:[%s809 + $0x9c] sm:$0xf]
      %v850 = vld [vmem:[%s809 + $0xa0] sm:$0xf]
      %v851 = vld [vmem:[%s809 + $0xa4] sm:$0xf]
      %v852 = vld [vmem:[%s809 + $0xa8] sm:$0xf]
      %v853 = vld [vmem:[%s809 + $0xac] sm:$0xf]
      %v854 = vld [vmem:[%s809 + $0xb0] sm:$0xf]
      %v855 = vld [vmem:[%s809 + $0xb4] sm:$0xf]
      %v856 = vld [vmem:[%s809 + $0xb8] sm:$0xf]
      %v857 = vld [vmem:[%s809 + $0xbc] sm:$0xf]
      %v906 = vunpack.c.l.b16 %v810
      %v907 = vunpack.c.l.b16 %v811
      %v908 = vunpack.c.l.b16 %v812
      %v909 = vunpack.c.l.b16 %v813
      %v910 = vunpack.c.l.b16 %v814
      %v911 = vunpack.c.l.b16 %v815
      %v912 = vunpack.c.l.b16 %v816
      %v913 = vunpack.c.l.b16 %v817
      %v914 = vunpack.c.l.b16 %v818
      %v915 = vunpack.c.l.b16 %v819
      %v916 = vunpack.c.l.b16 %v820
      %v917 = vunpack.c.l.b16 %v821
      %v918 = vunpack.c.l.b16 %v822
      %v919 = vunpack.c.l.b16 %v823
      %v920 = vunpack.c.l.b16 %v824
      %v921 = vunpack.c.l.b16 %v825
      %v922 = vunpack.c.l.b16 %v826
      %v923 = vunpack.c.l.b16 %v827
      %v924 = vunpack.c.l.b16 %v828
      %v925 = vunpack.c.l.b16 %v829
      %v926 = vunpack.c.l.b16 %v830
      %v927 = vunpack.c.l.b16 %v831
      %v928 = vunpack.c.l.b16 %v832
      %v929 = vunpack.c.l.b16 %v833
      %v930 = vunpack.c.l.b16 %v834
      %v931 = vunpack.c.l.b16 %v835
      %v932 = vunpack.c.l.b16 %v836
      %v933 = vunpack.c.l.b16 %v837
      %v934 = vunpack.c.l.b16 %v838
      %v935 = vunpack.c.l.b16 %v839
      %v936 = vunpack.c.l.b16 %v840
      %v937 = vunpack.c.l.b16 %v841
      %v938 = vunpack.c.l.b16 %v842
      %v939 = vunpack.c.l.b16 %v843
      %v940 = vunpack.c.l.b16 %v844
      %v941 = vunpack.c.l.b16 %v845
      %v942 = vunpack.c.l.b16 %v846
      %v943 = vunpack.c.l.b16 %v847
      %v944 = vunpack.c.l.b16 %v848
      %v945 = vunpack.c.l.b16 %v849
      %v946 = vunpack.c.l.b16 %v850
      %v947 = vunpack.c.l.b16 %v851
      %v948 = vunpack.c.l.b16 %v852
      %v949 = vunpack.c.l.b16 %v853
      %v950 = vunpack.c.l.b16 %v854
      %v951 = vunpack.c.l.b16 %v855
      %v952 = vunpack.c.l.b16 %v856
      %v953 = vunpack.c.l.b16 %v857
      %v954 = vpack.c.b16 %v907, %v906
      %v955 = vpack.c.b16 %v909, %v908
      %v956 = vpack.c.b16 %v911, %v910
      %v957 = vpack.c.b16 %v913, %v912
      %v958 = vpack.c.b16 %v915, %v914
      %v959 = vpack.c.b16 %v917, %v916
      %v960 = vpack.c.b16 %v919, %v918
      %v961 = vpack.c.b16 %v921, %v920
      %v962 = vpack.c.b16 %v923, %v922
      %v963 = vpack.c.b16 %v925, %v924
      %v964 = vpack.c.b16 %v927, %v926
      %v965 = vpack.c.b16 %v929, %v928
      %v966 = vpack.c.b16 %v931, %v930
      %v967 = vpack.c.b16 %v933, %v932
      %v968 = vpack.c.b16 %v935, %v934
      %v969 = vpack.c.b16 %v937, %v936
      %v970 = vpack.c.b16 %v939, %v938
      %v971 = vpack.c.b16 %v941, %v940
      %v972 = vpack.c.b16 %v943, %v942
      %v973 = vpack.c.b16 %v945, %v944
      %v974 = vpack.c.b16 %v947, %v946
      %v975 = vpack.c.b16 %v949, %v948
      %v976 = vpack.c.b16 %v951, %v950
      %v977 = vpack.c.b16 %v953, %v952
      %1002 = vmatprep.subr.bf16.mxu0 0
      %1003 = vmatpush1.bf16.msra.mxu0 %v954
      %1004 = vmatprep.subr.bf16.mxu0 0
      %1005 = vmatpush1.bf16.msra.mxu0 %v955
      %1006 = vmatprep.subr.bf16.mxu0 0
      %1007 = vmatpush1.bf16.msra.mxu0 %v956
      %1008 = vmatprep.subr.bf16.mxu0 0
      %1009 = vmatpush1.bf16.msra.mxu0 %v957
      %1010 = vmatprep.subr.bf16.mxu0 0
      %1011 = vmatpush1.bf16.msra.mxu0 %v958
      %1012 = vmatprep.subr.bf16.mxu0 0
      %1013 = vmatpush1.bf16.msra.mxu0 %v959
      %1014 = vmatprep.subr.bf16.mxu0 0
      %1015 = vmatpush1.bf16.msra.mxu0 %v960
      %1016 = vmatprep.subr.bf16.mxu0 0
      %1017 = vmatpush1.bf16.msra.mxu0 %v961
      %1018 = vmatprep.subr.bf16.mxu0 0
      %1019 = vmatpush1.bf16.msra.mxu0 %v962
      %1020 = vmatprep.subr.bf16.mxu0 0
      %1021 = vmatpush1.bf16.msra.mxu0 %v963
      %1022 = vmatprep.subr.bf16.mxu0 0
      %1023 = vmatpush1.bf16.msra.mxu0 %v964
      %1024 = vmatprep.subr.bf16.mxu0 0
      %1025 = vmatpush1.bf16.msra.mxu0 %v965
      %1026 = vmatprep.subr.bf16.mxu0 0
      %1027 = vmatpush1.bf16.msra.mxu0 %v966
      %1028 = vmatprep.subr.bf16.mxu0 0
      %1029 = vmatpush1.bf16.msra.mxu0 %v967
      %1030 = vmatprep.subr.bf16.mxu0 0
      %1031 = vmatpush1.bf16.msra.mxu0 %v968
      %1032 = vmatprep.subr.bf16.mxu0 0
      %1033 = vmatpush1.bf16.msra.mxu0 %v969
      %1034 = vmatprep.mubr.bf16.mxu0 %v792
      %1035 = vmatmul.mubr.bf16.gmra.mrb[0].mxu0 %v783
      %v1036 = vpop.f32.mrb[0].mxu0
      %v1037 = vadd.f32 0.0, %v1036
      %v1038 = vpop.f32.mrb[0].mxu0
      %v1039 = vpop.f32.mrb[0].mxu0
      %v1040 = vadd.f32 0.0, %v1039
      %v1041 = vpop.f32.mrb[0].mxu0
      %1042 = vmatprep.mubr.bf16.mxu0 %v793
      %1043 = vmatmul.mubr.bf16.gmra.mrb[0].mxu0 %v784
      %v1044 = vpop.f32.mrb[0].mxu0
      %v1045 = vadd.f32 0.0, %v1044
      %v1046 = vpop.f32.mrb[0].mxu0
      %v1047 = vpop.f32.mrb[0].mxu0
      %v1048 = vadd.f32 0.0, %v1047
      %v1049 = vpop.f32.mrb[0].mxu0
      %1050 = vmatprep.mubr.bf16.mxu0 %v794
      %1051 = vmatmul.mubr.bf16.gmra.mrb[0].mxu0 %v785
      %v1052 = vpop.f32.mrb[0].mxu0
      %v1053 = vadd.f32 0.0, %v1052
      %v1054 = vpop.f32.mrb[0].mxu0
      %v1055 = vpop.f32.mrb[0].mxu0
      %v1056 = vadd.f32 0.0, %v1055
      %v1057 = vpop.f32.mrb[0].mxu0
      %1058 = vmatprep.mubr.bf16.mxu0 %v795
      %1059 = vmatmul.mubr.bf16.gmra.mrb[0].mxu0 %v786
      %v1060 = vpop.f32.mrb[0].mxu0
      %v1061 = vadd.f32 0.0, %v1060
      %v1062 = vpop.f32.mrb[0].mxu0
      %v1063 = vpop.f32.mrb[0].mxu0
      %v1064 = vadd.f32 0.0, %v1063
      %v1065 = vpop.f32.mrb[0].mxu0
      %1066 = vdwg.mxu0
      %1067 = vmatprep.subr.bf16.mxu0 0
      %1068 = vmatpush1.bf16.msra.mxu0 %v970
      %1069 = vmatprep.subr.bf16.mxu0 0
      %1070 = vmatpush1.bf16.msra.mxu0 %v971
      %1071 = vmatprep.subr.bf16.mxu0 0
      %1072 = vmatpush1.bf16.msra.mxu0 %v972
      %1073 = vmatprep.subr.bf16.mxu0 0
      %1074 = vmatpush1.bf16.msra.mxu0 %v973
      %1075 = vmatprep.subr.bf16.mxu0 0
      %1076 = vmatpush1.bf16.msra.mxu0 %v974
      %1077 = vmatprep.subr.bf16.mxu0 0
      %1078 = vmatpush1.bf16.msra.mxu0 %v975
      %1079 = vmatprep.subr.bf16.mxu0 0
      %1080 = vmatpush1.bf16.msra.mxu0 %v976
      %1081 = vmatprep.subr.bf16.mxu0 0
      %1082 = vmatpush1.bf16.msra.mxu0 %v977
      %1083 = vmatprep.subr.bf16.mxu0 0
      %1084 = vmatpush1.bf16.msra.mxu0 0
      %1085 = vmatprep.subr.bf16.mxu0 0
      %1086 = vmatpush1.bf16.msra.mxu0 0
      %1087 = vmatprep.subr.bf16.mxu0 0
      %1088 = vmatpush1.bf16.msra.mxu0 0
      %1089 = vmatprep.subr.bf16.mxu0 0
      %1090 = vmatpush1.bf16.msra.mxu0 0
      %1091 = vmatprep.subr.bf16.mxu0 0
      %1092 = vmatpush1.bf16.msra.mxu0 0
      %1093 = vmatprep.subr.bf16.mxu0 0
      %1094 = vmatpush1.bf16.msra.mxu0 0
      %1095 = vmatprep.subr.bf16.mxu0 0
      %1096 = vmatpush1.bf16.msra.mxu0 0
      %1097 = vmatprep.subr.bf16.mxu0 0
      %1098 = vmatpush1.bf16.msra.mxu0 0
      %1099 = vmatprep.mubr.bf16.mxu0 0
      %1100 = vmatmul.mubr.bf16.gmra.mrb[0].mxu0 %v801
      %v1101 = vpop.f32.mrb[0].mxu0
      %v1102 = vadd.f32 %v1037, %v1101
      %v1103 = vpop.f32.mrb[0].mxu0
      %v1104 = vpop.f32.mrb[0].mxu0
      %v1105 = vadd.f32 %v1040, %v1104
      %v1106 = vpop.f32.mrb[0].mxu0
      %1107 = vmatprep.mubr.bf16.mxu0 0
      %1108 = vmatmul.mubr.bf16.gmra.mrb[0].mxu0 %v802
      %v1109 = vpop.f32.mrb[0].mxu0
      %v1110 = vadd.f32 %v1045, %v1109
      %v1111 = vpop.f32.mrb[0].mxu0
      %v1112 = vpop.f32.mrb[0].mxu0
      %v1113 = vadd.f32 %v1048, %v1112
      %v1114 = vpop.f32.mrb[0].mxu0
      %1115 = vmatprep.mubr.bf16.mxu0 0
      %1116 = vmatmul.mubr.bf16.gmra.mrb[0].mxu0 %v803
      %v1117 = vpop.f32.mrb[0].mxu0
      %v1118 = vadd.f32 %v1053, %v1117
      %v1119 = vpop.f32.mrb[0].mxu0
      %v1120 = vpop.f32.mrb[0].mxu0
      %v1121 = vadd.f32 %v1056, %v1120
      %v1122 = vpop.f32.mrb[0].mxu0
      %1123 = vmatprep.mubr.bf16.mxu0 0
      %1124 = vmatmul.mubr.bf16.gmra.mrb[0].mxu0 %v804
      %v1125 = vpop.f32.mrb[0].mxu0
      %v1126 = vadd.f32 %v1061, %v1125
      %v1127 = vpop.f32.mrb[0].mxu0
      %v1128 = vpop.f32.mrb[0].mxu0
      %v1129 = vadd.f32 %v1064, %v1128
      %v1130 = vpop.f32.mrb[0].mxu0
      %1131 = vdwg.mxu0
      %v1180 = vunpack.c.l.b16 %v714
      %v1181 = vunpack.c.l.b16 %v715
      %v1182 = vunpack.c.l.b16 %v716
      %v1183 = vunpack.c.l.b16 %v717
      %v1184 = vunpack.c.l.b16 %v718
      %v1185 = vunpack.c.l.b16 %v719
      %v1186 = vunpack.c.l.b16 %v720
      %v1187 = vunpack.c.l.b16 %v721
      %v1188 = vunpack.c.l.b16 %v722
      %v1189 = vunpack.c.l.b16 %v723
      %v1190 = vunpack.c.l.b16 %v724
      %v1191 = vunpack.c.l.b16 %v725
      %v1192 = vunpack.c.l.b16 %v726
      %v1193 = vunpack.c.l.b16 %v727
      %v1194 = vunpack.c.l.b16 %v728
      %v1195 = vunpack.c.l.b16 %v729
      %v1196 = vunpack.c.l.b16 %v730
      %v1197 = vunpack.c.l.b16 %v731
      %v1198 = vunpack.c.l.b16 %v732
      %v1199 = vunpack.c.l.b16 %v733
      %v1200 = vunpack.c.l.b16 %v734
      %v1201 = vunpack.c.l.b16 %v735
      %v1202 = vunpack.c.l.b16 %v736
      %v1203 = vunpack.c.l.b16 %v737
      %v1204 = vunpack.c.l.b16 %v738
      %v1205 = vunpack.c.l.b16 %v739
      %v1206 = vunpack.c.l.b16 %v740
      %v1207 = vunpack.c.l.b16 %v741
      %v1208 = vunpack.c.l.b16 %v742
      %v1209 = vunpack.c.l.b16 %v743
      %v1210 = vunpack.c.l.b16 %v744
      %v1211 = vunpack.c.l.b16 %v745
      %v1212 = vunpack.c.l.b16 %v746
      %v1213 = vunpack.c.l.b16 %v747
      %v1214 = vunpack.c.l.b16 %v748
      %v1215 = vunpack.c.l.b16 %v749
      %v1216 = vunpack.c.l.b16 %v750
      %v1217 = vunpack.c.l.b16 %v751
      %v1218 = vunpack.c.l.b16 %v752
      %v1219 = vunpack.c.l.b16 %v753
      %v1220 = vunpack.c.l.b16 %v754
      %v1221 = vunpack.c.l.b16 %v755
      %v1222 = vunpack.c.l.b16 %v756
      %v1223 = vunpack.c.l.b16 %v757
      %v1224 = vunpack.c.l.b16 %v758
      %v1225 = vunpack.c.l.b16 %v759
      %v1226 = vunpack.c.l.b16 %v760
      %v1227 = vunpack.c.l.b16 %v761
      %v1228 = vpack.c.b16 %v1181, %v1180
      %v1229 = vpack.c.b16 %v1183, %v1182
      %v1230 = vpack.c.b16 %v1185, %v1184
      %v1231 = vpack.c.b16 %v1187, %v1186
      %v1232 = vpack.c.b16 %v1189, %v1188
      %v1233 = vpack.c.b16 %v1191, %v1190
      %v1234 = vpack.c.b16 %v1193, %v1192
      %v1235 = vpack.c.b16 %v1195, %v1194
      %v1236 = vpack.c.b16 %v1197, %v1196
      %v1237 = vpack.c.b16 %v1199, %v1198
      %v1238 = vpack.c.b16 %v1201, %v1200
      %v1239 = vpack.c.b16 %v1203, %v1202
      %v1240 = vpack.c.b16 %v1205, %v1204
      %v1241 = vpack.c.b16 %v1207, %v1206
      %v1242 = vpack.c.b16 %v1209, %v1208
      %v1243 = vpack.c.b16 %v1211, %v1210
      %v1244 = vpack.c.b16 %v1213, %v1212
      %v1245 = vpack.c.b16 %v1215, %v1214
      %v1246 = vpack.c.b16 %v1217, %v1216
      %v1247 = vpack.c.b16 %v1219, %v1218
      %v1248 = vpack.c.b16 %v1221, %v1220
      %v1249 = vpack.c.b16 %v1223, %v1222
      %v1250 = vpack.c.b16 %v1225, %v1224
      %v1251 = vpack.c.b16 %v1227, %v1226
      %1276 = vmatprep.subr.bf16.mxu0 0
      %1277 = vmatpush1.bf16.msra.mxu0 %v1228
      %1278 = vmatprep.subr.bf16.mxu0 0
      %1279 = vmatpush1.bf16.msra.mxu0 %v1229
      %1280 = vmatprep.subr.bf16.mxu0 0
      %1281 = vmatpush1.bf16.msra.mxu0 %v1230
      %1282 = vmatprep.subr.bf16.mxu0 0
      %1283 = vmatpush1.bf16.msra.mxu0 %v1231
      %1284 = vmatprep.subr.bf16.mxu0 0
      %1285 = vmatpush1.bf16.msra.mxu0 %v1232
      %1286 = vmatprep.subr.bf16.mxu0 0
      %1287 = vmatpush1.bf16.msra.mxu0 %v1233
      %1288 = vmatprep.subr.bf16.mxu0 0
      %1289 = vmatpush1.bf16.msra.mxu0 %v1234
      %1290 = vmatprep.subr.bf16.mxu0 0
      %1291 = vmatpush1.bf16.msra.mxu0 %v1235
      %1292 = vmatprep.subr.bf16.mxu0 0
      %1293 = vmatpush1.bf16.msra.mxu0 %v1236
      %1294 = vmatprep.subr.bf16.mxu0 0
      %1295 = vmatpush1.bf16.msra.mxu0 %v1237
      %1296 = vmatprep.subr.bf16.mxu0 0
      %1297 = vmatpush1.bf16.msra.mxu0 %v1238
      %1298 = vmatprep.subr.bf16.mxu0 0
      %1299 = vmatpush1.bf16.msra.mxu0 %v1239
      %1300 = vmatprep.subr.bf16.mxu0 0
      %1301 = vmatpush1.bf16.msra.mxu0 %v1240
      %1302 = vmatprep.subr.bf16.mxu0 0
      %1303 = vmatpush1.bf16.msra.mxu0 %v1241
      %1304 = vmatprep.subr.bf16.mxu0 0
      %1305 = vmatpush1.bf16.msra.mxu0 %v1242
      %1306 = vmatprep.subr.bf16.mxu0 0
      %1307 = vmatpush1.bf16.msra.mxu0 %v1243
      %1308 = vmatprep.mubr.bf16.mxu0 %v690
      %1309 = vmatmul.mubr.bf16.gmra.mrb[0].mxu0 %v674
      %v1310 = vpop.f32.mrb[0].mxu0
      %v1311 = vadd.f32 %v1102, %v1310
      %v1312 = vpop.f32.mrb[0].mxu0
      %v1313 = vpop.f32.mrb[0].mxu0
      %v1314 = vadd.f32 %v1105, %v1313
      %v1315 = vpop.f32.mrb[0].mxu0
      %1316 = vmatprep.mubr.bf16.mxu0 %v691
      %1317 = vmatmul.mubr.bf16.gmra.mrb[0].mxu0 %v675
      %v1318 = vpop.f32.mrb[0].mxu0
      %v1319 = vadd.f32 %v1110, %v1318
      %v1320 = vpop.f32.mrb[0].mxu0
      %v1321 = vpop.f32.mrb[0].mxu0
      %v1322 = vadd.f32 %v1113, %v1321
      %v1323 = vpop.f32.mrb[0].mxu0
      %1324 = vmatprep.mubr.bf16.mxu0 %v692
      %1325 = vmatmul.mubr.bf16.gmra.mrb[0].mxu0 %v676
      %v1326 = vpop.f32.mrb[0].mxu0
      %v1327 = vadd.f32 %v1118, %v1326
      %v1328 = vpop.f32.mrb[0].mxu0
      %v1329 = vpop.f32.mrb[0].mxu0
      %v1330 = vadd.f32 %v1121, %v1329
      %v1331 = vpop.f32.mrb[0].mxu0
      %1332 = vmatprep.mubr.bf16.mxu0 %v693
      %1333 = vmatmul.mubr.bf16.gmra.mrb[0].mxu0 %v677
      %v1334 = vpop.f32.mrb[0].mxu0
      %v1335 = vadd.f32 %v1126, %v1334
      %v1336 = vpop.f32.mrb[0].mxu0
      %v1337 = vpop.f32.mrb[0].mxu0
      %v1338 = vadd.f32 %v1129, %v1337
      %v1339 = vpop.f32.mrb[0].mxu0
      %1340 = vdwg.mxu0
      %1341 = vmatprep.subr.bf16.mxu0 0
      %1342 = vmatpush1.bf16.msra.mxu0 %v1244
      %1343 = vmatprep.subr.bf16.mxu0 0
      %1344 = vmatpush1.bf16.msra.mxu0 %v1245
      %1345 = vmatprep.subr.bf16.mxu0 0
      %1346 = vmatpush1.bf16.msra.mxu0 %v1246
      %1347 = vmatprep.subr.bf16.mxu0 0
      %1348 = vmatpush1.bf16.msra.mxu0 %v1247
      %1349 = vmatprep.subr.bf16.mxu0 0
      %1350 = vmatpush1.bf16.msra.mxu0 %v1248
      %1351 = vmatprep.subr.bf16.mxu0 0
      %1352 = vmatpush1.bf16.msra.mxu0 %v1249
      %1353 = vmatprep.subr.bf16.mxu0 0
      %1354 = vmatpush1.bf16.msra.mxu0 %v1250
      %1355 = vmatprep.subr.bf16.mxu0 0
      %1356 = vmatpush1.bf16.msra.mxu0 %v1251
      %1357 = vmatprep.subr.bf16.mxu0 0
      %1358 = vmatpush1.bf16.msra.mxu0 0
      %1359 = vmatprep.subr.bf16.mxu0 0
      %1360 = vmatpush1.bf16.msra.mxu0 0
      %1361 = vmatprep.subr.bf16.mxu0 0
      %1362 = vmatpush1.bf16.msra.mxu0 0
      %1363 = vmatprep.subr.bf16.mxu0 0
      %1364 = vmatpush1.bf16.msra.mxu0 0
      %1365 = vmatprep.subr.bf16.mxu0 0
      %1366 = vmatpush1.bf16.msra.mxu0 0
      %1367 = vmatprep.subr.bf16.mxu0 0
      %1368 = vmatpush1.bf16.msra.mxu0 0
      %1369 = vmatprep.subr.bf16.mxu0 0
      %1370 = vmatpush1.bf16.msra.mxu0 0
      %1371 = vmatprep.subr.bf16.mxu0 0
      %1372 = vmatpush1.bf16.msra.mxu0 0
      %1373 = vmatprep.mubr.bf16.mxu0 0
      %1374 = vmatmul.mubr.bf16.gmra.mrb[0].mxu0 %v706
      %v1375 = vpop.f32.mrb[0].mxu0
      %v1376 = vadd.f32 %v1311, %v1375
      %v1377 = vpop.f32.mrb[0].mxu0
      %v1378 = vpop.f32.mrb[0].mxu0
      %v1379 = vadd.f32 %v1314, %v1378
      %v1380 = vpop.f32.mrb[0].mxu0
      %1381 = vmatprep.mubr.bf16.mxu0 0
      %1382 = vmatmul.mubr.bf16.gmra.mrb[0].mxu0 %v707
      %v1383 = vpop.f32.mrb[0].mxu0
      %v1384 = vadd.f32 %v1319, %v1383
      %v1385 = vpop.f32.mrb[0].mxu0
      %v1386 = vpop.f32.mrb[0].mxu0
      %v1387 = vadd.f32 %v1322, %v1386
      %v1388 = vpop.f32.mrb[0].mxu0
      %1389 = vmatprep.mubr.bf16.mxu0 0
      %1390 = vmatmul.mubr.bf16.gmra.mrb[0].mxu0 %v708
      %v1391 = vpop.f32.mrb[0].mxu0
      %v1392 = vadd.f32 %v1327, %v1391
      %v1393 = vpop.f32.mrb[0].mxu0
      %v1394 = vpop.f32.mrb[0].mxu0
      %v1395 = vadd.f32 %v1330, %v1394
      %v1396 = vpop.f32.mrb[0].mxu0
      %1397 = vmatprep.mubr.bf16.mxu0 0
      %1398 = vmatmul.mubr.bf16.gmra.mrb[0].mxu0 %v709
      %v1399 = vpop.f32.mrb[0].mxu0
      %v1400 = vadd.f32 %v1335, %v1399
      %v1401 = vpop.f32.mrb[0].mxu0
      %v1402 = vpop.f32.mrb[0].mxu0
      %v1403 = vadd.f32 %v1338, %v1402
      %v1404 = vpop.f32.mrb[0].mxu0
      %1405 = vdwg.mxu0
      %v1407 = vshrl.u32 %v498, 16
      %v1409 = vrot.slane %v1407, 4
      %v1410 = vshll.u32 %v498, 16
      %v1412 = vrot.slane %v1410, 5
      %v1413 = vor.u32 %v1409, %v1412
      %v1414 = vrot.slane %v1413, 4
      %v1416 = vshll.u32 %v499, 16
      %v1418 = vrot.slane %v1416, 5
      %v1419 = vsel %vm502, %v1414, %v1418
      %v1422 = vrot.slane %v498, 5
      %v1423 = vrot.slane %v1422, 4
      %v1424 = vrot.slane %v499, 5
      %v1425 = vsel %vm633, %v1423, %v1424
      %v1426 = vunpack.c.l.b16 %v498
      %v1427 = vpack.c.b16 %v1426, %v782
      %v1429 = vunpack.c.l.b16 %v1419
      %v1430 = vpack.c.b16 %v1429, %v791
      %v1432 = vunpack.c.l.b16 %v1425
      %v1433 = vpack.c.b16 %v1432, %v800
      %s1435 = scalar_lea.vmem %s2, 384
      %v1436 = vld [vmem:[%s1435] sm:$0xf]
      %v1437 = vld [vmem:[%s1435 + $0x4] sm:$0xf]
      %v1438 = vld [vmem:[%s1435 + $0x8] sm:$0xf]
      %v1439 = vld [vmem:[%s1435 + $0xc] sm:$0xf]
      %v1440 = vld [vmem:[%s1435 + $0x10] sm:$0xf]
      %v1441 = vld [vmem:[%s1435 + $0x14] sm:$0xf]
      %v1442 = vld [vmem:[%s1435 + $0x18] sm:$0xf]
      %v1443 = vld [vmem:[%s1435 + $0x1c] sm:$0xf]
      %v1444 = vld [vmem:[%s1435 + $0x20] sm:$0xf]
      %v1445 = vld [vmem:[%s1435 + $0x24] sm:$0xf]
      %v1446 = vld [vmem:[%s1435 + $0x28] sm:$0xf]
      %v1447 = vld [vmem:[%s1435 + $0x2c] sm:$0xf]
      %v1448 = vld [vmem:[%s1435 + $0x30] sm:$0xf]
      %v1449 = vld [vmem:[%s1435 + $0x34] sm:$0xf]
      %v1450 = vld [vmem:[%s1435 + $0x38] sm:$0xf]
      %v1451 = vld [vmem:[%s1435 + $0x3c] sm:$0xf]
      %v1452 = vld [vmem:[%s1435 + $0x40] sm:$0xf]
      %v1453 = vld [vmem:[%s1435 + $0x44] sm:$0xf]
      %v1454 = vld [vmem:[%s1435 + $0x48] sm:$0xf]
      %v1455 = vld [vmem:[%s1435 + $0x4c] sm:$0xf]
      %v1456 = vld [vmem:[%s1435 + $0x50] sm:$0xf]
      %v1457 = vld [vmem:[%s1435 + $0x54] sm:$0xf]
      %v1458 = vld [vmem:[%s1435 + $0x58] sm:$0xf]
      %v1459 = vld [vmem:[%s1435 + $0x5c] sm:$0xf]
      %v1460 = vld [vmem:[%s1435 + $0x60] sm:$0xf]
      %v1461 = vld [vmem:[%s1435 + $0x64] sm:$0xf]
      %v1462 = vld [vmem:[%s1435 + $0x68] sm:$0xf]
      %v1463 = vld [vmem:[%s1435 + $0x6c] sm:$0xf]
      %v1464 = vld [vmem:[%s1435 + $0x70] sm:$0xf]
      %v1465 = vld [vmem:[%s1435 + $0x74] sm:$0xf]
      %v1466 = vld [vmem:[%s1435 + $0x78] sm:$0xf]
      %v1467 = vld [vmem:[%s1435 + $0x7c] sm:$0xf]
      %v1468 = vld [vmem:[%s1435 + $0x80] sm:$0xf]
      %v1469 = vld [vmem:[%s1435 + $0x84] sm:$0xf]
      %v1470 = vld [vmem:[%s1435 + $0x88] sm:$0xf]
      %v1471 = vld [vmem:[%s1435 + $0x8c] sm:$0xf]
      %v1472 = vld [vmem:[%s1435 + $0x90] sm:$0xf]
      %v1473 = vld [vmem:[%s1435 + $0x94] sm:$0xf]
      %v1474 = vld [vmem:[%s1435 + $0x98] sm:$0xf]
      %v1475 = vld [vmem:[%s1435 + $0x9c] sm:$0xf]
      %v1476 = vld [vmem:[%s1435 + $0xa0] sm:$0xf]
      %v1477 = vld [vmem:[%s1435 + $0xa4] sm:$0xf]
      %v1478 = vld [vmem:[%s1435 + $0xa8] sm:$0xf]
      %v1479 = vld [vmem:[%s1435 + $0xac] sm:$0xf]
      %v1480 = vld [vmem:[%s1435 + $0xb0] sm:$0xf]
      %v1481 = vld [vmem:[%s1435 + $0xb4] sm:$0xf]
      %v1482 = vld [vmem:[%s1435 + $0xb8] sm:$0xf]
      %v1483 = vld [vmem:[%s1435 + $0xbc] sm:$0xf]
      %v1532 = vunpack.c.l.b16 %v1436
      %v1533 = vunpack.c.l.b16 %v1437
      %v1534 = vunpack.c.l.b16 %v1438
      %v1535 = vunpack.c.l.b16 %v1439
      %v1536 = vunpack.c.l.b16 %v1440
      %v1537 = vunpack.c.l.b16 %v1441
      %v1538 = vunpack.c.l.b16 %v1442
      %v1539 = vunpack.c.l.b16 %v1443
      %v1540 = vunpack.c.l.b16 %v1444
      %v1541 = vunpack.c.l.b16 %v1445
      %v1542 = vunpack.c.l.b16 %v1446
      %v1543 = vunpack.c.l.b16 %v1447
      %v1544 = vunpack.c.l.b16 %v1448
      %v1545 = vunpack.c.l.b16 %v1449
      %v1546 = vunpack.c.l.b16 %v1450
      %v1547 = vunpack.c.l.b16 %v1451
      %v1548 = vunpack.c.l.b16 %v1452
      %v1549 = vunpack.c.l.b16 %v1453
      %v1550 = vunpack.c.l.b16 %v1454
      %v1551 = vunpack.c.l.b16 %v1455
      %v1552 = vunpack.c.l.b16 %v1456
      %v1553 = vunpack.c.l.b16 %v1457
      %v1554 = vunpack.c.l.b16 %v1458
      %v1555 = vunpack.c.l.b16 %v1459
      %v1556 = vunpack.c.l.b16 %v1460
      %v1557 = vunpack.c.l.b16 %v1461
      %v1558 = vunpack.c.l.b16 %v1462
      %v1559 = vunpack.c.l.b16 %v1463
      %v1560 = vunpack.c.l.b16 %v1464
      %v1561 = vunpack.c.l.b16 %v1465
      %v1562 = vunpack.c.l.b16 %v1466
      %v1563 = vunpack.c.l.b16 %v1467
      %v1564 = vunpack.c.l.b16 %v1468
      %v1565 = vunpack.c.l.b16 %v1469
      %v1566 = vunpack.c.l.b16 %v1470
      %v1567 = vunpack.c.l.b16 %v1471
      %v1568 = vunpack.c.l.b16 %v1472
      %v1569 = vunpack.c.l.b16 %v1473
      %v1570 = vunpack.c.l.b16 %v1474
      %v1571 = vunpack.c.l.b16 %v1475
      %v1572 = vunpack.c.l.b16 %v1476
      %v1573 = vunpack.c.l.b16 %v1477
      %v1574 = vunpack.c.l.b16 %v1478
      %v1575 = vunpack.c.l.b16 %v1479
      %v1576 = vunpack.c.l.b16 %v1480
      %v1577 = vunpack.c.l.b16 %v1481
      %v1578 = vunpack.c.l.b16 %v1482
      %v1579 = vunpack.c.l.b16 %v1483
      %v1580 = vpack.c.b16 %v1533, %v1532
      %v1581 = vpack.c.b16 %v1535, %v1534
      %v1582 = vpack.c.b16 %v1537, %v1536
      %v1583 = vpack.c.b16 %v1539, %v1538
      %v1584 = vpack.c.b16 %v1541, %v1540
      %v1585 = vpack.c.b16 %v1543, %v1542
      %v1586 = vpack.c.b16 %v1545, %v1544
      %v1587 = vpack.c.b16 %v1547, %v1546
      %v1588 = vpack.c.b16 %v1549, %v1548
      %v1589 = vpack.c.b16 %v1551, %v1550
      %v1590 = vpack.c.b16 %v1553, %v1552
      %v1591 = vpack.c.b16 %v1555, %v1554
      %v1592 = vpack.c.b16 %v1557, %v1556
      %v1593 = vpack.c.b16 %v1559, %v1558
      %v1594 = vpack.c.b16 %v1561, %v1560
      %v1595 = vpack.c.b16 %v1563, %v1562
      %v1596 = vpack.c.b16 %v1565, %v1564
      %v1597 = vpack.c.b16 %v1567, %v1566
      %v1598 = vpack.c.b16 %v1569, %v1568
      %v1599 = vpack.c.b16 %v1571, %v1570
      %v1600 = vpack.c.b16 %v1573, %v1572
      %v1601 = vpack.c.b16 %v1575, %v1574
      %v1602 = vpack.c.b16 %v1577, %v1576
      %v1603 = vpack.c.b16 %v1579, %v1578
      %1628 = vmatprep.subr.bf16.mxu0 0
      %1629 = vmatpush1.bf16.msra.mxu0 %v1580
      %1630 = vmatprep.subr.bf16.mxu0 0
      %1631 = vmatpush1.bf16.msra.mxu0 %v1581
      %1632 = vmatprep.subr.bf16.mxu0 0
      %1633 = vmatpush1.bf16.msra.mxu0 %v1582
      %1634 = vmatprep.subr.bf16.mxu0 0
      %1635 = vmatpush1.bf16.msra.mxu0 %v1583
      %1636 = vmatprep.subr.bf16.mxu0 0
      %1637 = vmatpush1.bf16.msra.mxu0 %v1584
      %1638 = vmatprep.subr.bf16.mxu0 0
      %1639 = vmatpush1.bf16.msra.mxu0 %v1585
      %1640 = vmatprep.subr.bf16.mxu0 0
      %1641 = vmatpush1.bf16.msra.mxu0 %v1586
      %1642 = vmatprep.subr.bf16.mxu0 0
      %1643 = vmatpush1.bf16.msra.mxu0 %v1587
      %1644 = vmatprep.subr.bf16.mxu0 0
      %1645 = vmatpush1.bf16.msra.mxu0 %v1588
      %1646 = vmatprep.subr.bf16.mxu0 0
      %1647 = vmatpush1.bf16.msra.mxu0 %v1589
      %1648 = vmatprep.subr.bf16.mxu0 0
      %1649 = vmatpush1.bf16.msra.mxu0 %v1590
      %1650 = vmatprep.subr.bf16.mxu0 0
      %1651 = vmatpush1.bf16.msra.mxu0 %v1591
      %1652 = vmatprep.subr.bf16.mxu0 0
      %1653 = vmatpush1.bf16.msra.mxu0 %v1592
      %1654 = vmatprep.subr.bf16.mxu0 0
      %1655 = vmatpush1.bf16.msra.mxu0 %v1593
      %1656 = vmatprep.subr.bf16.mxu0 0
      %1657 = vmatpush1.bf16.msra.mxu0 %v1594
      %1658 = vmatprep.subr.bf16.mxu0 0
      %1659 = vmatpush1.bf16.msra.mxu0 %v1595
      %1660 = vmatprep.mubr.bf16.mxu0 %v691
      %1661 = vmatmul.mubr.bf16.gmra.mrb[0].mxu0 %v675
      %v1662 = vpop.f32.mrb[0].mxu0
      %v1663 = vadd.f32 0.0, %v1662
      %v1664 = vpop.f32.mrb[0].mxu0
      %v1665 = vpop.f32.mrb[0].mxu0
      %v1666 = vadd.f32 0.0, %v1665
      %v1667 = vpop.f32.mrb[0].mxu0
      %1668 = vmatprep.mubr.bf16.mxu0 %v692
      %1669 = vmatmul.mubr.bf16.gmra.mrb[0].mxu0 %v676
      %v1670 = vpop.f32.mrb[0].mxu0
      %v1671 = vadd.f32 0.0, %v1670
      %v1672 = vpop.f32.mrb[0].mxu0
      %v1673 = vpop.f32.mrb[0].mxu0
      %v1674 = vadd.f32 0.0, %v1673
      %v1675 = vpop.f32.mrb[0].mxu0
      %1676 = vmatprep.mubr.bf16.mxu0 %v693
      %1677 = vmatmul.mubr.bf16.gmra.mrb[0].mxu0 %v677
      %v1678 = vpop.f32.mrb[0].mxu0
      %v1679 = vadd.f32 0.0, %v1678
      %v1680 = vpop.f32.mrb[0].mxu0
      %v1681 = vpop.f32.mrb[0].mxu0
      %v1682 = vadd.f32 0.0, %v1681
      %v1683 = vpop.f32.mrb[0].mxu0
      %1684 = vmatprep.mubr.bf16.mxu0 %v1430
      %1685 = vmatmul.mubr.bf16.gmra.mrb[0].mxu0 %v1427
      %v1686 = vpop.f32.mrb[0].mxu0
      %v1687 = vadd.f32 0.0, %v1686
      %v1688 = vpop.f32.mrb[0].mxu0
      %v1689 = vpop.f32.mrb[0].mxu0
      %v1690 = vadd.f32 0.0, %v1689
      %v1691 = vpop.f32.mrb[0].mxu0
      %1692 = vdwg.mxu0
      %1693 = vmatprep.subr.bf16.mxu0 0
      %1694 = vmatpush1.bf16.msra.mxu0 %v1596
      %1695 = vmatprep.subr.bf16.mxu0 0
      %1696 = vmatpush1.bf16.msra.mxu0 %v1597
      %1697 = vmatprep.subr.bf16.mxu0 0
      %1698 = vmatpush1.bf16.msra.mxu0 %v1598
      %1699 = vmatprep.subr.bf16.mxu0 0
      %1700 = vmatpush1.bf16.msra.mxu0 %v1599
      %1701 = vmatprep.subr.bf16.mxu0 0
      %1702 = vmatpush1.bf16.msra.mxu0 %v1600
      %1703 = vmatprep.subr.bf16.mxu0 0
      %1704 = vmatpush1.bf16.msra.mxu0 %v1601
      %1705 = vmatprep.subr.bf16.mxu0 0
      %1706 = vmatpush1.bf16.msra.mxu0 %v1602
      %1707 = vmatprep.subr.bf16.mxu0 0
      %1708 = vmatpush1.bf16.msra.mxu0 %v1603
      %1709 = vmatprep.subr.bf16.mxu0 0
      %1710 = vmatpush1.bf16.msra.mxu0 0
      %1711 = vmatprep.subr.bf16.mxu0 0
      %1712 = vmatpush1.bf16.msra.mxu0 0
      %1713 = vmatprep.subr.bf16.mxu0 0
      %1714 = vmatpush1.bf16.msra.mxu0 0
      %1715 = vmatprep.subr.bf16.mxu0 0
      %1716 = vmatpush1.bf16.msra.mxu0 0
      %1717 = vmatprep.subr.bf16.mxu0 0
      %1718 = vmatpush1.bf16.msra.mxu0 0
      %1719 = vmatprep.subr.bf16.mxu0 0
      %1720 = vmatpush1.bf16.msra.mxu0 0
      %1721 = vmatprep.subr.bf16.mxu0 0
      %1722 = vmatpush1.bf16.msra.mxu0 0
      %1723 = vmatprep.subr.bf16.mxu0 0
      %1724 = vmatpush1.bf16.msra.mxu0 0
      %1725 = vmatprep.mubr.bf16.mxu0 0
      %1726 = vmatmul.mubr.bf16.gmra.mrb[0].mxu0 %v707
      %v1727 = vpop.f32.mrb[0].mxu0
      %v1728 = vadd.f32 %v1663, %v1727
      %v1729 = vpop.f32.mrb[0].mxu0
      %v1730 = vpop.f32.mrb[0].mxu0
      %v1731 = vadd.f32 %v1666, %v1730
      %v1732 = vpop.f32.mrb[0].mxu0
      %1733 = vmatprep.mubr.bf16.mxu0 0
      %1734 = vmatmul.mubr.bf16.gmra.mrb[0].mxu0 %v708
      %v1735 = vpop.f32.mrb[0].mxu0
      %v1736 = vadd.f32 %v1671, %v1735
      %v1737 = vpop.f32.mrb[0].mxu0
      %v1738 = vpop.f32.mrb[0].mxu0
      %v1739 = vadd.f32 %v1674, %v1738
      %v1740 = vpop.f32.mrb[0].mxu0
      %1741 = vmatprep.mubr.bf16.mxu0 0
      %1742 = vmatmul.mubr.bf16.gmra.mrb[0].mxu0 %v709
      %v1743 = vpop.f32.mrb[0].mxu0
      %v1744 = vadd.f32 %v1679, %v1743
      %v1745 = vpop.f32.mrb[0].mxu0
      %v1746 = vpop.f32.mrb[0].mxu0
      %v1747 = vadd.f32 %v1682, %v1746
      %v1748 = vpop.f32.mrb[0].mxu0
      %1749 = vmatprep.mubr.bf16.mxu0 0
      %1750 = vmatmul.mubr.bf16.gmra.mrb[0].mxu0 %v1433
      %v1751 = vpop.f32.mrb[0].mxu0
      %v1752 = vadd.f32 %v1687, %v1751
      %v1753 = vpop.f32.mrb[0].mxu0
      %v1754 = vpop.f32.mrb[0].mxu0
      %v1755 = vadd.f32 %v1690, %v1754
      %v1756 = vpop.f32.mrb[0].mxu0
      %1757 = vdwg.mxu0
      %v1758 = vadd.f32 %v1376, %v1728
      %v1759 = vadd.f32 %v1379, %v1731
      %v1760 = vadd.f32 %v1384, %v1736
      %v1761 = vadd.f32 %v1387, %v1739
      %v1762 = vadd.f32 %v1392, %v1744
      %v1763 = vadd.f32 %v1395, %v1747
      %v1764 = vadd.f32 %v1400, %v1752
      %v1765 = vadd.f32 %v1403, %v1755
      %v1766 = vpack.c.bf16 %v1758, %v1758
      %v1767 = vpack.c.bf16 %v1759, %v1759
      %v1768 = vpack.c.bf16 %v1760, %v1760
      %v1769 = vpack.c.bf16 %v1761, %v1761
      %v1770 = vpack.c.bf16 %v1762, %v1762
      %v1771 = vpack.c.bf16 %v1763, %v1763
      %v1772 = vpack.c.bf16 %v1764, %v1764
      %v1773 = vpack.c.bf16 %v1765, %v1765
      %1774 = vst [vmem:[%s204] sm:$0xf] %v1766
      %1775 = vst [vmem:[%s204 + $0x4] sm:$0xf] %v1767
      %1776 = vst [vmem:[%s204 + $0x8] sm:$0xf] %v1768
      %1777 = vst [vmem:[%s204 + $0xc] sm:$0xf] %v1769
      %1778 = vst [vmem:[%s204 + $0x10] sm:$0xf] %v1770
      %1779 = vst [vmem:[%s204 + $0x14] sm:$0xf] %v1771
      %1780 = vst [vmem:[%s204 + $0x18] sm:$0xf] %v1772
      %1781 = vst [vmem:[%s204 + $0x1c] sm:$0xf] %v1773
      %v1782 = vadd.f32 %v1758, %v1759
      %v1783 = vadd.f32 %v1782, %v1760
      %v1784 = vadd.f32 %v1783, %v1761
      %v1785 = vadd.f32 %v1784, %v1762
      %v1786 = vadd.f32 %v1785, %v1763
      %v1787 = vadd.f32 %v1786, %v1764
      %v1788 = vadd.f32 %v1787, %v1765
      %v1789 = vrot.slane %v1788, 4
      %v1790 = vadd.f32 %v1788, %v1789
      %v1791 = vrot.slane %v1790, 2
      %v1792 = vadd.f32 %v1790, %v1791
      %v1793 = vrot.slane %v1792, 1
      %v1794 = vadd.f32 %v1792, %v1793
      %v1795 = vmul.f32 %v1794, 0.015625
      %v1796 = vsub.f32 %v1758, %v1795
      %v1797 = vsub.f32 %v1759, %v1795
      %v1798 = vsub.f32 %v1760, %v1795
      %v1799 = vsub.f32 %v1761, %v1795
      %v1800 = vsub.f32 %v1762, %v1795
      %v1801 = vsub.f32 %v1763, %v1795
      %v1802 = vsub.f32 %v1764, %v1795
      %v1803 = vsub.f32 %v1765, %v1795
      %v1804 = vmul.f32 %v1796, %v1796
      %v1805 = vmul.f32 %v1797, %v1797
      %v1806 = vmul.f32 %v1798, %v1798
      %v1807 = vmul.f32 %v1799, %v1799
      %v1808 = vmul.f32 %v1800, %v1800
      %v1809 = vmul.f32 %v1801, %v1801
      %v1810 = vmul.f32 %v1802, %v1802
      %v1811 = vmul.f32 %v1803, %v1803
      %v1812 = vadd.f32 %v1804, %v1805
      %v1813 = vadd.f32 %v1812, %v1806
      %v1814 = vadd.f32 %v1813, %v1807
      %v1815 = vadd.f32 %v1814, %v1808
      %v1816 = vadd.f32 %v1815, %v1809
      %v1817 = vadd.f32 %v1816, %v1810
      %v1818 = vadd.f32 %v1817, %v1811
      %v1819 = vrot.slane %v1818, 4
      %v1820 = vadd.f32 %v1818, %v1819
      %v1821 = vrot.slane %v1820, 2
      %v1822 = vadd.f32 %v1820, %v1821
      %v1823 = vrot.slane %v1822, 1
      %v1824 = vadd.f32 %v1822, %v1823
      %vm1825 = vcmask 1040384
      %v1826 = vsel %vm1825, %v1794, %v1824
      %1827 = vst [vmem:[%s208] sm:$0x3] %v1826
      %p1828 = scmp.lt.s32.totalorder %s16, 1
      %s1829 = scalar_select %p1828, %s16, 1
      %s1830 = smul.addr %s1829, 8
      %s1831 = smul.addr %s1830, 4
      %s1832 = scalar_lea.vmem %s3, %s1831
      %p1833 = scmp.lt.s32.totalorder %s16, 1
      %s1834 = scalar_select %p1833, %s16, 1
      %s1835 = smul.addr %s1834, 2
      %s1836 = scalar_lea.vmem %s4, %s1835
      // Predicated region
      $region33: #{block_forward.4} parent=31 // pred_check
        %p1837 = pneg %p102
      $region34: #{block_forward.4} parent=31 // pred_check_branch
        %1839 = sbr.rel (%p1837) target = $region36
      $region35: #{block_forward.4} parent=31 // pred_region
        _
      $region36: #{block_forward.4} parent=31 // pred_fallthru
        _
      // Predicated region
      $region37: #{block_forward.4} parent=31 // pred_check
        %p1840 = pneg %p128
      $region38: #{block_forward.4} parent=31 // pred_check_branch
        %1842 = sbr.rel (%p1840) target = $region40
      $region39: #{block_forward.4} parent=31 // pred_region
        _
      $region40: #{block_forward.4} parent=31 // pred_fallthru
        _
    $region32: #{block_forward.4} parent=5 // pred_fallthru
      _
    %p1843 = scmp.le.s32.totalorder 2, %s11
    // Predicated region
    $region41: #{block_forward.4} parent=5 // pred_check
      %p1844 = pneg %p1843
    $region42: #{block_forward.4} parent=5 // pred_check_branch
      %1846 = sbr.rel (%p1844) target = $region44
    $region43: #{block_forward.4} parent=5 // pred_region
      %s1847 = ssub.s32 %s11, 2
      // Predicated region
      $region45: #{block_forward.4} parent=43 // pred_check
        %p1848 = pneg %p108
      $region46: #{block_forward.4} parent=43 // pred_check_branch
        %1850 = sbr.rel (%p1848) target = $region48
      $region47: #{block_forward.4} parent=43 // pred_region
        %p1851 = scmp.lt.s32.totalorder %s17, 1
        %s1852 = scalar_select %p1851, %s17, 1
        %s1853 = smul.addr %s1852, 8
        %s1854 = smul.addr %s1853, 4
        %s1855 = scalar_lea.vmem %s3, %s1854
      $region48: #{block_forward.4} parent=43 // pred_fallthru
        _
      // Predicated region
      $region49: #{block_forward.4} parent=43 // pred_check
        %p1856 = pneg %p134
      $region50: #{block_forward.4} parent=43 // pred_check_branch
        %1858 = sbr.rel (%p1856) target = $region52
      $region51: #{block_forward.4} parent=43 // pred_region
        %p1859 = scmp.lt.s32.totalorder %s17, 1
        %s1860 = scalar_select %p1859, %s17, 1
        %s1861 = smul.addr %s1860, 2
        %s1862 = scalar_lea.vmem %s4, %s1861
      $region52: #{block_forward.4} parent=43 // pred_fallthru
        _
    $region44: #{block_forward.4} parent=5 // pred_fallthru
      _
  $region6: #{block_forward.4} parent=0 // loop_footer
    %s15 = sadd.s32 1, %s11
  $region7: #{block_forward.4} parent=0 // loop_footer_branch
    %10 = sbr.rel target = $region3
  $region8: #{block_forward.4} parent=0 // loop_exit
    _

// kernel: block_forward.3
$region0: #{block_forward.3}
  #allocation0 [shape = 'u32[]', space=smem, size = 0x4, offset = 0x4, fixed_abs, tag = 'smem constant byte address 0x4 - core index']
  #allocation1 [shape = 'u32[144,128]{1,0:T(1,128)}', space=vmem, size = 0x12000, scoped, tag = 'internal scratch']
  %s0 = inlined_call_operand.vmem [shape: bf16[8,9,9,128], index: 0, kind: input, shape index: {}]
  %s1 = inlined_call_operand.vmem [shape: bf16[3,384,128], index: 1, kind: input, shape index: {}]
  %s2 = inlined_call_operand.vmem [shape: bf16[128,128], index: 2, kind: input, shape index: {}]
  %s3 = inlined_call_operand.vmem [shape: bf16[2,8,8,128], index: 3, kind: output, shape index: {0}]
  %s4 = inlined_call_operand.vmem [shape: bf16[2,8,8,128], index: 4, kind: output, shape index: {1}]
  %s5 = inlined_call_operand.vmem [shape: f32[2,4,128], index: 5, kind: output, shape index: {2}]
  %6 = xla_tuple %s3, %s4, %s5
  %s7 = sld [smem:[#allocation0]]
  $region61: #{block_forward.3} parent=0
    _
  %s9 = ssub.s32 1, %s7
  %s10 = scalar_select 0, %s9, %s7
  loop: start=0, step=1, limit=4
  $region2: #{block_forward.3} parent=0 // loop_pre_header
    _
  $region3: #{block_forward.3} parent=0 // loop_header
    %s12 = sphi 0, %s16
    %p13 = scmp.ge.s32.totalorder %s12, 4
    %s22 = sphi 0, %s24
    %s25 = sphi 0, %s22
    %s26 = sphi 0, %s25
    %s42 = sphi 0, %s26
    %s46 = sphi 0, %s46
    %s48 = sphi 0, %s46
    %s49 = sphi 0, %s48
    %s63 = sphi 0, %s49
    %s67 = sphi 0, %s67
    %s69 = sphi 0, %s67
    %s70 = sphi 0, %s69
    %s84 = sphi 0, %s70
    %s90 = sphi 0, %s92
    %s93 = sphi 0, %s90
    %s94 = sphi 0, %s93
    %s110 = sphi 0, %s94
    %s116 = sphi 0, %s118
    %s119 = sphi 0, %s116
    %s120 = sphi 0, %s119
    %s136 = sphi 0, %s120
    %s142 = sphi 0, %s144
    %s145 = sphi 0, %s142
    %s146 = sphi 0, %s145
    %s162 = sphi 0, %s146
  $region4: #{block_forward.3} parent=0 // loop_header_branch
    %15 = sbr.rel (%p13) target = $region8
  $region5: #{block_forward.3} parent=0 // loop_body
    %s17 = ssub.s32 %s12, 1
    %s18 = ssub.s32 %s12, 2
    %s19 = sadd.s32 %s12, 1
    %s20 = ssub.s32 %s12, %s19
    %p21 = scmp.eq.s32.totalorder %s20, 0
    %s23 = sadd.s32 %s22, 1
    %s24 = scalar_select %p21, %s22, %s23
    %p27 = pneg %p21
    %p28 = scmp.eq.s32.totalorder %s12, 1
    %p29 = por %p27, %p28
    %p30 = scmp.ne.s32.totalorder %s22, %s25
    %p31 = scmp.eq.s32.totalorder %s12, 0
    %p32 = por %p30, %p31
    %p33 = scmp.ne.s32.totalorder %s22, %s25
    %p34 = scmp.eq.s32.totalorder %s17, 1
    %p35 = por %p33, %p34
    %p36 = scmp.ne.s32.totalorder %s25, %s26
    %p37 = scmp.eq.s32.totalorder %s17, 0
    %p38 = por %p36, %p37
    %p39 = scmp.ne.s32.totalorder %s25, %s26
    %p40 = scmp.eq.s32.totalorder %s18, 1
    %p41 = por %p39, %p40
    %p43 = scmp.ne.s32.totalorder %s26, %s42
    %p44 = scmp.eq.s32.totalorder %s18, 0
    %p45 = por %p43, %p44
    %s47 = sadd.s32 %s46, 1
    %p50 = scmp.eq.s32.totalorder %s12, 1
    %p51 = scmp.ne.s32.totalorder %s46, %s48
    %p52 = scmp.eq.s32.totalorder %s12, 0
    %p53 = por %p51, %p52
    %p54 = scmp.ne.s32.totalorder %s46, %s48
    %p55 = scmp.eq.s32.totalorder %s17, 1
    %p56 = por %p54, %p55
    %p57 = scmp.ne.s32.totalorder %s48, %s49
    %p58 = scmp.eq.s32.totalorder %s17, 0
    %p59 = por %p57, %p58
    %p60 = scmp.ne.s32.totalorder %s48, %s49
    %p61 = scmp.eq.s32.totalorder %s18, 1
    %p62 = por %p60, %p61
    %p64 = scmp.ne.s32.totalorder %s49, %s63
    %p65 = scmp.eq.s32.totalorder %s18, 0
    %p66 = por %p64, %p65
    %s68 = sadd.s32 %s67, 1
    %p71 = scmp.eq.s32.totalorder %s12, 1
    %p72 = scmp.ne.s32.totalorder %s67, %s69
    %p73 = scmp.eq.s32.totalorder %s12, 0
    %p74 = por %p72, %p73
    %p75 = scmp.ne.s32.totalorder %s67, %s69
    %p76 = scmp.eq.s32.totalorder %s17, 1
    %p77 = por %p75, %p76
    %p78 = scmp.ne.s32.totalorder %s69, %s70
    %p79 = scmp.eq.s32.totalorder %s17, 0
    %p80 = por %p78, %p79
    %p81 = scmp.ne.s32.totalorder %s69, %s70
    %p82 = scmp.eq.s32.totalorder %s18, 1
    %p83 = por %p81, %p82
    %p85 = scmp.ne.s32.totalorder %s70, %s84
    %p86 = scmp.eq.s32.totalorder %s18, 0
    %p87 = por %p85, %p86
    %s88 = ssub.s32 %s12, %s19
    %p89 = scmp.eq.s32.totalorder %s88, 0
    %s91 = sadd.s32 %s90, 1
    %s92 = scalar_select %p89, %s90, %s91
    %p95 = pneg %p89
    %p96 = scmp.eq.s32.totalorder %s12, 1
    %p97 = por %p95, %p96
    %p98 = scmp.ne.s32.totalorder %s90, %s93
    %p99 = scmp.eq.s32.totalorder %s12, 0
    %p100 = por %p98, %p99
    %p101 = scmp.ne.s32.totalorder %s90, %s93
    %p102 = scmp.eq.s32.totalorder %s17, 1
    %p103 = por %p101, %p102
    %p104 = scmp.ne.s32.totalorder %s93, %s94
    %p105 = scmp.eq.s32.totalorder %s17, 0
    %p106 = por %p104, %p105
    %p107 = scmp.ne.s32.totalorder %s93, %s94
    %p108 = scmp.eq.s32.totalorder %s18, 1
    %p109 = por %p107, %p108
    %p111 = scmp.ne.s32.totalorder %s94, %s110
    %p112 = scmp.eq.s32.totalorder %s18, 0
    %p113 = por %p111, %p112
    %s114 = ssub.s32 %s12, %s19
    %p115 = scmp.eq.s32.totalorder %s114, 0
    %s117 = sadd.s32 %s116, 1
    %s118 = scalar_select %p115, %s116, %s117
    %p121 = pneg %p115
    %p122 = scmp.eq.s32.totalorder %s12, 1
    %p123 = por %p121, %p122
    %p124 = scmp.ne.s32.totalorder %s116, %s119
    %p125 = scmp.eq.s32.totalorder %s12, 0
    %p126 = por %p124, %p125
    %p127 = scmp.ne.s32.totalorder %s116, %s119
    %p128 = scmp.eq.s32.totalorder %s17, 1
    %p129 = por %p127, %p128
    %p130 = scmp.ne.s32.totalorder %s119, %s120
    %p131 = scmp.eq.s32.totalorder %s17, 0
    %p132 = por %p130, %p131
    %p133 = scmp.ne.s32.totalorder %s119, %s120
    %p134 = scmp.eq.s32.totalorder %s18, 1
    %p135 = por %p133, %p134
    %p137 = scmp.ne.s32.totalorder %s120, %s136
    %p138 = scmp.eq.s32.totalorder %s18, 0
    %p139 = por %p137, %p138
    %s140 = ssub.s32 %s12, %s19
    %p141 = scmp.eq.s32.totalorder %s140, 0
    %s143 = sadd.s32 %s142, 1
    %s144 = scalar_select %p141, %s142, %s143
    %p147 = pneg %p141
    %p148 = scmp.eq.s32.totalorder %s12, 1
    %p149 = por %p147, %p148
    %p150 = scmp.ne.s32.totalorder %s142, %s145
    %p151 = scmp.eq.s32.totalorder %s12, 0
    %p152 = por %p150, %p151
    %p153 = scmp.ne.s32.totalorder %s142, %s145
    %p154 = scmp.eq.s32.totalorder %s17, 1
    %p155 = por %p153, %p154
    %p156 = scmp.ne.s32.totalorder %s145, %s146
    %p157 = scmp.eq.s32.totalorder %s17, 0
    %p158 = por %p156, %p157
    %p159 = scmp.ne.s32.totalorder %s145, %s146
    %p160 = scmp.eq.s32.totalorder %s18, 1
    %p161 = por %p159, %p160
    %p163 = scmp.ne.s32.totalorder %s146, %s162
    %p164 = scmp.eq.s32.totalorder %s18, 0
    %p165 = por %p163, %p164
    %p166 = scmp.le.s32.totalorder 1, %s12
    %p167 = scmp.lt.s32.totalorder %s12, 3
    %p168 = pnand %p166, %p167
    %p169 = pneg %p168
    // Predicated region
    $region9: #{block_forward.3} parent=5 // pred_check
      _
    $region10: #{block_forward.3} parent=5 // pred_check_branch
      %171 = sbr.rel (%p168) target = $region12
    $region11: #{block_forward.3} parent=5 // pred_region
      %s172 = ssub.s32 %s12, 1
      // Predicated region
      $region13: #{block_forward.3} parent=11 // pred_check
        %p173 = pneg %p59
      $region14: #{block_forward.3} parent=11 // pred_check_branch
        %175 = sbr.rel (%p173) target = $region16
      $region15: #{block_forward.3} parent=11 // pred_region
        _
      $region16: #{block_forward.3} parent=11 // pred_fallthru
        _
      // Predicated region
      $region17: #{block_forward.3} parent=11 // pred_check
        %p176 = pneg %p80
      $region18: #{block_forward.3} parent=11 // pred_check_branch
        %178 = sbr.rel (%p176) target = $region20
      $region19: #{block_forward.3} parent=11 // pred_region
        _
      $region20: #{block_forward.3} parent=11 // pred_fallthru
        _
    $region12: #{block_forward.3} parent=5 // pred_fallthru
      _
    %p179 = scmp.lt.s32.totalorder %s12, 2
    // Predicated region
    $region21: #{block_forward.3} parent=5 // pred_check
      %p180 = pneg %p179
    $region22: #{block_forward.3} parent=5 // pred_check_branch
      %182 = sbr.rel (%p180) target = $region24
    $region23: #{block_forward.3} parent=5 // pred_region
      // Predicated region
      $region25: #{block_forward.3} parent=23 // pred_check
        %p183 = pneg %p32
      $region26: #{block_forward.3} parent=23 // pred_check_branch
        %185 = sbr.rel (%p183) target = $region28
      $region27: #{block_forward.3} parent=23 // pred_region
        %s186 = smul.u32 4, %s12
        %p187 = scmp.lt.s32.totalorder %s186, 7
        %s188 = scalar_select %p187, %s186, 7
        %s189 = smul.addr %s188, 18
        %s190 = smul.addr %s189, 4
        %s191 = scalar_lea.vmem %s0, %s190
        %s192 = smul.u32 4, %s12
      $region28: #{block_forward.3} parent=23 // pred_fallthru
        _
    $region24: #{block_forward.3} parent=5 // pred_fallthru
      _
    %p193 = scmp.le.s32.totalorder 1, %s12
    %p194 = scmp.lt.s32.totalorder %s12, 3
    %p195 = pnand %p193, %p194
    %p196 = pneg %p195
    // Predicated region
    $region29: #{block_forward.3} parent=5 // pred_check
      _
    $region30: #{block_forward.3} parent=5 // pred_check_branch
      %198 = sbr.rel (%p195) target = $region32
    $region31: #{block_forward.3} parent=5 // pred_region
      %s199 = ssub.s32 %s12, 1
      %s200 = smul.u32 4, %s17
      %p201 = scmp.lt.s32.totalorder %s200, 7
      %s202 = scalar_select %p201, %s200, 7
      %s203 = smul.addr %s202, 18
      %s204 = smul.addr %s203, 4
      %s205 = scalar_lea.vmem %s0, %s204
      %p206 = pneg %p38
      %p207 = pneg %p35
      %p208 = pneg %p59
      %p209 = pneg %p56
      %p210 = pneg %p80
      %p211 = pneg %p77
      %p212 = pneg %p106
      %p213 = pneg %p103
      %p214 = scmp.lt.s32.totalorder %s17, 1
      %s215 = scalar_select %p214, %s17, 1
      %s216 = smul.addr %s215, 8
      %s217 = smul.addr %s216, 4
      %s218 = scalar_lea.vmem %s3, %s217
      %p219 = pneg %p132
      %p220 = pneg %p129
      %p221 = scmp.lt.s32.totalorder %s17, 1
      %s222 = scalar_select %p221, %s17, 1
      %s223 = smul.addr %s222, 8
      %s224 = smul.addr %s223, 4
      %s225 = scalar_lea.vmem %s4, %s224
      %p226 = pneg %p158
      %p227 = pneg %p155
      %p228 = scmp.lt.s32.totalorder %s17, 1
      %s229 = scalar_select %p228, %s17, 1
      %s230 = smul.addr %s229, 4
      %s231 = scalar_lea.vmem %s5, %s230
      %s232 = smul.u32 4, %s17
      %p233 = scmp.lt.s32.totalorder %s232, 7
      %s234 = scalar_select %p233, %s232, 7
      %s235 = smul.addr %s234, 18
      %s236 = smul.addr %s235, 4
      %s237 = scalar_lea.vmem %s0, %s236
      %s238 = smul.u32 4, %s17
      %p239 = scmp.lt.s32.totalorder %s17, 1
      %s240 = scalar_select %p239, %s17, 1
      %s241 = smul.addr %s240, 8
      %s242 = smul.addr %s241, 4
      %s243 = scalar_lea.vmem %s3, %s242
      %p244 = scmp.lt.s32.totalorder %s17, 1
      %s245 = scalar_select %p244, %s17, 1
      %s246 = smul.addr %s245, 8
      %s247 = smul.addr %s246, 4
      %s248 = scalar_lea.vmem %s4, %s247
      %p249 = scmp.lt.s32.totalorder %s17, 1
      %s250 = scalar_select %p249, %s17, 1
      %s251 = smul.addr %s250, 4
      %s252 = scalar_lea.vmem %s5, %s251
      %v254 = vld [vmem:[%s237] sm:$0xf]
      %v255 = vld [vmem:[%s237 + $0x4] sm:$0x1]
      %v256 = vld [vmem:[%s237 + $0x8] sm:$0xf]
      %v257 = vld [vmem:[%s237 + $0xc] sm:$0x1]
      %v258 = vld [vmem:[%s237 + $0x10] sm:$0xf]
      %v259 = vld [vmem:[%s237 + $0x14] sm:$0x1]
      %v260 = vld [vmem:[%s237 + $0x18] sm:$0xf]
      %v261 = vld [vmem:[%s237 + $0x1c] sm:$0x1]
      %v262 = vld [vmem:[%s237 + $0x20] sm:$0xf]
      %v263 = vld [vmem:[%s237 + $0x24] sm:$0x1]
      %v264 = vld [vmem:[%s237 + $0x28] sm:$0xf]
      %v265 = vld [vmem:[%s237 + $0x2c] sm:$0x1]
      %v266 = vld [vmem:[%s237 + $0x30] sm:$0xf]
      %v267 = vld [vmem:[%s237 + $0x34] sm:$0x1]
      %v268 = vld [vmem:[%s237 + $0x38] sm:$0xf]
      %v269 = vld [vmem:[%s237 + $0x3c] sm:$0x1]
      %v270 = vld [vmem:[%s237 + $0x40] sm:$0xf]
      %v271 = vld [vmem:[%s237 + $0x44] sm:$0x1]
      %v272 = vld [vmem:[%s237 + $0x48] sm:$0xf]
      %v273 = vld [vmem:[%s237 + $0x50] sm:$0xf]
      %v274 = vld [vmem:[%s237 + $0x58] sm:$0xf]
      %v275 = vld [vmem:[%s237 + $0x60] sm:$0xf]
      %v276 = vld [vmem:[%s237 + $0x68] sm:$0xf]
      %v277 = vld [vmem:[%s237 + $0x70] sm:$0xf]
      %v278 = vld [vmem:[%s237 + $0x78] sm:$0xf]
      %v279 = vld [vmem:[%s237 + $0x80] sm:$0xf]
      %v280 = vld [vmem:[%s237 + $0x88] sm:$0xf]
      %v281 = vld [vmem:[%s237 + $0x90] sm:$0xf]
      %v282 = vld [vmem:[%s237 + $0x94] sm:$0x1]
      %v283 = vld [vmem:[%s237 + $0x98] sm:$0xf]
      %v284 = vld [vmem:[%s237 + $0x9c] sm:$0x1]
      %v285 = vld [vmem:[%s237 + $0xa0] sm:$0xf]
      %v286 = vld [vmem:[%s237 + $0xa4] sm:$0x1]
      %v287 = vld [vmem:[%s237 + $0xa8] sm:$0xf]
      %v288 = vld [vmem:[%s237 + $0xac] sm:$0x1]
      %v289 = vld [vmem:[%s237 + $0xb0] sm:$0xf]
      %v290 = vld [vmem:[%s237 + $0xb4] sm:$0x1]
      %v291 = vld [vmem:[%s237 + $0xb8] sm:$0xf]
      %v292 = vld [vmem:[%s237 + $0xbc] sm:$0x1]
      %v293 = vld [vmem:[%s237 + $0xc0] sm:$0xf]
      %v294 = vld [vmem:[%s237 + $0xc4] sm:$0x1]
      %v295 = vld [vmem:[%s237 + $0xc8] sm:$0xf]
      %v296 = vld [vmem:[%s237 + $0xcc] sm:$0x1]
      %v297 = vld [vmem:[%s237 + $0xd8] sm:$0xf]
      %v298 = vld [vmem:[%s237 + $0xe0] sm:$0xf]
      %v299 = vld [vmem:[%s237 + $0xe8] sm:$0xf]
      %v300 = vld [vmem:[%s237 + $0xf0] sm:$0xf]
      %v301 = vld [vmem:[%s237 + $0xf8] sm:$0xf]
      %v302 = vld [vmem:[%s237 + $0x100] sm:$0xf]
      %v303 = vld [vmem:[%s237 + $0x108] sm:$0xf]
      %v304 = vld [vmem:[%s237 + $0x110] sm:$0xf]
      %vm305 = vsmask.f32 3328
      %vm306 = vsmask.f32 7440
      %vm307 = vmor %vm305, %vm306
      %v309 = vshrl.u32 %v254, 16
      %v311 = vrot.slane %v309, 4
      %v312 = vshll.u32 %v254, 16
      %v314 = vrot.slane %v312, 5
      %v315 = vor.u32 %v311, %v314
      %v316 = vrot.slane %v315, 4
      %v318 = vshll.u32 %v255, 16
      %v320 = vrot.slane %v318, 5
      %v321 = vsel %vm307, %v316, %v320
      %v323 = vshrl.u32 %v256, 16
      %v325 = vrot.slane %v323, 4
      %v326 = vshll.u32 %v256, 16
      %v328 = vrot.slane %v326, 5
      %v329 = vor.u32 %v325, %v328
      %v330 = vrot.slane %v329, 4
      %v332 = vshll.u32 %v257, 16
      %v334 = vrot.slane %v332, 5
      %v335 = vsel %vm307, %v330, %v334
      %v337 = vshrl.u32 %v258, 16
      %v339 = vrot.slane %v337, 4
      %v340 = vshll.u32 %v258, 16
      %v342 = vrot.slane %v340, 5
      %v343 = vor.u32 %v339, %v342
      %v344 = vrot.slane %v343, 4
      %v346 = vshll.u32 %v259, 16
      %v348 = vrot.slane %v346, 5
      %v349 = vsel %vm307, %v344, %v348
      %v351 = vshrl.u32 %v260, 16
      %v353 = vrot.slane %v351, 4
      %v354 = vshll.u32 %v260, 16
      %v356 = vrot.slane %v354, 5
      %v357 = vor.u32 %v353, %v356
      %v358 = vrot.slane %v357, 4
      %v360 = vshll.u32 %v261, 16
      %v362 = vrot.slane %v360, 5
      %v363 = vsel %vm307, %v358, %v362
      %v365 = vshrl.u32 %v262, 16
      %v367 = vrot.slane %v365, 4
      %v368 = vshll.u32 %v262, 16
      %v370 = vrot.slane %v368, 5
      %v371 = vor.u32 %v367, %v370
      %v372 = vrot.slane %v371, 4
      %v374 = vshll.u32 %v263, 16
      %v376 = vrot.slane %v374, 5
      %v377 = vsel %vm307, %v372, %v376
      %v379 = vshrl.u32 %v264, 16
      %v381 = vrot.slane %v379, 4
      %v382 = vshll.u32 %v264, 16
      %v384 = vrot.slane %v382, 5
      %v385 = vor.u32 %v381, %v384
      %v386 = vrot.slane %v385, 4
      %v388 = vshll.u32 %v265, 16
      %v390 = vrot.slane %v388, 5
      %v391 = vsel %vm307, %v386, %v390
      %v393 = vshrl.u32 %v266, 16
      %v395 = vrot.slane %v393, 4
      %v396 = vshll.u32 %v266, 16
      %v398 = vrot.slane %v396, 5
      %v399 = vor.u32 %v395, %v398
      %v400 = vrot.slane %v399, 4
      %v402 = vshll.u32 %v267, 16
      %v404 = vrot.slane %v402, 5
      %v405 = vsel %vm307, %v400, %v404
      %v407 = vshrl.u32 %v268, 16
      %v409 = vrot.slane %v407, 4
      %v410 = vshll.u32 %v268, 16
      %v412 = vrot.slane %v410, 5
      %v413 = vor.u32 %v409, %v412
      %v414 = vrot.slane %v413, 4
      %v416 = vshll.u32 %v269, 16
      %v418 = vrot.slane %v416, 5
      %v419 = vsel %vm307, %v414, %v418
      %v428 = vunpack.c.l.b16 %v254
      %v429 = vunpack.c.l.b16 %v256
      %v430 = vunpack.c.l.b16 %v258
      %v431 = vunpack.c.l.b16 %v260
      %v432 = vunpack.c.l.b16 %v262
      %v433 = vunpack.c.l.b16 %v264
      %v434 = vunpack.c.l.b16 %v266
      %v435 = vunpack.c.l.b16 %v268
      %v436 = vpack.c.b16 %v429, %v428
      %v437 = vpack.c.b16 %v431, %v430
      %v438 = vpack.c.b16 %v433, %v432
      %v439 = vpack.c.b16 %v435, %v434
      %v452 = vunpack.c.l.b16 %v272
      %v453 = vunpack.c.l.b16 %v273
      %v454 = vunpack.c.l.b16 %v274
      %v455 = vunpack.c.l.b16 %v275
      %v456 = vunpack.c.l.b16 %v276
      %v457 = vunpack.c.l.b16 %v277
      %v458 = vunpack.c.l.b16 %v278
      %v459 = vunpack.c.l.b16 %v279
      %v460 = vpack.c.b16 %v453, %v452
      %v461 = vpack.c.b16 %v455, %v454
      %v462 = vpack.c.b16 %v457, %v456
      %v463 = vpack.c.b16 %v459, %v458
      %v468 = vunpack.c.l.b16 %v321
      %v469 = vunpack.c.l.b16 %v335
      %v470 = vunpack.c.l.b16 %v349
      %v471 = vunpack.c.l.b16 %v363
      %v472 = vunpack.c.l.b16 %v377
      %v473 = vunpack.c.l.b16 %v391
      %v474 = vunpack.c.l.b16 %v405
      %v475 = vunpack.c.l.b16 %v419
      %v476 = vpack.c.b16 %v469, %v468
      %v477 = vpack.c.b16 %v471, %v470
      %v478 = vpack.c.b16 %v473, %v472
      %v479 = vpack.c.b16 %v475, %v474
      %v484 = vld [vmem:[%s1] sm:$0xf]
      %v485 = vld [vmem:[%s1 + $0x4] sm:$0xf]
      %v486 = vld [vmem:[%s1 + $0x8] sm:$0xf]
      %v487 = vld [vmem:[%s1 + $0xc] sm:$0xf]
      %v488 = vld [vmem:[%s1 + $0x10] sm:$0xf]
      %v489 = vld [vmem:[%s1 + $0x14] sm:$0xf]
      %v490 = vld [vmem:[%s1 + $0x18] sm:$0xf]
      %v491 = vld [vmem:[%s1 + $0x1c] sm:$0xf]
      %v492 = vld [vmem:[%s1 + $0x20] sm:$0xf]
      %v493 = vld [vmem:[%s1 + $0x24] sm:$0xf]
      %v494 = vld [vmem:[%s1 + $0x28] sm:$0xf]
      %v495 = vld [vmem:[%s1 + $0x2c] sm:$0xf]
      %v496 = vld [vmem:[%s1 + $0x30] sm:$0xf]
      %v497 = vld [vmem:[%s1 + $0x34] sm:$0xf]
      %v498 = vld [vmem:[%s1 + $0x38] sm:$0xf]
      %v499 = vld [vmem:[%s1 + $0x3c] sm:$0xf]
      %v500 = vld [vmem:[%s1 + $0x40] sm:$0xf]
      %v501 = vld [vmem:[%s1 + $0x44] sm:$0xf]
      %v502 = vld [vmem:[%s1 + $0x48] sm:$0xf]
      %v503 = vld [vmem:[%s1 + $0x4c] sm:$0xf]
      %v504 = vld [vmem:[%s1 + $0x50] sm:$0xf]
      %v505 = vld [vmem:[%s1 + $0x54] sm:$0xf]
      %v506 = vld [vmem:[%s1 + $0x58] sm:$0xf]
      %v507 = vld [vmem:[%s1 + $0x5c] sm:$0xf]
      %v508 = vld [vmem:[%s1 + $0x60] sm:$0xf]
      %v509 = vld [vmem:[%s1 + $0x64] sm:$0xf]
      %v510 = vld [vmem:[%s1 + $0x68] sm:$0xf]
      %v511 = vld [vmem:[%s1 + $0x6c] sm:$0xf]
      %v512 = vld [vmem:[%s1 + $0x70] sm:$0xf]
      %v513 = vld [vmem:[%s1 + $0x74] sm:$0xf]
      %v514 = vld [vmem:[%s1 + $0x78] sm:$0xf]
      %v515 = vld [vmem:[%s1 + $0x7c] sm:$0xf]
      %v516 = vld [vmem:[%s1 + $0x80] sm:$0xf]
      %v517 = vld [vmem:[%s1 + $0x84] sm:$0xf]
      %v518 = vld [vmem:[%s1 + $0x88] sm:$0xf]
      %v519 = vld [vmem:[%s1 + $0x8c] sm:$0xf]
      %v520 = vld [vmem:[%s1 + $0x90] sm:$0xf]
      %v521 = vld [vmem:[%s1 + $0x94] sm:$0xf]
      %v522 = vld [vmem:[%s1 + $0x98] sm:$0xf]
      %v523 = vld [vmem:[%s1 + $0x9c] sm:$0xf]
      %v524 = vld [vmem:[%s1 + $0xa0] sm:$0xf]
      %v525 = vld [vmem:[%s1 + $0xa4] sm:$0xf]
      %v526 = vld [vmem:[%s1 + $0xa8] sm:$0xf]
      %v527 = vld [vmem:[%s1 + $0xac] sm:$0xf]
      %v528 = vld [vmem:[%s1 + $0xb0] sm:$0xf]
      %v529 = vld [vmem:[%s1 + $0xb4] sm:$0xf]
      %v530 = vld [vmem:[%s1 + $0xb8] sm:$0xf]
      %v531 = vld [vmem:[%s1 + $0xbc] sm:$0xf]
      %v533 = vshrl.u32 %v281, 16
      %v535 = vrot.slane %v533, 4
      %v536 = vshll.u32 %v281, 16
      %v538 = vrot.slane %v536, 5
      %v539 = vor.u32 %v535, %v538
      %v540 = vrot.slane %v539, 4
      %v542 = vshll.u32 %v282, 16
      %v544 = vrot.slane %v542, 5
      %v545 = vsel %vm307, %v540, %v544
      %v547 = vshrl.u32 %v283, 16
      %v549 = vrot.slane %v547, 4
      %v550 = vshll.u32 %v283, 16
      %v552 = vrot.slane %v550, 5
      %v553 = vor.u32 %v549, %v552
      %v554 = vrot.slane %v553, 4
      %v556 = vshll.u32 %v284, 16
      %v558 = vrot.slane %v556, 5
      %v559 = vsel %vm307, %v554, %v558
      %v561 = vshrl.u32 %v285, 16
      %v563 = vrot.slane %v561, 4
      %v564 = vshll.u32 %v285, 16
      %v566 = vrot.slane %v564, 5
      %v567 = vor.u32 %v563, %v566
      %v568 = vrot.slane %v567, 4
      %v570 = vshll.u32 %v286, 16
      %v572 = vrot.slane %v570, 5
      %v573 = vsel %vm307, %v568, %v572
      %v575 = vshrl.u32 %v287, 16
      %v577 = vrot.slane %v575, 4
      %v578 = vshll.u32 %v287, 16
      %v580 = vrot.slane %v578, 5
      %v581 = vor.u32 %v577, %v580
      %v582 = vrot.slane %v581, 4
      %v584 = vshll.u32 %v288, 16
      %v586 = vrot.slane %v584, 5
      %v587 = vsel %vm307, %v582, %v586
      %v589 = vshrl.u32 %v289, 16
      %v591 = vrot.slane %v589, 4
      %v592 = vshll.u32 %v289, 16
      %v594 = vrot.slane %v592, 5
      %v595 = vor.u32 %v591, %v594
      %v596 = vrot.slane %v595, 4
      %v598 = vshll.u32 %v290, 16
      %v600 = vrot.slane %v598, 5
      %v601 = vsel %vm307, %v596, %v600
      %v603 = vshrl.u32 %v291, 16
      %v605 = vrot.slane %v603, 4
      %v606 = vshll.u32 %v291, 16
      %v608 = vrot.slane %v606, 5
      %v609 = vor.u32 %v605, %v608
      %v610 = vrot.slane %v609, 4
      %v612 = vshll.u32 %v292, 16
      %v614 = vrot.slane %v612, 5
      %v615 = vsel %vm307, %v610, %v614
      %v617 = vshrl.u32 %v293, 16
      %v619 = vrot.slane %v617, 4
      %v620 = vshll.u32 %v293, 16
      %v622 = vrot.slane %v620, 5
      %v623 = vor.u32 %v619, %v622
      %v624 = vrot.slane %v623, 4
      %v626 = vshll.u32 %v294, 16
      %v628 = vrot.slane %v626, 5
      %v629 = vsel %vm307, %v624, %v628
      %v631 = vshrl.u32 %v295, 16
      %v633 = vrot.slane %v631, 4
      %v634 = vshll.u32 %v295, 16
      %v636 = vrot.slane %v634, 5
      %v637 = vor.u32 %v633, %v636
      %v638 = vrot.slane %v637, 4
      %v640 = vshll.u32 %v296, 16
      %v642 = vrot.slane %v640, 5
      %v643 = vsel %vm307, %v638, %v642
      %v652 = vunpack.c.l.b16 %v281
      %v653 = vunpack.c.l.b16 %v283
      %v654 = vunpack.c.l.b16 %v285
      %v655 = vunpack.c.l.b16 %v287
      %v656 = vunpack.c.l.b16 %v289
      %v657 = vunpack.c.l.b16 %v291
      %v658 = vunpack.c.l.b16 %v293
      %v659 = vunpack.c.l.b16 %v295
      %v660 = vpack.c.b16 %v653, %v652
      %v661 = vpack.c.b16 %v655, %v654
      %v662 = vpack.c.b16 %v657, %v656
      %v663 = vpack.c.b16 %v659, %v658
      %v676 = vunpack.c.l.b16 %v297
      %v677 = vunpack.c.l.b16 %v298
      %v678 = vunpack.c.l.b16 %v299
      %v679 = vunpack.c.l.b16 %v300
      %v680 = vunpack.c.l.b16 %v301
      %v681 = vunpack.c.l.b16 %v302
      %v682 = vunpack.c.l.b16 %v303
      %v683 = vunpack.c.l.b16 %v304
      %v684 = vpack.c.b16 %v677, %v676
      %v685 = vpack.c.b16 %v679, %v678
      %v686 = vpack.c.b16 %v681, %v680
      %v687 = vpack.c.b16 %v683, %v682
      %v692 = vunpack.c.l.b16 %v545
      %v693 = vunpack.c.l.b16 %v559
      %v694 = vunpack.c.l.b16 %v573
      %v695 = vunpack.c.l.b16 %v587
      %v696 = vunpack.c.l.b16 %v601
      %v697 = vunpack.c.l.b16 %v615
      %v698 = vunpack.c.l.b16 %v629
      %v699 = vunpack.c.l.b16 %v643
      %v700 = vpack.c.b16 %v693, %v692
      %v701 = vpack.c.b16 %v695, %v694
      %v702 = vpack.c.b16 %v697, %v696
      %v703 = vpack.c.b16 %v699, %v698
      %s708 = scalar_lea.vmem %s1, 192
      %v709 = vld [vmem:[%s708] sm:$0xf]
      %v710 = vld [vmem:[%s708 + $0x4] sm:$0xf]
      %v711 = vld [vmem:[%s708 + $0x8] sm:$0xf]
      %v712 = vld [vmem:[%s708 + $0xc] sm:$0xf]
      %v713 = vld [vmem:[%s708 + $0x10] sm:$0xf]
      %v714 = vld [vmem:[%s708 + $0x14] sm:$0xf]
      %v715 = vld [vmem:[%s708 + $0x18] sm:$0xf]
      %v716 = vld [vmem:[%s708 + $0x1c] sm:$0xf]
      %v717 = vld [vmem:[%s708 + $0x20] sm:$0xf]
      %v718 = vld [vmem:[%s708 + $0x24] sm:$0xf]
      %v719 = vld [vmem:[%s708 + $0x28] sm:$0xf]
      %v720 = vld [vmem:[%s708 + $0x2c] sm:$0xf]
      %v721 = vld [vmem:[%s708 + $0x30] sm:$0xf]
      %v722 = vld [vmem:[%s708 + $0x34] sm:$0xf]
      %v723 = vld [vmem:[%s708 + $0x38] sm:$0xf]
      %v724 = vld [vmem:[%s708 + $0x3c] sm:$0xf]
      %v725 = vld [vmem:[%s708 + $0x40] sm:$0xf]
      %v726 = vld [vmem:[%s708 + $0x44] sm:$0xf]
      %v727 = vld [vmem:[%s708 + $0x48] sm:$0xf]
      %v728 = vld [vmem:[%s708 + $0x4c] sm:$0xf]
      %v729 = vld [vmem:[%s708 + $0x50] sm:$0xf]
      %v730 = vld [vmem:[%s708 + $0x54] sm:$0xf]
      %v731 = vld [vmem:[%s708 + $0x58] sm:$0xf]
      %v732 = vld [vmem:[%s708 + $0x5c] sm:$0xf]
      %v733 = vld [vmem:[%s708 + $0x60] sm:$0xf]
      %v734 = vld [vmem:[%s708 + $0x64] sm:$0xf]
      %v735 = vld [vmem:[%s708 + $0x68] sm:$0xf]
      %v736 = vld [vmem:[%s708 + $0x6c] sm:$0xf]
      %v737 = vld [vmem:[%s708 + $0x70] sm:$0xf]
      %v738 = vld [vmem:[%s708 + $0x74] sm:$0xf]
      %v739 = vld [vmem:[%s708 + $0x78] sm:$0xf]
      %v740 = vld [vmem:[%s708 + $0x7c] sm:$0xf]
      %v741 = vld [vmem:[%s708 + $0x80] sm:$0xf]
      %v742 = vld [vmem:[%s708 + $0x84] sm:$0xf]
      %v743 = vld [vmem:[%s708 + $0x88] sm:$0xf]
      %v744 = vld [vmem:[%s708 + $0x8c] sm:$0xf]
      %v745 = vld [vmem:[%s708 + $0x90] sm:$0xf]
      %v746 = vld [vmem:[%s708 + $0x94] sm:$0xf]
      %v747 = vld [vmem:[%s708 + $0x98] sm:$0xf]
      %v748 = vld [vmem:[%s708 + $0x9c] sm:$0xf]
      %v749 = vld [vmem:[%s708 + $0xa0] sm:$0xf]
      %v750 = vld [vmem:[%s708 + $0xa4] sm:$0xf]
      %v751 = vld [vmem:[%s708 + $0xa8] sm:$0xf]
      %v752 = vld [vmem:[%s708 + $0xac] sm:$0xf]
      %v753 = vld [vmem:[%s708 + $0xb0] sm:$0xf]
      %v754 = vld [vmem:[%s708 + $0xb4] sm:$0xf]
      %v755 = vld [vmem:[%s708 + $0xb8] sm:$0xf]
      %v756 = vld [vmem:[%s708 + $0xbc] sm:$0xf]
      %v805 = vunpack.c.l.b16 %v709
      %v806 = vunpack.c.l.b16 %v710
      %v807 = vunpack.c.l.b16 %v711
      %v808 = vunpack.c.l.b16 %v712
      %v809 = vunpack.c.l.b16 %v713
      %v810 = vunpack.c.l.b16 %v714
      %v811 = vunpack.c.l.b16 %v715
      %v812 = vunpack.c.l.b16 %v716
      %v813 = vunpack.c.l.b16 %v717
      %v814 = vunpack.c.l.b16 %v718
      %v815 = vunpack.c.l.b16 %v719
      %v816 = vunpack.c.l.b16 %v720
      %v817 = vunpack.c.l.b16 %v721
      %v818 = vunpack.c.l.b16 %v722
      %v819 = vunpack.c.l.b16 %v723
      %v820 = vunpack.c.l.b16 %v724
      %v821 = vunpack.c.l.b16 %v725
      %v822 = vunpack.c.l.b16 %v726
      %v823 = vunpack.c.l.b16 %v727
      %v824 = vunpack.c.l.b16 %v728
      %v825 = vunpack.c.l.b16 %v729
      %v826 = vunpack.c.l.b16 %v730
      %v827 = vunpack.c.l.b16 %v731
      %v828 = vunpack.c.l.b16 %v732
      %v829 = vunpack.c.l.b16 %v733
      %v830 = vunpack.c.l.b16 %v734
      %v831 = vunpack.c.l.b16 %v735
      %v832 = vunpack.c.l.b16 %v736
      %v833 = vunpack.c.l.b16 %v737
      %v834 = vunpack.c.l.b16 %v738
      %v835 = vunpack.c.l.b16 %v739
      %v836 = vunpack.c.l.b16 %v740
      %v837 = vunpack.c.l.b16 %v741
      %v838 = vunpack.c.l.b16 %v742
      %v839 = vunpack.c.l.b16 %v743
      %v840 = vunpack.c.l.b16 %v744
      %v841 = vunpack.c.l.b16 %v745
      %v842 = vunpack.c.l.b16 %v746
      %v843 = vunpack.c.l.b16 %v747
      %v844 = vunpack.c.l.b16 %v748
      %v845 = vunpack.c.l.b16 %v749
      %v846 = vunpack.c.l.b16 %v750
      %v847 = vunpack.c.l.b16 %v751
      %v848 = vunpack.c.l.b16 %v752
      %v849 = vunpack.c.l.b16 %v753
      %v850 = vunpack.c.l.b16 %v754
      %v851 = vunpack.c.l.b16 %v755
      %v852 = vunpack.c.l.b16 %v756
      %v853 = vpack.c.b16 %v806, %v805
      %v854 = vpack.c.b16 %v808, %v807
      %v855 = vpack.c.b16 %v810, %v809
      %v856 = vpack.c.b16 %v812, %v811
      %v857 = vpack.c.b16 %v814, %v813
      %v858 = vpack.c.b16 %v816, %v815
      %v859 = vpack.c.b16 %v818, %v817
      %v860 = vpack.c.b16 %v820, %v819
      %v861 = vpack.c.b16 %v822, %v821
      %v862 = vpack.c.b16 %v824, %v823
      %v863 = vpack.c.b16 %v826, %v825
      %v864 = vpack.c.b16 %v828, %v827
      %v865 = vpack.c.b16 %v830, %v829
      %v866 = vpack.c.b16 %v832, %v831
      %v867 = vpack.c.b16 %v834, %v833
      %v868 = vpack.c.b16 %v836, %v835
      %v869 = vpack.c.b16 %v838, %v837
      %v870 = vpack.c.b16 %v840, %v839
      %v871 = vpack.c.b16 %v842, %v841
      %v872 = vpack.c.b16 %v844, %v843
      %v873 = vpack.c.b16 %v846, %v845
      %v874 = vpack.c.b16 %v848, %v847
      %v875 = vpack.c.b16 %v850, %v849
      %v876 = vpack.c.b16 %v852, %v851
      %901 = vmatprep.subr.bf16.mxu0 0
      %902 = vmatpush1.bf16.msra.mxu0 %v853
      %903 = vmatprep.subr.bf16.mxu0 0
      %904 = vmatpush1.bf16.msra.mxu0 %v854
      %905 = vmatprep.subr.bf16.mxu0 0
      %906 = vmatpush1.bf16.msra.mxu0 %v855
      %907 = vmatprep.subr.bf16.mxu0 0
      %908 = vmatpush1.bf16.msra.mxu0 %v856
      %909 = vmatprep.subr.bf16.mxu0 0
      %910 = vmatpush1.bf16.msra.mxu0 %v857
      %911 = vmatprep.subr.bf16.mxu0 0
      %912 = vmatpush1.bf16.msra.mxu0 %v858
      %913 = vmatprep.subr.bf16.mxu0 0
      %914 = vmatpush1.bf16.msra.mxu0 %v859
      %915 = vmatprep.subr.bf16.mxu0 0
      %916 = vmatpush1.bf16.msra.mxu0 %v860
      %917 = vmatprep.subr.bf16.mxu0 0
      %918 = vmatpush1.bf16.msra.mxu0 %v861
      %919 = vmatprep.subr.bf16.mxu0 0
      %920 = vmatpush1.bf16.msra.mxu0 %v862
      %921 = vmatprep.subr.bf16.mxu0 0
      %922 = vmatpush1.bf16.msra.mxu0 %v863
      %923 = vmatprep.subr.bf16.mxu0 0
      %924 = vmatpush1.bf16.msra.mxu0 %v864
      %925 = vmatprep.subr.bf16.mxu0 0
      %926 = vmatpush1.bf16.msra.mxu0 %v865
      %927 = vmatprep.subr.bf16.mxu0 0
      %928 = vmatpush1.bf16.msra.mxu0 %v866
      %929 = vmatprep.subr.bf16.mxu0 0
      %930 = vmatpush1.bf16.msra.mxu0 %v867
      %931 = vmatprep.subr.bf16.mxu0 0
      %932 = vmatpush1.bf16.msra.mxu0 %v868
      %933 = vmatprep.mubr.bf16.mxu0 %v684
      %934 = vmatmul.mubr.bf16.gmra.mrb[0].mxu0 %v660
      %v935 = vpop.f32.mrb[0].mxu0
      %v936 = vadd.f32 0.0, %v935
      %v937 = vpop.f32.mrb[0].mxu0
      %v938 = vpop.f32.mrb[0].mxu0
      %v939 = vadd.f32 0.0, %v938
      %v940 = vpop.f32.mrb[0].mxu0
      %941 = vmatprep.mubr.bf16.mxu0 %v685
      %942 = vmatmul.mubr.bf16.gmra.mrb[0].mxu0 %v661
      %v943 = vpop.f32.mrb[0].mxu0
      %v944 = vadd.f32 0.0, %v943
      %v945 = vpop.f32.mrb[0].mxu0
      %v946 = vpop.f32.mrb[0].mxu0
      %v947 = vadd.f32 0.0, %v946
      %v948 = vpop.f32.mrb[0].mxu0
      %949 = vmatprep.mubr.bf16.mxu0 %v686
      %950 = vmatmul.mubr.bf16.gmra.mrb[0].mxu0 %v662
      %v951 = vpop.f32.mrb[0].mxu0
      %v952 = vadd.f32 0.0, %v951
      %v953 = vpop.f32.mrb[0].mxu0
      %v954 = vpop.f32.mrb[0].mxu0
      %v955 = vadd.f32 0.0, %v954
      %v956 = vpop.f32.mrb[0].mxu0
      %957 = vmatprep.mubr.bf16.mxu0 %v687
      %958 = vmatmul.mubr.bf16.gmra.mrb[0].mxu0 %v663
      %v959 = vpop.f32.mrb[0].mxu0
      %v960 = vadd.f32 0.0, %v959
      %v961 = vpop.f32.mrb[0].mxu0
      %v962 = vpop.f32.mrb[0].mxu0
      %v963 = vadd.f32 0.0, %v962
      %v964 = vpop.f32.mrb[0].mxu0
      %965 = vdwg.mxu0
      %966 = vmatprep.subr.bf16.mxu0 0
      %967 = vmatpush1.bf16.msra.mxu0 %v869
      %968 = vmatprep.subr.bf16.mxu0 0
      %969 = vmatpush1.bf16.msra.mxu0 %v870
      %970 = vmatprep.subr.bf16.mxu0 0
      %971 = vmatpush1.bf16.msra.mxu0 %v871
      %972 = vmatprep.subr.bf16.mxu0 0
      %973 = vmatpush1.bf16.msra.mxu0 %v872
      %974 = vmatprep.subr.bf16.mxu0 0
      %975 = vmatpush1.bf16.msra.mxu0 %v873
      %976 = vmatprep.subr.bf16.mxu0 0
      %977 = vmatpush1.bf16.msra.mxu0 %v874
      %978 = vmatprep.subr.bf16.mxu0 0
      %979 = vmatpush1.bf16.msra.mxu0 %v875
      %980 = vmatprep.subr.bf16.mxu0 0
      %981 = vmatpush1.bf16.msra.mxu0 %v876
      %982 = vmatprep.subr.bf16.mxu0 0
      %983 = vmatpush1.bf16.msra.mxu0 0
      %984 = vmatprep.subr.bf16.mxu0 0
      %985 = vmatpush1.bf16.msra.mxu0 0
      %986 = vmatprep.subr.bf16.mxu0 0
      %987 = vmatpush1.bf16.msra.mxu0 0
      %988 = vmatprep.subr.bf16.mxu0 0
      %989 = vmatpush1.bf16.msra.mxu0 0
      %990 = vmatprep.subr.bf16.mxu0 0
      %991 = vmatpush1.bf16.msra.mxu0 0
      %992 = vmatprep.subr.bf16.mxu0 0
      %993 = vmatpush1.bf16.msra.mxu0 0
      %994 = vmatprep.subr.bf16.mxu0 0
      %995 = vmatpush1.bf16.msra.mxu0 0
      %996 = vmatprep.subr.bf16.mxu0 0
      %997 = vmatpush1.bf16.msra.mxu0 0
      %998 = vmatprep.mubr.bf16.mxu0 0
      %999 = vmatmul.mubr.bf16.gmra.mrb[0].mxu0 %v700
      %v1000 = vpop.f32.mrb[0].mxu0
      %v1001 = vadd.f32 %v936, %v1000
      %v1002 = vpop.f32.mrb[0].mxu0
      %v1003 = vpop.f32.mrb[0].mxu0
      %v1004 = vadd.f32 %v939, %v1003
      %v1005 = vpop.f32.mrb[0].mxu0
      %1006 = vmatprep.mubr.bf16.mxu0 0
      %1007 = vmatmul.mubr.bf16.gmra.mrb[0].mxu0 %v701
      %v1008 = vpop.f32.mrb[0].mxu0
      %v1009 = vadd.f32 %v944, %v1008
      %v1010 = vpop.f32.mrb[0].mxu0
      %v1011 = vpop.f32.mrb[0].mxu0
      %v1012 = vadd.f32 %v947, %v1011
      %v1013 = vpop.f32.mrb[0].mxu0
      %1014 = vmatprep.mubr.bf16.mxu0 0
      %1015 = vmatmul.mubr.bf16.gmra.mrb[0].mxu0 %v702
      %v1016 = vpop.f32.mrb[0].mxu0
      %v1017 = vadd.f32 %v952, %v1016
      %v1018 = vpop.f32.mrb[0].mxu0
      %v1019 = vpop.f32.mrb[0].mxu0
      %v1020 = vadd.f32 %v955, %v1019
      %v1021 = vpop.f32.mrb[0].mxu0
      %1022 = vmatprep.mubr.bf16.mxu0 0
      %1023 = vmatmul.mubr.bf16.gmra.mrb[0].mxu0 %v703
      %v1024 = vpop.f32.mrb[0].mxu0
      %v1025 = vadd.f32 %v960, %v1024
      %v1026 = vpop.f32.mrb[0].mxu0
      %v1027 = vpop.f32.mrb[0].mxu0
      %v1028 = vadd.f32 %v963, %v1027
      %v1029 = vpop.f32.mrb[0].mxu0
      %1030 = vdwg.mxu0
      %v1079 = vunpack.c.l.b16 %v484
      %v1080 = vunpack.c.l.b16 %v485
      %v1081 = vunpack.c.l.b16 %v486
      %v1082 = vunpack.c.l.b16 %v487
      %v1083 = vunpack.c.l.b16 %v488
      %v1084 = vunpack.c.l.b16 %v489
      %v1085 = vunpack.c.l.b16 %v490
      %v1086 = vunpack.c.l.b16 %v491
      %v1087 = vunpack.c.l.b16 %v492
      %v1088 = vunpack.c.l.b16 %v493
      %v1089 = vunpack.c.l.b16 %v494
      %v1090 = vunpack.c.l.b16 %v495
      %v1091 = vunpack.c.l.b16 %v496
      %v1092 = vunpack.c.l.b16 %v497
      %v1093 = vunpack.c.l.b16 %v498
      %v1094 = vunpack.c.l.b16 %v499
      %v1095 = vunpack.c.l.b16 %v500
      %v1096 = vunpack.c.l.b16 %v501
      %v1097 = vunpack.c.l.b16 %v502
      %v1098 = vunpack.c.l.b16 %v503
      %v1099 = vunpack.c.l.b16 %v504
      %v1100 = vunpack.c.l.b16 %v505
      %v1101 = vunpack.c.l.b16 %v506
      %v1102 = vunpack.c.l.b16 %v507
      %v1103 = vunpack.c.l.b16 %v508
      %v1104 = vunpack.c.l.b16 %v509
      %v1105 = vunpack.c.l.b16 %v510
      %v1106 = vunpack.c.l.b16 %v511
      %v1107 = vunpack.c.l.b16 %v512
      %v1108 = vunpack.c.l.b16 %v513
      %v1109 = vunpack.c.l.b16 %v514
      %v1110 = vunpack.c.l.b16 %v515
      %v1111 = vunpack.c.l.b16 %v516
      %v1112 = vunpack.c.l.b16 %v517
      %v1113 = vunpack.c.l.b16 %v518
      %v1114 = vunpack.c.l.b16 %v519
      %v1115 = vunpack.c.l.b16 %v520
      %v1116 = vunpack.c.l.b16 %v521
      %v1117 = vunpack.c.l.b16 %v522
      %v1118 = vunpack.c.l.b16 %v523
      %v1119 = vunpack.c.l.b16 %v524
      %v1120 = vunpack.c.l.b16 %v525
      %v1121 = vunpack.c.l.b16 %v526
      %v1122 = vunpack.c.l.b16 %v527
      %v1123 = vunpack.c.l.b16 %v528
      %v1124 = vunpack.c.l.b16 %v529
      %v1125 = vunpack.c.l.b16 %v530
      %v1126 = vunpack.c.l.b16 %v531
      %v1127 = vpack.c.b16 %v1080, %v1079
      %v1128 = vpack.c.b16 %v1082, %v1081
      %v1129 = vpack.c.b16 %v1084, %v1083
      %v1130 = vpack.c.b16 %v1086, %v1085
      %v1131 = vpack.c.b16 %v1088, %v1087
      %v1132 = vpack.c.b16 %v1090, %v1089
      %v1133 = vpack.c.b16 %v1092, %v1091
      %v1134 = vpack.c.b16 %v1094, %v1093
      %v1135 = vpack.c.b16 %v1096, %v1095
      %v1136 = vpack.c.b16 %v1098, %v1097
      %v1137 = vpack.c.b16 %v1100, %v1099
      %v1138 = vpack.c.b16 %v1102, %v1101
      %v1139 = vpack.c.b16 %v1104, %v1103
      %v1140 = vpack.c.b16 %v1106, %v1105
      %v1141 = vpack.c.b16 %v1108, %v1107
      %v1142 = vpack.c.b16 %v1110, %v1109
      %v1143 = vpack.c.b16 %v1112, %v1111
      %v1144 = vpack.c.b16 %v1114, %v1113
      %v1145 = vpack.c.b16 %v1116, %v1115
      %v1146 = vpack.c.b16 %v1118, %v1117
      %v1147 = vpack.c.b16 %v1120, %v1119
      %v1148 = vpack.c.b16 %v1122, %v1121
      %v1149 = vpack.c.b16 %v1124, %v1123
      %v1150 = vpack.c.b16 %v1126, %v1125
      %1175 = vmatprep.subr.bf16.mxu0 0
      %1176 = vmatpush1.bf16.msra.mxu0 %v1127
      %1177 = vmatprep.subr.bf16.mxu0 0
      %1178 = vmatpush1.bf16.msra.mxu0 %v1128
      %1179 = vmatprep.subr.bf16.mxu0 0
      %1180 = vmatpush1.bf16.msra.mxu0 %v1129
      %1181 = vmatprep.subr.bf16.mxu0 0
      %1182 = vmatpush1.bf16.msra.mxu0 %v1130
      %1183 = vmatprep.subr.bf16.mxu0 0
      %1184 = vmatpush1.bf16.msra.mxu0 %v1131
      %1185 = vmatprep.subr.bf16.mxu0 0
      %1186 = vmatpush1.bf16.msra.mxu0 %v1132
      %1187 = vmatprep.subr.bf16.mxu0 0
      %1188 = vmatpush1.bf16.msra.mxu0 %v1133
      %1189 = vmatprep.subr.bf16.mxu0 0
      %1190 = vmatpush1.bf16.msra.mxu0 %v1134
      %1191 = vmatprep.subr.bf16.mxu0 0
      %1192 = vmatpush1.bf16.msra.mxu0 %v1135
      %1193 = vmatprep.subr.bf16.mxu0 0
      %1194 = vmatpush1.bf16.msra.mxu0 %v1136
      %1195 = vmatprep.subr.bf16.mxu0 0
      %1196 = vmatpush1.bf16.msra.mxu0 %v1137
      %1197 = vmatprep.subr.bf16.mxu0 0
      %1198 = vmatpush1.bf16.msra.mxu0 %v1138
      %1199 = vmatprep.subr.bf16.mxu0 0
      %1200 = vmatpush1.bf16.msra.mxu0 %v1139
      %1201 = vmatprep.subr.bf16.mxu0 0
      %1202 = vmatpush1.bf16.msra.mxu0 %v1140
      %1203 = vmatprep.subr.bf16.mxu0 0
      %1204 = vmatpush1.bf16.msra.mxu0 %v1141
      %1205 = vmatprep.subr.bf16.mxu0 0
      %1206 = vmatpush1.bf16.msra.mxu0 %v1142
      %1207 = vmatprep.mubr.bf16.mxu0 %v460
      %1208 = vmatmul.mubr.bf16.gmra.mrb[0].mxu0 %v436
      %v1209 = vpop.f32.mrb[0].mxu0
      %v1210 = vadd.f32 %v1001, %v1209
      %v1211 = vpop.f32.mrb[0].mxu0
      %v1212 = vpop.f32.mrb[0].mxu0
      %v1213 = vadd.f32 %v1004, %v1212
      %v1214 = vpop.f32.mrb[0].mxu0
      %1215 = vmatprep.mubr.bf16.mxu0 %v461
      %1216 = vmatmul.mubr.bf16.gmra.mrb[0].mxu0 %v437
      %v1217 = vpop.f32.mrb[0].mxu0
      %v1218 = vadd.f32 %v1009, %v1217
      %v1219 = vpop.f32.mrb[0].mxu0
      %v1220 = vpop.f32.mrb[0].mxu0
      %v1221 = vadd.f32 %v1012, %v1220
      %v1222 = vpop.f32.mrb[0].mxu0
      %1223 = vmatprep.mubr.bf16.mxu0 %v462
      %1224 = vmatmul.mubr.bf16.gmra.mrb[0].mxu0 %v438
      %v1225 = vpop.f32.mrb[0].mxu0
      %v1226 = vadd.f32 %v1017, %v1225
      %v1227 = vpop.f32.mrb[0].mxu0
      %v1228 = vpop.f32.mrb[0].mxu0
      %v1229 = vadd.f32 %v1020, %v1228
      %v1230 = vpop.f32.mrb[0].mxu0
      %1231 = vmatprep.mubr.bf16.mxu0 %v463
      %1232 = vmatmul.mubr.bf16.gmra.mrb[0].mxu0 %v439
      %v1233 = vpop.f32.mrb[0].mxu0
      %v1234 = vadd.f32 %v1025, %v1233
      %v1235 = vpop.f32.mrb[0].mxu0
      %v1236 = vpop.f32.mrb[0].mxu0
      %v1237 = vadd.f32 %v1028, %v1236
      %v1238 = vpop.f32.mrb[0].mxu0
      %1239 = vdwg.mxu0
      %1240 = vmatprep.subr.bf16.mxu0 0
      %1241 = vmatpush1.bf16.msra.mxu0 %v1143
      %1242 = vmatprep.subr.bf16.mxu0 0
      %1243 = vmatpush1.bf16.msra.mxu0 %v1144
      %1244 = vmatprep.subr.bf16.mxu0 0
      %1245 = vmatpush1.bf16.msra.mxu0 %v1145
      %1246 = vmatprep.subr.bf16.mxu0 0
      %1247 = vmatpush1.bf16.msra.mxu0 %v1146
      %1248 = vmatprep.subr.bf16.mxu0 0
      %1249 = vmatpush1.bf16.msra.mxu0 %v1147
      %1250 = vmatprep.subr.bf16.mxu0 0
      %1251 = vmatpush1.bf16.msra.mxu0 %v1148
      %1252 = vmatprep.subr.bf16.mxu0 0
      %1253 = vmatpush1.bf16.msra.mxu0 %v1149
      %1254 = vmatprep.subr.bf16.mxu0 0
      %1255 = vmatpush1.bf16.msra.mxu0 %v1150
      %1256 = vmatprep.subr.bf16.mxu0 0
      %1257 = vmatpush1.bf16.msra.mxu0 0
      %1258 = vmatprep.subr.bf16.mxu0 0
      %1259 = vmatpush1.bf16.msra.mxu0 0
      %1260 = vmatprep.subr.bf16.mxu0 0
      %1261 = vmatpush1.bf16.msra.mxu0 0
      %1262 = vmatprep.subr.bf16.mxu0 0
      %1263 = vmatpush1.bf16.msra.mxu0 0
      %1264 = vmatprep.subr.bf16.mxu0 0
      %1265 = vmatpush1.bf16.msra.mxu0 0
      %1266 = vmatprep.subr.bf16.mxu0 0
      %1267 = vmatpush1.bf16.msra.mxu0 0
      %1268 = vmatprep.subr.bf16.mxu0 0
      %1269 = vmatpush1.bf16.msra.mxu0 0
      %1270 = vmatprep.subr.bf16.mxu0 0
      %1271 = vmatpush1.bf16.msra.mxu0 0
      %1272 = vmatprep.mubr.bf16.mxu0 0
      %1273 = vmatmul.mubr.bf16.gmra.mrb[0].mxu0 %v476
      %v1274 = vpop.f32.mrb[0].mxu0
      %v1275 = vadd.f32 %v1210, %v1274
      %v1276 = vpop.f32.mrb[0].mxu0
      %v1277 = vpop.f32.mrb[0].mxu0
      %v1278 = vadd.f32 %v1213, %v1277
      %v1279 = vpop.f32.mrb[0].mxu0
      %1280 = vmatprep.mubr.bf16.mxu0 0
      %1281 = vmatmul.mubr.bf16.gmra.mrb[0].mxu0 %v477
      %v1282 = vpop.f32.mrb[0].mxu0
      %v1283 = vadd.f32 %v1218, %v1282
      %v1284 = vpop.f32.mrb[0].mxu0
      %v1285 = vpop.f32.mrb[0].mxu0
      %v1286 = vadd.f32 %v1221, %v1285
      %v1287 = vpop.f32.mrb[0].mxu0
      %1288 = vmatprep.mubr.bf16.mxu0 0
      %1289 = vmatmul.mubr.bf16.gmra.mrb[0].mxu0 %v478
      %v1290 = vpop.f32.mrb[0].mxu0
      %v1291 = vadd.f32 %v1226, %v1290
      %v1292 = vpop.f32.mrb[0].mxu0
      %v1293 = vpop.f32.mrb[0].mxu0
      %v1294 = vadd.f32 %v1229, %v1293
      %v1295 = vpop.f32.mrb[0].mxu0
      %1296 = vmatprep.mubr.bf16.mxu0 0
      %1297 = vmatmul.mubr.bf16.gmra.mrb[0].mxu0 %v479
      %v1298 = vpop.f32.mrb[0].mxu0
      %v1299 = vadd.f32 %v1234, %v1298
      %v1300 = vpop.f32.mrb[0].mxu0
      %v1301 = vpop.f32.mrb[0].mxu0
      %v1302 = vadd.f32 %v1237, %v1301
      %v1303 = vpop.f32.mrb[0].mxu0
      %1304 = vdwg.mxu0
      %v1305 = vld [vmem:[%s2] sm:$0xf]
      %v1306 = vld [vmem:[%s2 + $0x4] sm:$0xf]
      %v1307 = vld [vmem:[%s2 + $0x8] sm:$0xf]
      %v1308 = vld [vmem:[%s2 + $0xc] sm:$0xf]
      %v1309 = vld [vmem:[%s2 + $0x10] sm:$0xf]
      %v1310 = vld [vmem:[%s2 + $0x14] sm:$0xf]
      %v1311 = vld [vmem:[%s2 + $0x18] sm:$0xf]
      %v1312 = vld [vmem:[%s2 + $0x1c] sm:$0xf]
      %v1313 = vld [vmem:[%s2 + $0x20] sm:$0xf]
      %v1314 = vld [vmem:[%s2 + $0x24] sm:$0xf]
      %v1315 = vld [vmem:[%s2 + $0x28] sm:$0xf]
      %v1316 = vld [vmem:[%s2 + $0x2c] sm:$0xf]
      %v1317 = vld [vmem:[%s2 + $0x30] sm:$0xf]
      %v1318 = vld [vmem:[%s2 + $0x34] sm:$0xf]
      %v1319 = vld [vmem:[%s2 + $0x38] sm:$0xf]
      %v1320 = vld [vmem:[%s2 + $0x3c] sm:$0xf]
      %v1337 = vunpack.c.l.b16 %v1305
      %v1338 = vunpack.c.l.b16 %v1306
      %v1339 = vunpack.c.l.b16 %v1307
      %v1340 = vunpack.c.l.b16 %v1308
      %v1341 = vunpack.c.l.b16 %v1309
      %v1342 = vunpack.c.l.b16 %v1310
      %v1343 = vunpack.c.l.b16 %v1311
      %v1344 = vunpack.c.l.b16 %v1312
      %v1345 = vunpack.c.l.b16 %v1313
      %v1346 = vunpack.c.l.b16 %v1314
      %v1347 = vunpack.c.l.b16 %v1315
      %v1348 = vunpack.c.l.b16 %v1316
      %v1349 = vunpack.c.l.b16 %v1317
      %v1350 = vunpack.c.l.b16 %v1318
      %v1351 = vunpack.c.l.b16 %v1319
      %v1352 = vunpack.c.l.b16 %v1320
      %v1353 = vpack.c.b16 %v1338, %v1337
      %v1354 = vpack.c.b16 %v1340, %v1339
      %v1355 = vpack.c.b16 %v1342, %v1341
      %v1356 = vpack.c.b16 %v1344, %v1343
      %v1357 = vpack.c.b16 %v1346, %v1345
      %v1358 = vpack.c.b16 %v1348, %v1347
      %v1359 = vpack.c.b16 %v1350, %v1349
      %v1360 = vpack.c.b16 %v1352, %v1351
      %1369 = vmatprep.subr.bf16.mxu0 0
      %1370 = vmatpush1.bf16.msra.mxu0 %v1353
      %1371 = vmatprep.subr.bf16.mxu0 0
      %1372 = vmatpush1.bf16.msra.mxu0 %v1354
      %1373 = vmatprep.subr.bf16.mxu0 0
      %1374 = vmatpush1.bf16.msra.mxu0 %v1355
      %1375 = vmatprep.subr.bf16.mxu0 0
      %1376 = vmatpush1.bf16.msra.mxu0 %v1356
      %1377 = vmatprep.subr.bf16.mxu0 0
      %1378 = vmatpush1.bf16.msra.mxu0 %v1357
      %1379 = vmatprep.subr.bf16.mxu0 0
      %1380 = vmatpush1.bf16.msra.mxu0 %v1358
      %1381 = vmatprep.subr.bf16.mxu0 0
      %1382 = vmatpush1.bf16.msra.mxu0 %v1359
      %1383 = vmatprep.subr.bf16.mxu0 0
      %1384 = vmatpush1.bf16.msra.mxu0 %v1360
      %1385 = vmatprep.subr.bf16.mxu0 0
      %1386 = vmatpush1.bf16.msra.mxu0 0
      %1387 = vmatprep.subr.bf16.mxu0 0
      %1388 = vmatpush1.bf16.msra.mxu0 0
      %1389 = vmatprep.subr.bf16.mxu0 0
      %1390 = vmatpush1.bf16.msra.mxu0 0
      %1391 = vmatprep.subr.bf16.mxu0 0
      %1392 = vmatpush1.bf16.msra.mxu0 0
      %1393 = vmatprep.subr.bf16.mxu0 0
      %1394 = vmatpush1.bf16.msra.mxu0 0
      %1395 = vmatprep.subr.bf16.mxu0 0
      %1396 = vmatpush1.bf16.msra.mxu0 0
      %1397 = vmatprep.subr.bf16.mxu0 0
      %1398 = vmatpush1.bf16.msra.mxu0 0
      %1399 = vmatprep.subr.bf16.mxu0 0
      %1400 = vmatpush1.bf16.msra.mxu0 0
      %1401 = vmatprep.mubr.bf16.mxu0 0
      %1402 = vmatmul.mubr.bf16.gmra.mrb[0].mxu0 %v684
      %v1403 = vpop.f32.mrb[0].mxu0
      %v1404 = vadd.f32 0.0, %v1403
      %v1405 = vpop.f32.mrb[0].mxu0
      %v1406 = vpop.f32.mrb[0].mxu0
      %v1407 = vadd.f32 0.0, %v1406
      %v1408 = vpop.f32.mrb[0].mxu0
      %1409 = vmatprep.mubr.bf16.mxu0 0
      %1410 = vmatmul.mubr.bf16.gmra.mrb[0].mxu0 %v685
      %v1411 = vpop.f32.mrb[0].mxu0
      %v1412 = vadd.f32 0.0, %v1411
      %v1413 = vpop.f32.mrb[0].mxu0
      %v1414 = vpop.f32.mrb[0].mxu0
      %v1415 = vadd.f32 0.0, %v1414
      %v1416 = vpop.f32.mrb[0].mxu0
      %1417 = vmatprep.mubr.bf16.mxu0 0
      %1418 = vmatmul.mubr.bf16.gmra.mrb[0].mxu0 %v686
      %v1419 = vpop.f32.mrb[0].mxu0
      %v1420 = vadd.f32 0.0, %v1419
      %v1421 = vpop.f32.mrb[0].mxu0
      %v1422 = vpop.f32.mrb[0].mxu0
      %v1423 = vadd.f32 0.0, %v1422
      %v1424 = vpop.f32.mrb[0].mxu0
      %1425 = vmatprep.mubr.bf16.mxu0 0
      %1426 = vmatmul.mubr.bf16.gmra.mrb[0].mxu0 %v687
      %v1427 = vpop.f32.mrb[0].mxu0
      %v1428 = vadd.f32 0.0, %v1427
      %v1429 = vpop.f32.mrb[0].mxu0
      %v1430 = vpop.f32.mrb[0].mxu0
      %v1431 = vadd.f32 0.0, %v1430
      %v1432 = vpop.f32.mrb[0].mxu0
      %1433 = vdwg.mxu0
      %v1435 = vshrl.u32 %v270, 16
      %v1437 = vrot.slane %v1435, 4
      %v1438 = vshll.u32 %v270, 16
      %v1440 = vrot.slane %v1438, 5
      %v1441 = vor.u32 %v1437, %v1440
      %v1442 = vrot.slane %v1441, 4
      %v1444 = vshll.u32 %v271, 16
      %v1446 = vrot.slane %v1444, 5
      %v1447 = vsel %vm307, %v1442, %v1446
      %v1449 = vunpack.c.l.b16 %v270
      %v1450 = vpack.c.b16 %v430, %v429
      %v1451 = vpack.c.b16 %v432, %v431
      %v1452 = vpack.c.b16 %v434, %v433
      %v1453 = vpack.c.b16 %v1449, %v435
      %v1459 = vunpack.c.l.b16 %v280
      %v1460 = vpack.c.b16 %v454, %v453
      %v1461 = vpack.c.b16 %v456, %v455
      %v1462 = vpack.c.b16 %v458, %v457
      %v1463 = vpack.c.b16 %v1459, %v459
      %v1468 = vunpack.c.l.b16 %v1447
      %v1469 = vpack.c.b16 %v470, %v469
      %v1470 = vpack.c.b16 %v472, %v471
      %v1471 = vpack.c.b16 %v474, %v473
      %v1472 = vpack.c.b16 %v1468, %v475
      %s1477 = scalar_lea.vmem %s1, 384
      %v1478 = vld [vmem:[%s1477] sm:$0xf]
      %v1479 = vld [vmem:[%s1477 + $0x4] sm:$0xf]
      %v1480 = vld [vmem:[%s1477 + $0x8] sm:$0xf]
      %v1481 = vld [vmem:[%s1477 + $0xc] sm:$0xf]
      %v1482 = vld [vmem:[%s1477 + $0x10] sm:$0xf]
      %v1483 = vld [vmem:[%s1477 + $0x14] sm:$0xf]
      %v1484 = vld [vmem:[%s1477 + $0x18] sm:$0xf]
      %v1485 = vld [vmem:[%s1477 + $0x1c] sm:$0xf]
      %v1486 = vld [vmem:[%s1477 + $0x20] sm:$0xf]
      %v1487 = vld [vmem:[%s1477 + $0x24] sm:$0xf]
      %v1488 = vld [vmem:[%s1477 + $0x28] sm:$0xf]
      %v1489 = vld [vmem:[%s1477 + $0x2c] sm:$0xf]
      %v1490 = vld [vmem:[%s1477 + $0x30] sm:$0xf]
      %v1491 = vld [vmem:[%s1477 + $0x34] sm:$0xf]
      %v1492 = vld [vmem:[%s1477 + $0x38] sm:$0xf]
      %v1493 = vld [vmem:[%s1477 + $0x3c] sm:$0xf]
      %v1494 = vld [vmem:[%s1477 + $0x40] sm:$0xf]
      %v1495 = vld [vmem:[%s1477 + $0x44] sm:$0xf]
      %v1496 = vld [vmem:[%s1477 + $0x48] sm:$0xf]
      %v1497 = vld [vmem:[%s1477 + $0x4c] sm:$0xf]
      %v1498 = vld [vmem:[%s1477 + $0x50] sm:$0xf]
      %v1499 = vld [vmem:[%s1477 + $0x54] sm:$0xf]
      %v1500 = vld [vmem:[%s1477 + $0x58] sm:$0xf]
      %v1501 = vld [vmem:[%s1477 + $0x5c] sm:$0xf]
      %v1502 = vld [vmem:[%s1477 + $0x60] sm:$0xf]
      %v1503 = vld [vmem:[%s1477 + $0x64] sm:$0xf]
      %v1504 = vld [vmem:[%s1477 + $0x68] sm:$0xf]
      %v1505 = vld [vmem:[%s1477 + $0x6c] sm:$0xf]
      %v1506 = vld [vmem:[%s1477 + $0x70] sm:$0xf]
      %v1507 = vld [vmem:[%s1477 + $0x74] sm:$0xf]
      %v1508 = vld [vmem:[%s1477 + $0x78] sm:$0xf]
      %v1509 = vld [vmem:[%s1477 + $0x7c] sm:$0xf]
      %v1510 = vld [vmem:[%s1477 + $0x80] sm:$0xf]
      %v1511 = vld [vmem:[%s1477 + $0x84] sm:$0xf]
      %v1512 = vld [vmem:[%s1477 + $0x88] sm:$0xf]
      %v1513 = vld [vmem:[%s1477 + $0x8c] sm:$0xf]
      %v1514 = vld [vmem:[%s1477 + $0x90] sm:$0xf]
      %v1515 = vld [vmem:[%s1477 + $0x94] sm:$0xf]
      %v1516 = vld [vmem:[%s1477 + $0x98] sm:$0xf]
      %v1517 = vld [vmem:[%s1477 + $0x9c] sm:$0xf]
      %v1518 = vld [vmem:[%s1477 + $0xa0] sm:$0xf]
      %v1519 = vld [vmem:[%s1477 + $0xa4] sm:$0xf]
      %v1520 = vld [vmem:[%s1477 + $0xa8] sm:$0xf]
      %v1521 = vld [vmem:[%s1477 + $0xac] sm:$0xf]
      %v1522 = vld [vmem:[%s1477 + $0xb0] sm:$0xf]
      %v1523 = vld [vmem:[%s1477 + $0xb4] sm:$0xf]
      %v1524 = vld [vmem:[%s1477 + $0xb8] sm:$0xf]
      %v1525 = vld [vmem:[%s1477 + $0xbc] sm:$0xf]
      %v1574 = vunpack.c.l.b16 %v1478
      %v1575 = vunpack.c.l.b16 %v1479
      %v1576 = vunpack.c.l.b16 %v1480
      %v1577 = vunpack.c.l.b16 %v1481
      %v1578 = vunpack.c.l.b16 %v1482
      %v1579 = vunpack.c.l.b16 %v1483
      %v1580 = vunpack.c.l.b16 %v1484
      %v1581 = vunpack.c.l.b16 %v1485
      %v1582 = vunpack.c.l.b16 %v1486
      %v1583 = vunpack.c.l.b16 %v1487
      %v1584 = vunpack.c.l.b16 %v1488
      %v1585 = vunpack.c.l.b16 %v1489
      %v1586 = vunpack.c.l.b16 %v1490
      %v1587 = vunpack.c.l.b16 %v1491
      %v1588 = vunpack.c.l.b16 %v1492
      %v1589 = vunpack.c.l.b16 %v1493
      %v1590 = vunpack.c.l.b16 %v1494
      %v1591 = vunpack.c.l.b16 %v1495
      %v1592 = vunpack.c.l.b16 %v1496
      %v1593 = vunpack.c.l.b16 %v1497
      %v1594 = vunpack.c.l.b16 %v1498
      %v1595 = vunpack.c.l.b16 %v1499
      %v1596 = vunpack.c.l.b16 %v1500
      %v1597 = vunpack.c.l.b16 %v1501
      %v1598 = vunpack.c.l.b16 %v1502
      %v1599 = vunpack.c.l.b16 %v1503
      %v1600 = vunpack.c.l.b16 %v1504
      %v1601 = vunpack.c.l.b16 %v1505
      %v1602 = vunpack.c.l.b16 %v1506
      %v1603 = vunpack.c.l.b16 %v1507
      %v1604 = vunpack.c.l.b16 %v1508
      %v1605 = vunpack.c.l.b16 %v1509
      %v1606 = vunpack.c.l.b16 %v1510
      %v1607 = vunpack.c.l.b16 %v1511
      %v1608 = vunpack.c.l.b16 %v1512
      %v1609 = vunpack.c.l.b16 %v1513
      %v1610 = vunpack.c.l.b16 %v1514
      %v1611 = vunpack.c.l.b16 %v1515
      %v1612 = vunpack.c.l.b16 %v1516
      %v1613 = vunpack.c.l.b16 %v1517
      %v1614 = vunpack.c.l.b16 %v1518
      %v1615 = vunpack.c.l.b16 %v1519
      %v1616 = vunpack.c.l.b16 %v1520
      %v1617 = vunpack.c.l.b16 %v1521
      %v1618 = vunpack.c.l.b16 %v1522
      %v1619 = vunpack.c.l.b16 %v1523
      %v1620 = vunpack.c.l.b16 %v1524
      %v1621 = vunpack.c.l.b16 %v1525
      %v1622 = vpack.c.b16 %v1575, %v1574
      %v1623 = vpack.c.b16 %v1577, %v1576
      %v1624 = vpack.c.b16 %v1579, %v1578
      %v1625 = vpack.c.b16 %v1581, %v1580
      %v1626 = vpack.c.b16 %v1583, %v1582
      %v1627 = vpack.c.b16 %v1585, %v1584
      %v1628 = vpack.c.b16 %v1587, %v1586
      %v1629 = vpack.c.b16 %v1589, %v1588
      %v1630 = vpack.c.b16 %v1591, %v1590
      %v1631 = vpack.c.b16 %v1593, %v1592
      %v1632 = vpack.c.b16 %v1595, %v1594
      %v1633 = vpack.c.b16 %v1597, %v1596
      %v1634 = vpack.c.b16 %v1599, %v1598
      %v1635 = vpack.c.b16 %v1601, %v1600
      %v1636 = vpack.c.b16 %v1603, %v1602
      %v1637 = vpack.c.b16 %v1605, %v1604
      %v1638 = vpack.c.b16 %v1607, %v1606
      %v1639 = vpack.c.b16 %v1609, %v1608
      %v1640 = vpack.c.b16 %v1611, %v1610
      %v1641 = vpack.c.b16 %v1613, %v1612
      %v1642 = vpack.c.b16 %v1615, %v1614
      %v1643 = vpack.c.b16 %v1617, %v1616
      %v1644 = vpack.c.b16 %v1619, %v1618
      %v1645 = vpack.c.b16 %v1621, %v1620
      %1670 = vmatprep.subr.bf16.mxu0 0
      %1671 = vmatpush1.bf16.msra.mxu0 %v1622
      %1672 = vmatprep.subr.bf16.mxu0 0
      %1673 = vmatpush1.bf16.msra.mxu0 %v1623
      %1674 = vmatprep.subr.bf16.mxu0 0
      %1675 = vmatpush1.bf16.msra.mxu0 %v1624
      %1676 = vmatprep.subr.bf16.mxu0 0
      %1677 = vmatpush1.bf16.msra.mxu0 %v1625
      %1678 = vmatprep.subr.bf16.mxu0 0
      %1679 = vmatpush1.bf16.msra.mxu0 %v1626
      %1680 = vmatprep.subr.bf16.mxu0 0
      %1681 = vmatpush1.bf16.msra.mxu0 %v1627
      %1682 = vmatprep.subr.bf16.mxu0 0
      %1683 = vmatpush1.bf16.msra.mxu0 %v1628
      %1684 = vmatprep.subr.bf16.mxu0 0
      %1685 = vmatpush1.bf16.msra.mxu0 %v1629
      %1686 = vmatprep.subr.bf16.mxu0 0
      %1687 = vmatpush1.bf16.msra.mxu0 %v1630
      %1688 = vmatprep.subr.bf16.mxu0 0
      %1689 = vmatpush1.bf16.msra.mxu0 %v1631
      %1690 = vmatprep.subr.bf16.mxu0 0
      %1691 = vmatpush1.bf16.msra.mxu0 %v1632
      %1692 = vmatprep.subr.bf16.mxu0 0
      %1693 = vmatpush1.bf16.msra.mxu0 %v1633
      %1694 = vmatprep.subr.bf16.mxu0 0
      %1695 = vmatpush1.bf16.msra.mxu0 %v1634
      %1696 = vmatprep.subr.bf16.mxu0 0
      %1697 = vmatpush1.bf16.msra.mxu0 %v1635
      %1698 = vmatprep.subr.bf16.mxu0 0
      %1699 = vmatpush1.bf16.msra.mxu0 %v1636
      %1700 = vmatprep.subr.bf16.mxu0 0
      %1701 = vmatpush1.bf16.msra.mxu0 %v1637
      %1702 = vmatprep.mubr.bf16.mxu0 %v1460
      %1703 = vmatmul.mubr.bf16.gmra.mrb[0].mxu0 %v1450
      %v1704 = vpop.f32.mrb[0].mxu0
      %v1705 = vadd.f32 0.0, %v1704
      %v1706 = vpop.f32.mrb[0].mxu0
      %v1707 = vpop.f32.mrb[0].mxu0
      %v1708 = vadd.f32 0.0, %v1707
      %v1709 = vpop.f32.mrb[0].mxu0
      %1710 = vmatprep.mubr.bf16.mxu0 %v1461
      %1711 = vmatmul.mubr.bf16.gmra.mrb[0].mxu0 %v1451
      %v1712 = vpop.f32.mrb[0].mxu0
      %v1713 = vadd.f32 0.0, %v1712
      %v1714 = vpop.f32.mrb[0].mxu0
      %v1715 = vpop.f32.mrb[0].mxu0
      %v1716 = vadd.f32 0.0, %v1715
      %v1717 = vpop.f32.mrb[0].mxu0
      %1718 = vmatprep.mubr.bf16.mxu0 %v1462
      %1719 = vmatmul.mubr.bf16.gmra.mrb[0].mxu0 %v1452
      %v1720 = vpop.f32.mrb[0].mxu0
      %v1721 = vadd.f32 0.0, %v1720
      %v1722 = vpop.f32.mrb[0].mxu0
      %v1723 = vpop.f32.mrb[0].mxu0
      %v1724 = vadd.f32 0.0, %v1723
      %v1725 = vpop.f32.mrb[0].mxu0
      %1726 = vmatprep.mubr.bf16.mxu0 %v1463
      %1727 = vmatmul.mubr.bf16.gmra.mrb[0].mxu0 %v1453
      %v1728 = vpop.f32.mrb[0].mxu0
      %v1729 = vadd.f32 0.0, %v1728
      %v1730 = vpop.f32.mrb[0].mxu0
      %v1731 = vpop.f32.mrb[0].mxu0
      %v1732 = vadd.f32 0.0, %v1731
      %v1733 = vpop.f32.mrb[0].mxu0
      %1734 = vdwg.mxu0
      %1735 = vmatprep.subr.bf16.mxu0 0
      %1736 = vmatpush1.bf16.msra.mxu0 %v1638
      %1737 = vmatprep.subr.bf16.mxu0 0
      %1738 = vmatpush1.bf16.msra.mxu0 %v1639
      %1739 = vmatprep.subr.bf16.mxu0 0
      %1740 = vmatpush1.bf16.msra.mxu0 %v1640
      %1741 = vmatprep.subr.bf16.mxu0 0
      %1742 = vmatpush1.bf16.msra.mxu0 %v1641
      %1743 = vmatprep.subr.bf16.mxu0 0
      %1744 = vmatpush1.bf16.msra.mxu0 %v1642
      %1745 = vmatprep.subr.bf16.mxu0 0
      %1746 = vmatpush1.bf16.msra.mxu0 %v1643
      %1747 = vmatprep.subr.bf16.mxu0 0
      %1748 = vmatpush1.bf16.msra.mxu0 %v1644
      %1749 = vmatprep.subr.bf16.mxu0 0
      %1750 = vmatpush1.bf16.msra.mxu0 %v1645
      %1751 = vmatprep.subr.bf16.mxu0 0
      %1752 = vmatpush1.bf16.msra.mxu0 0
      %1753 = vmatprep.subr.bf16.mxu0 0
      %1754 = vmatpush1.bf16.msra.mxu0 0
      %1755 = vmatprep.subr.bf16.mxu0 0
      %1756 = vmatpush1.bf16.msra.mxu0 0
      %1757 = vmatprep.subr.bf16.mxu0 0
      %1758 = vmatpush1.bf16.msra.mxu0 0
      %1759 = vmatprep.subr.bf16.mxu0 0
      %1760 = vmatpush1.bf16.msra.mxu0 0
      %1761 = vmatprep.subr.bf16.mxu0 0
      %1762 = vmatpush1.bf16.msra.mxu0 0
      %1763 = vmatprep.subr.bf16.mxu0 0
      %1764 = vmatpush1.bf16.msra.mxu0 0
      %1765 = vmatprep.subr.bf16.mxu0 0
      %1766 = vmatpush1.bf16.msra.mxu0 0
      %1767 = vmatprep.mubr.bf16.mxu0 0
      %1768 = vmatmul.mubr.bf16.gmra.mrb[0].mxu0 %v1469
      %v1769 = vpop.f32.mrb[0].mxu0
      %v1770 = vadd.f32 %v1705, %v1769
      %v1771 = vpop.f32.mrb[0].mxu0
      %v1772 = vpop.f32.mrb[0].mxu0
      %v1773 = vadd.f32 %v1708, %v1772
      %v1774 = vpop.f32.mrb[0].mxu0
      %1775 = vmatprep.mubr.bf16.mxu0 0
      %1776 = vmatmul.mubr.bf16.gmra.mrb[0].mxu0 %v1470
      %v1777 = vpop.f32.mrb[0].mxu0
      %v1778 = vadd.f32 %v1713, %v1777
      %v1779 = vpop.f32.mrb[0].mxu0
      %v1780 = vpop.f32.mrb[0].mxu0
      %v1781 = vadd.f32 %v1716, %v1780
      %v1782 = vpop.f32.mrb[0].mxu0
      %1783 = vmatprep.mubr.bf16.mxu0 0
      %1784 = vmatmul.mubr.bf16.gmra.mrb[0].mxu0 %v1471
      %v1785 = vpop.f32.mrb[0].mxu0
      %v1786 = vadd.f32 %v1721, %v1785
      %v1787 = vpop.f32.mrb[0].mxu0
      %v1788 = vpop.f32.mrb[0].mxu0
      %v1789 = vadd.f32 %v1724, %v1788
      %v1790 = vpop.f32.mrb[0].mxu0
      %1791 = vmatprep.mubr.bf16.mxu0 0
      %1792 = vmatmul.mubr.bf16.gmra.mrb[0].mxu0 %v1472
      %v1793 = vpop.f32.mrb[0].mxu0
      %v1794 = vadd.f32 %v1729, %v1793
      %v1795 = vpop.f32.mrb[0].mxu0
      %v1796 = vpop.f32.mrb[0].mxu0
      %v1797 = vadd.f32 %v1732, %v1796
      %v1798 = vpop.f32.mrb[0].mxu0
      %1799 = vdwg.mxu0
      %v1800 = vadd.f32 %v1275, %v1770
      %v1801 = vadd.f32 %v1278, %v1773
      %v1802 = vadd.f32 %v1283, %v1778
      %v1803 = vadd.f32 %v1286, %v1781
      %v1804 = vadd.f32 %v1291, %v1786
      %v1805 = vadd.f32 %v1294, %v1789
      %v1806 = vadd.f32 %v1299, %v1794
      %v1807 = vadd.f32 %v1302, %v1797
      %v1808 = vpack.c.bf16 %v1800, %v1800
      %v1809 = vpack.c.bf16 %v1801, %v1801
      %v1810 = vpack.c.bf16 %v1802, %v1802
      %v1811 = vpack.c.bf16 %v1803, %v1803
      %v1812 = vpack.c.bf16 %v1804, %v1804
      %v1813 = vpack.c.bf16 %v1805, %v1805
      %v1814 = vpack.c.bf16 %v1806, %v1806
      %v1815 = vpack.c.bf16 %v1807, %v1807
      %1816 = vst [vmem:[%s243] sm:$0xf] %v1808
      %1817 = vst [vmem:[%s243 + $0x4] sm:$0xf] %v1809
      %1818 = vst [vmem:[%s243 + $0x8] sm:$0xf] %v1810
      %1819 = vst [vmem:[%s243 + $0xc] sm:$0xf] %v1811
      %1820 = vst [vmem:[%s243 + $0x10] sm:$0xf] %v1812
      %1821 = vst [vmem:[%s243 + $0x14] sm:$0xf] %v1813
      %1822 = vst [vmem:[%s243 + $0x18] sm:$0xf] %v1814
      %1823 = vst [vmem:[%s243 + $0x1c] sm:$0xf] %v1815
      %v1824 = vpack.c.bf16 %v1404, %v1404
      %v1825 = vpack.c.bf16 %v1407, %v1407
      %v1826 = vpack.c.bf16 %v1412, %v1412
      %v1827 = vpack.c.bf16 %v1415, %v1415
      %v1828 = vpack.c.bf16 %v1420, %v1420
      %v1829 = vpack.c.bf16 %v1423, %v1423
      %v1830 = vpack.c.bf16 %v1428, %v1428
      %v1831 = vpack.c.bf16 %v1431, %v1431
      %1832 = vst [vmem:[%s248] sm:$0xf] %v1824
      %1833 = vst [vmem:[%s248 + $0x4] sm:$0xf] %v1825
      %1834 = vst [vmem:[%s248 + $0x8] sm:$0xf] %v1826
      %1835 = vst [vmem:[%s248 + $0xc] sm:$0xf] %v1827
      %1836 = vst [vmem:[%s248 + $0x10] sm:$0xf] %v1828
      %1837 = vst [vmem:[%s248 + $0x14] sm:$0xf] %v1829
      %1838 = vst [vmem:[%s248 + $0x18] sm:$0xf] %v1830
      %1839 = vst [vmem:[%s248 + $0x1c] sm:$0xf] %v1831
      %v1840 = vadd.f32 %v1800, %v1801
      %v1841 = vadd.f32 %v1840, %v1802
      %v1842 = vadd.f32 %v1841, %v1803
      %v1843 = vadd.f32 %v1842, %v1804
      %v1844 = vadd.f32 %v1843, %v1805
      %v1845 = vadd.f32 %v1844, %v1806
      %v1846 = vadd.f32 %v1845, %v1807
      %v1847 = vrot.slane %v1846, 4
      %v1848 = vadd.f32 %v1846, %v1847
      %v1849 = vrot.slane %v1848, 2
      %v1850 = vadd.f32 %v1848, %v1849
      %v1851 = vrot.slane %v1850, 1
      %v1852 = vadd.f32 %v1850, %v1851
      %v1853 = vmul.f32 %v1852, 0.015625
      %v1854 = vsub.f32 %v1800, %v1853
      %v1855 = vsub.f32 %v1801, %v1853
      %v1856 = vsub.f32 %v1802, %v1853
      %v1857 = vsub.f32 %v1803, %v1853
      %v1858 = vsub.f32 %v1804, %v1853
      %v1859 = vsub.f32 %v1805, %v1853
      %v1860 = vsub.f32 %v1806, %v1853
      %v1861 = vsub.f32 %v1807, %v1853
      %v1862 = vmul.f32 %v1854, %v1854
      %v1863 = vmul.f32 %v1855, %v1855
      %v1864 = vmul.f32 %v1856, %v1856
      %v1865 = vmul.f32 %v1857, %v1857
      %v1866 = vmul.f32 %v1858, %v1858
      %v1867 = vmul.f32 %v1859, %v1859
      %v1868 = vmul.f32 %v1860, %v1860
      %v1869 = vmul.f32 %v1861, %v1861
      %v1870 = vadd.f32 %v1862, %v1863
      %v1871 = vadd.f32 %v1870, %v1864
      %v1872 = vadd.f32 %v1871, %v1865
      %v1873 = vadd.f32 %v1872, %v1866
      %v1874 = vadd.f32 %v1873, %v1867
      %v1875 = vadd.f32 %v1874, %v1868
      %v1876 = vadd.f32 %v1875, %v1869
      %v1877 = vrot.slane %v1876, 4
      %v1878 = vadd.f32 %v1876, %v1877
      %v1879 = vrot.slane %v1878, 2
      %v1880 = vadd.f32 %v1878, %v1879
      %v1881 = vrot.slane %v1880, 1
      %v1882 = vadd.f32 %v1880, %v1881
      %v1883 = vadd.f32 %v1404, %v1407
      %v1884 = vadd.f32 %v1883, %v1412
      %v1885 = vadd.f32 %v1884, %v1415
      %v1886 = vadd.f32 %v1885, %v1420
      %v1887 = vadd.f32 %v1886, %v1423
      %v1888 = vadd.f32 %v1887, %v1428
      %v1889 = vadd.f32 %v1888, %v1431
      %v1890 = vrot.slane %v1889, 4
      %v1891 = vadd.f32 %v1889, %v1890
      %v1892 = vrot.slane %v1891, 2
      %v1893 = vadd.f32 %v1891, %v1892
      %v1894 = vrot.slane %v1893, 1
      %v1895 = vadd.f32 %v1893, %v1894
      %v1896 = vmul.f32 %v1895, 0.015625
      %v1897 = vsub.f32 %v1404, %v1896
      %v1898 = vsub.f32 %v1407, %v1896
      %v1899 = vsub.f32 %v1412, %v1896
      %v1900 = vsub.f32 %v1415, %v1896
      %v1901 = vsub.f32 %v1420, %v1896
      %v1902 = vsub.f32 %v1423, %v1896
      %v1903 = vsub.f32 %v1428, %v1896
      %v1904 = vsub.f32 %v1431, %v1896
      %v1905 = vmul.f32 %v1897, %v1897
      %v1906 = vmul.f32 %v1898, %v1898
      %v1907 = vmul.f32 %v1899, %v1899
      %v1908 = vmul.f32 %v1900, %v1900
      %v1909 = vmul.f32 %v1901, %v1901
      %v1910 = vmul.f32 %v1902, %v1902
      %v1911 = vmul.f32 %v1903, %v1903
      %v1912 = vmul.f32 %v1904, %v1904
      %v1913 = vadd.f32 %v1905, %v1906
      %v1914 = vadd.f32 %v1913, %v1907
      %v1915 = vadd.f32 %v1914, %v1908
      %v1916 = vadd.f32 %v1915, %v1909
      %v1917 = vadd.f32 %v1916, %v1910
      %v1918 = vadd.f32 %v1917, %v1911
      %v1919 = vadd.f32 %v1918, %v1912
      %v1920 = vrot.slane %v1919, 4
      %v1921 = vadd.f32 %v1919, %v1920
      %v1922 = vrot.slane %v1921, 2
      %v1923 = vadd.f32 %v1921, %v1922
      %v1924 = vrot.slane %v1923, 1
      %v1925 = vadd.f32 %v1923, %v1924
      %vm1926 = vcmask 1040384
      %v1927 = vsel %vm1926, %v1852, %v1882
      %vm1928 = vcmask 1041408
      %v1929 = vsel %vm1928, %v1927, %v1895
      %vm1930 = vcmask 1042432
      %v1931 = vsel %vm1930, %v1929, %v1925
      %1932 = vst [vmem:[%s252] sm:$0xf] %v1931
      %p1933 = scmp.lt.s32.totalorder %s17, 1
      %s1934 = scalar_select %p1933, %s17, 1
      %s1935 = smul.addr %s1934, 8
      %s1936 = smul.addr %s1935, 4
      %s1937 = scalar_lea.vmem %s3, %s1936
      %p1938 = scmp.lt.s32.totalorder %s17, 1
      %s1939 = scalar_select %p1938, %s17, 1
      %s1940 = smul.addr %s1939, 8
      %s1941 = smul.addr %s1940, 4
      %s1942 = scalar_lea.vmem %s4, %s1941
      %p1943 = scmp.lt.s32.totalorder %s17, 1
      %s1944 = scalar_select %p1943, %s17, 1
      %s1945 = smul.addr %s1944, 4
      %s1946 = scalar_lea.vmem %s5, %s1945
      // Predicated region
      $region33: #{block_forward.3} parent=31 // pred_check
        %p1947 = pneg %p103
      $region34: #{block_forward.3} parent=31 // pred_check_branch
        %1949 = sbr.rel (%p1947) target = $region36
      $region35: #{block_forward.3} parent=31 // pred_region
        _
      $region36: #{block_forward.3} parent=31 // pred_fallthru
        _
      // Predicated region
      $region37: #{block_forward.3} parent=31 // pred_check
        %p1950 = pneg %p129
      $region38: #{block_forward.3} parent=31 // pred_check_branch
        %1952 = sbr.rel (%p1950) target = $region40
      $region39: #{block_forward.3} parent=31 // pred_region
        _
      $region40: #{block_forward.3} parent=31 // pred_fallthru
        _
      // Predicated region
      $region41: #{block_forward.3} parent=31 // pred_check
        %p1953 = pneg %p155
      $region42: #{block_forward.3} parent=31 // pred_check_branch
        %1955 = sbr.rel (%p1953) target = $region44
      $region43: #{block_forward.3} parent=31 // pred_region
        _
      $region44: #{block_forward.3} parent=31 // pred_fallthru
        _
    $region32: #{block_forward.3} parent=5 // pred_fallthru
      _
    %p1956 = scmp.le.s32.totalorder 2, %s12
    // Predicated region
    $region45: #{block_forward.3} parent=5 // pred_check
      %p1957 = pneg %p1956
    $region46: #{block_forward.3} parent=5 // pred_check_branch
      %1959 = sbr.rel (%p1957) target = $region48
    $region47: #{block_forward.3} parent=5 // pred_region
      %s1960 = ssub.s32 %s12, 2
      // Predicated region
      $region49: #{block_forward.3} parent=47 // pred_check
        %p1961 = pneg %p109
      $region50: #{block_forward.3} parent=47 // pred_check_branch
        %1963 = sbr.rel (%p1961) target = $region52
      $region51: #{block_forward.3} parent=47 // pred_region
        %p1964 = scmp.lt.s32.totalorder %s18, 1
        %s1965 = scalar_select %p1964, %s18, 1
        %s1966 = smul.addr %s1965, 8
        %s1967 = smul.addr %s1966, 4
        %s1968 = scalar_lea.vmem %s3, %s1967
      $region52: #{block_forward.3} parent=47 // pred_fallthru
        _
      // Predicated region
      $region53: #{block_forward.3} parent=47 // pred_check
        %p1969 = pneg %p135
      $region54: #{block_forward.3} parent=47 // pred_check_branch
        %1971 = sbr.rel (%p1969) target = $region56
      $region55: #{block_forward.3} parent=47 // pred_region
        %p1972 = scmp.lt.s32.totalorder %s18, 1
        %s1973 = scalar_select %p1972, %s18, 1
        %s1974 = smul.addr %s1973, 8
        %s1975 = smul.addr %s1974, 4
        %s1976 = scalar_lea.vmem %s4, %s1975
      $region56: #{block_forward.3} parent=47 // pred_fallthru
        _
      // Predicated region
      $region57: #{block_forward.3} parent=47 // pred_check
        %p1977 = pneg %p161
      $region58: #{block_forward.3} parent=47 // pred_check_branch
        %1979 = sbr.rel (%p1977) target = $region60
      $region59: #{block_forward.3} parent=47 // pred_region
        %p1980 = scmp.lt.s32.totalorder %s18, 1
        %s1981 = scalar_select %p1980, %s18, 1
        %s1982 = smul.addr %s1981, 4
        %s1983 = scalar_lea.vmem %s5, %s1982
      $region60: #{block_forward.3} parent=47 // pred_fallthru
        _
    $region48: #{block_forward.3} parent=5 // pred_fallthru
      _
  $region6: #{block_forward.3} parent=0 // loop_footer
    %s16 = sadd.s32 1, %s12
  $region7: #{block_forward.3} parent=0 // loop_footer_branch
    %11 = sbr.rel target = $region3
  $region8: #{block_forward.3} parent=0 // loop_exit
    _

</llo_original>
